<compile_context>
chip_gen: v7x
topology: tpu7x:2x2x1
jax: 0.10.0
libtpu: 0.0.40
codegen_flags: <defaults>
</compile_context>

<pallas_src>
import jax
import jax.numpy as jnp
import numpy as np
from jax import lax
from jax.experimental import pallas as pl
from jax.experimental.pallas import tpu as pltpu


@jax.jit
def conv_bn2d(x, w, eps=1e-5):
    """x: (B, C_in, H, W) f32, w: (C_out, C_in, 3, 3) f32 -> (B, C_out, H, W) f32."""
    B, C_in, H, W = x.shape
    C_out = w.shape[0]
    Hp, Wp = H + 2, W + 2
    HW = H * W
    L_out = H * Wp            # flattened conv-output length (2 garbage cols per row)
    L_in = Hp * Wp + 2        # flattened padded-input length (+2 tail zeros for tap 8)

    # Wrapper does only free, contiguous metadata reshapes (no HBM passes).
    xu = x.reshape(B, C_in, HW)
    # conv taps arranged (t = dy*3 + dx, C_out, C_in) -- tiny tensor
    w_taps = jnp.transpose(w, (2, 3, 0, 1)).reshape(9, C_out, C_in)

    cparams = pltpu.CompilerParams(
        dimension_semantics=("parallel",),
        vmem_limit_bytes=48 * 1024 * 1024,   # > 32 MiB default, < v7x 64 MiB physical
    )

    # ------------------------- shared in-kernel helpers -------------------------
    def build_padded(xu_img, xpad_ref):
        # Zero-pad in VMEM: unpadded flat (C_in, H*W) -> padded flat (C_in, L_in).
        xpad_ref[...] = jnp.zeros_like(xpad_ref)
        for h in range(H):                                  # static row copies
            dst = (h + 1) * Wp + 1
            xpad_ref[:, dst:dst + W] = xu_img[:, h * W:h * W + W]

    def conv_flat(xpad_ref, w_ref):
        # 9 shifted MXU matmuls on the padded flat slab -> (C_out, L_out) f32.
        # TODO(synk): with the spatial row-tile grid axis (see header), fold the 9 taps into
        #             one K=9*C_in matmul over a (9*C_in, L_tile) scratch for better MXU K
        #             fill and a register-resident accumulator.
        xw = xpad_ref[...]                                  # (C_in, L_in)
        acc = jnp.zeros((C_out, L_out), jnp.float32)
        for t in range(9):                                  # static unrolled taps
            dy, dx = divmod(t, 3)
            off = dy * Wp + dx                              # static lane offset
            acc = acc + jnp.dot(w_ref[t], xw[:, off:off + L_out],
                                preferred_element_type=jnp.float32)
        return acc

    def valid_mask():
        # {0,1} mask over the flattened output (drops the 2 pad cols of every row),
        # built in-kernel from an iota.  Float floor trick (exact for Wp << 1000,
        # indices << 2^24) avoids relying on vector integer div/mod.
        jf = lax.broadcasted_iota(jnp.int32, (1, L_out), 1).astype(jnp.float32)
        rowf = jnp.floor(jf * (1.0 / Wp) + 0.5 / Wp)
        colf = jf - rowf * Wp
        return (colf < (W - 0.5)).astype(jnp.float32)       # (1, L_out)

    # ------------- kernel 1: conv + masked partial BN statistics (stats only) ------------
    def conv_stats_kernel(xu_ref, w_ref, s_ref, ss_ref, xpad_ref):
        build_padded(xu_ref[0], xpad_ref)
        acc = conv_flat(xpad_ref, w_ref)                    # (C_out, L_out), never hits HBM
        am = acc * valid_mask()                             # masked product reused below
        s_ref[0] = jnp.sum(am, axis=-1, keepdims=True)      # (C_out, 1)
        ss_ref[0] = jnp.sum(am * acc, axis=-1, keepdims=True)

    s, ss = pl.pallas_call(
        conv_stats_kernel,
        out_shape=(jax.ShapeDtypeStruct((B, C_out, 1), jnp.float32),
                   jax.ShapeDtypeStruct((B, C_out, 1), jnp.float32)),
        grid_spec=pltpu.PrefetchScalarGridSpec(
            num_scalar_prefetch=0,
            grid=(B,),
            in_specs=[
                pl.BlockSpec((1, C_in, HW), lambda b: (b, 0, 0)),      # one unpadded image
                pl.BlockSpec((9, C_out, C_in), lambda b: (0, 0, 0)),   # all taps (resident)
            ],
            out_specs=[
                pl.BlockSpec((1, C_out, 1), lambda b: (b, 0, 0)),
                pl.BlockSpec((1, C_out, 1), lambda b: (b, 0, 0)),
            ],
            scratch_shapes=[pltpu.VMEM((C_in, L_in), jnp.float32)],    # padded slab
        ),
        compiler_params=cparams,
    )(xu, w_taps)

    # ------------- tiny JAX epilogue: fold batch stats into scale / shift ----------------
    # TODO(synk): SynchronizedBatchNorm2d would all-reduce s/ss (and counts) across replicas.
    n = float(B * H * W)
    mean = jnp.sum(s, axis=0) / n                      # (C_out, 1)
    var = jnp.sum(ss, axis=0) / n - mean * mean        # biased var (train-mode BN)
    scale = lax.rsqrt(var + eps)                       # (C_out, 1)
    shift = -mean * scale                              # (C_out, 1)

    # --------- kernel 2: recompute conv, normalize, write cropped output directly --------
    def bn_apply_kernel(xu_ref, w_ref, scale_ref, shift_ref, o_ref, xpad_ref):
        build_padded(xu_ref[0], xpad_ref)
        acc = conv_flat(xpad_ref, w_ref)
        yv = acc * scale_ref[...] + shift_ref[...]          # (C_out, L_out)
        for h in range(H):                                  # fused crop: valid cols only
            o_ref[0, :, h * W:h * W + W] = yv[:, h * Wp:h * Wp + W]

    y_flat = pl.pallas_call(
        bn_apply_kernel,
        out_shape=jax.ShapeDtypeStruct((B, C_out, HW), jnp.float32),
        grid_spec=pltpu.PrefetchScalarGridSpec(
            num_scalar_prefetch=0,
            grid=(B,),
            in_specs=[
                pl.BlockSpec((1, C_in, HW), lambda b: (b, 0, 0)),
                pl.BlockSpec((9, C_out, C_in), lambda b: (0, 0, 0)),
                pl.BlockSpec((C_out, 1), lambda b: (0, 0)),
                pl.BlockSpec((C_out, 1), lambda b: (0, 0)),
            ],
            out_specs=pl.BlockSpec((1, C_out, HW), lambda b: (b, 0, 0)),
            scratch_shapes=[pltpu.VMEM((C_in, L_in), jnp.float32)],
        ),
        compiler_params=cparams,
    )(xu, w_taps, scale, shift)

    # Free contiguous reshape only -- no XLA crop/slice pass.
    return y_flat.reshape(B, C_out, H, W)


def conv_bn2d_ref(x, w, eps=1e-5):
    """Pure-JAX reference mirroring the PyTorch forward (train-mode BN, affine=False)."""
    y = lax.conv_general_dilated(
        x, w, window_strides=(1, 1), padding=((1, 1), (1, 1)),
        dimension_numbers=("NCHW", "OIHW", "NCHW"),
        precision=lax.Precision.HIGHEST)
    mean = y.mean(axis=(0, 2, 3), keepdims=True)
    var = y.var(axis=(0, 2, 3), keepdims=True)   # biased variance
    return (y - mean) * lax.rsqrt(var + eps)


if __name__ == "__main__":
    B, C_in, C_out, H, W = 2, 4, 8, 16, 16

    key = jax.random.PRNGKey(0)
    kx, kw = jax.random.split(key)
    x = jax.random.normal(kx, (B, C_in, H, W), dtype=jnp.float32)
    w = jax.random.normal(kw, (C_out, C_in, 3, 3), dtype=jnp.float32) * 0.1

    out = jax.block_until_ready(conv_bn2d(x, w))
    ref = conv_bn2d_ref(x, w)

    np.testing.assert_allclose(np.asarray(out), np.asarray(ref),
                               rtol=1e-4, atol=1e-4)
    print("KERNEL_OK")
</pallas_src>

<mosaic_0001>
module attributes {stable_mosaic.version = 11 : i64} {
  func.func @conv_stats_kernel(%arg0: i32, %arg1: memref<1x4x256xf32, #tpu.memory_space<vmem>>, %arg2: memref<9x8x4xf32, #tpu.memory_space<vmem>>, %arg3: memref<1x8x1xf32, #tpu.memory_space<vmem>>, %arg4: memref<1x8x1xf32, #tpu.memory_space<vmem>>, %arg5: memref<4x326xf32, #tpu.memory_space<vmem>>) attributes {dimension_semantics = [#tpu.dimension_semantics<parallel>], iteration_bounds = array<i64: 2>, scalar_prefetch = 0 : i64, scratch_operands = 1 : i64, tpu.core_type = #tpu.core_type<tc>, window_params = [{transform_indices = @transform_0, window_bounds = array<i64: 1, 4, 256>}, {pipeline_mode = #tpu.pipeline_mode<synchronous>, transform_indices = @transform_1, window_bounds = array<i64: 9, 8, 4>}, {transform_indices = @transform_2, window_bounds = array<i64: 1, 8, 1>}, {transform_indices = @transform_3, window_bounds = array<i64: 1, 8, 1>}]} {
    %c0 = arith.constant 0 : index
    %c0_0 = arith.constant 0 : index
    %c0_1 = arith.constant 0 : index
    %0 = vector.load %arg1[%c0, %c0_0, %c0_1] : memref<1x4x256xf32, #tpu.memory_space<vmem>>, vector<1x4x256xf32>
    %1 = vector.shape_cast %0 : vector<1x4x256xf32> to vector<4x256xf32>
    %cst = arith.constant 0.000000e+00 : f32
    %2 = vector.broadcast %cst : f32 to vector<4x326xf32>
    %c0_2 = arith.constant 0 : index
    %c0_3 = arith.constant 0 : index
    %3 = vector.load %arg5[%c0_2, %c0_3] : memref<4x326xf32, #tpu.memory_space<vmem>>, vector<4x326xf32>
    tpu.vector_store %arg5[%c0_2, %c0_3], %2 {strides = array<i32>} : memref<4x326xf32, #tpu.memory_space<vmem>>, vector<4x326xf32>,
    %4 = vector.extract_strided_slice %1 {offsets = [0, 0], sizes = [4, 16], strides = [1, 1]} : vector<4x256xf32> to vector<4x16xf32>
    %c0_4 = arith.constant 0 : index
    %c19 = arith.constant 19 : index
    %5 = vector.load %arg5[%c0_4, %c19] : memref<4x326xf32, #tpu.memory_space<vmem>>, vector<4x16xf32>
    tpu.vector_store %arg5[%c0_4, %c19], %4 {strides = array<i32>} : memref<4x326xf32, #tpu.memory_space<vmem>>, vector<4x16xf32>,
    %6 = vector.extract_strided_slice %1 {offsets = [0, 16], sizes = [4, 16], strides = [1, 1]} : vector<4x256xf32> to vector<4x16xf32>
    %c0_5 = arith.constant 0 : index
    %c37 = arith.constant 37 : index
    %7 = vector.load %arg5[%c0_5, %c37] : memref<4x326xf32, #tpu.memory_space<vmem>>, vector<4x16xf32>
    tpu.vector_store %arg5[%c0_5, %c37], %6 {strides = array<i32>} : memref<4x326xf32, #tpu.memory_space<vmem>>, vector<4x16xf32>,
    %8 = vector.extract_strided_slice %1 {offsets = [0, 32], sizes = [4, 16], strides = [1, 1]} : vector<4x256xf32> to vector<4x16xf32>
    %c0_6 = arith.constant 0 : index
    %c55 = arith.constant 55 : index
    %9 = vector.load %arg5[%c0_6, %c55] : memref<4x326xf32, #tpu.memory_space<vmem>>, vector<4x16xf32>
    tpu.vector_store %arg5[%c0_6, %c55], %8 {strides = array<i32>} : memref<4x326xf32, #tpu.memory_space<vmem>>, vector<4x16xf32>,
    %10 = vector.extract_strided_slice %1 {offsets = [0, 48], sizes = [4, 16], strides = [1, 1]} : vector<4x256xf32> to vector<4x16xf32>
    %c0_7 = arith.constant 0 : index
    %c73 = arith.constant 73 : index
    %11 = vector.load %arg5[%c0_7, %c73] : memref<4x326xf32, #tpu.memory_space<vmem>>, vector<4x16xf32>
    tpu.vector_store %arg5[%c0_7, %c73], %10 {strides = array<i32>} : memref<4x326xf32, #tpu.memory_space<vmem>>, vector<4x16xf32>,
    %12 = vector.extract_strided_slice %1 {offsets = [0, 64], sizes = [4, 16], strides = [1, 1]} : vector<4x256xf32> to vector<4x16xf32>
    %c0_8 = arith.constant 0 : index
    %c91 = arith.constant 91 : index
    %13 = vector.load %arg5[%c0_8, %c91] : memref<4x326xf32, #tpu.memory_space<vmem>>, vector<4x16xf32>
    tpu.vector_store %arg5[%c0_8, %c91], %12 {strides = array<i32>} : memref<4x326xf32, #tpu.memory_space<vmem>>, vector<4x16xf32>,
    %14 = vector.extract_strided_slice %1 {offsets = [0, 80], sizes = [4, 16], strides = [1, 1]} : vector<4x256xf32> to vector<4x16xf32>
    %c0_9 = arith.constant 0 : index
    %c109 = arith.constant 109 : index
    %15 = vector.load %arg5[%c0_9, %c109] : memref<4x326xf32, #tpu.memory_space<vmem>>, vector<4x16xf32>
    tpu.vector_store %arg5[%c0_9, %c109], %14 {strides = array<i32>} : memref<4x326xf32, #tpu.memory_space<vmem>>, vector<4x16xf32>,
    %16 = vector.extract_strided_slice %1 {offsets = [0, 96], sizes = [4, 16], strides = [1, 1]} : vector<4x256xf32> to vector<4x16xf32>
    %c0_10 = arith.constant 0 : index
    %c127 = arith.constant 127 : index
    %17 = vector.load %arg5[%c0_10, %c127] : memref<4x326xf32, #tpu.memory_space<vmem>>, vector<4x16xf32>
    tpu.vector_store %arg5[%c0_10, %c127], %16 {strides = array<i32>} : memref<4x326xf32, #tpu.memory_space<vmem>>, vector<4x16xf32>,
    %18 = vector.extract_strided_slice %1 {offsets = [0, 112], sizes = [4, 16], strides = [1, 1]} : vector<4x256xf32> to vector<4x16xf32>
    %c0_11 = arith.constant 0 : index
    %c145 = arith.constant 145 : index
    %19 = vector.load %arg5[%c0_11, %c145] : memref<4x326xf32, #tpu.memory_space<vmem>>, vector<4x16xf32>
    tpu.vector_store %arg5[%c0_11, %c145], %18 {strides = array<i32>} : memref<4x326xf32, #tpu.memory_space<vmem>>, vector<4x16xf32>,
    %20 = vector.extract_strided_slice %1 {offsets = [0, 128], sizes = [4, 16], strides = [1, 1]} : vector<4x256xf32> to vector<4x16xf32>
    %c0_12 = arith.constant 0 : index
    %c163 = arith.constant 163 : index
    %21 = vector.load %arg5[%c0_12, %c163] : memref<4x326xf32, #tpu.memory_space<vmem>>, vector<4x16xf32>
    tpu.vector_store %arg5[%c0_12, %c163], %20 {strides = array<i32>} : memref<4x326xf32, #tpu.memory_space<vmem>>, vector<4x16xf32>,
    %22 = vector.extract_strided_slice %1 {offsets = [0, 144], sizes = [4, 16], strides = [1, 1]} : vector<4x256xf32> to vector<4x16xf32>
    %c0_13 = arith.constant 0 : index
    %c181 = arith.constant 181 : index
    %23 = vector.load %arg5[%c0_13, %c181] : memref<4x326xf32, #tpu.memory_space<vmem>>, vector<4x16xf32>
    tpu.vector_store %arg5[%c0_13, %c181], %22 {strides = array<i32>} : memref<4x326xf32, #tpu.memory_space<vmem>>, vector<4x16xf32>,
    %24 = vector.extract_strided_slice %1 {offsets = [0, 160], sizes = [4, 16], strides = [1, 1]} : vector<4x256xf32> to vector<4x16xf32>
    %c0_14 = arith.constant 0 : index
    %c199 = arith.constant 199 : index
    %25 = vector.load %arg5[%c0_14, %c199] : memref<4x326xf32, #tpu.memory_space<vmem>>, vector<4x16xf32>
    tpu.vector_store %arg5[%c0_14, %c199], %24 {strides = array<i32>} : memref<4x326xf32, #tpu.memory_space<vmem>>, vector<4x16xf32>,
    %26 = vector.extract_strided_slice %1 {offsets = [0, 176], sizes = [4, 16], strides = [1, 1]} : vector<4x256xf32> to vector<4x16xf32>
    %c0_15 = arith.constant 0 : index
    %c217 = arith.constant 217 : index
    %27 = vector.load %arg5[%c0_15, %c217] : memref<4x326xf32, #tpu.memory_space<vmem>>, vector<4x16xf32>
    tpu.vector_store %arg5[%c0_15, %c217], %26 {strides = array<i32>} : memref<4x326xf32, #tpu.memory_space<vmem>>, vector<4x16xf32>,
    %28 = vector.extract_strided_slice %1 {offsets = [0, 192], sizes = [4, 16], strides = [1, 1]} : vector<4x256xf32> to vector<4x16xf32>
    %c0_16 = arith.constant 0 : index
    %c235 = arith.constant 235 : index
    %29 = vector.load %arg5[%c0_16, %c235] : memref<4x326xf32, #tpu.memory_space<vmem>>, vector<4x16xf32>
    tpu.vector_store %arg5[%c0_16, %c235], %28 {strides = array<i32>} : memref<4x326xf32, #tpu.memory_space<vmem>>, vector<4x16xf32>,
    %30 = vector.extract_strided_slice %1 {offsets = [0, 208], sizes = [4, 16], strides = [1, 1]} : vector<4x256xf32> to vector<4x16xf32>
    %c0_17 = arith.constant 0 : index
    %c253 = arith.constant 253 : index
    %31 = vector.load %arg5[%c0_17, %c253] : memref<4x326xf32, #tpu.memory_space<vmem>>, vector<4x16xf32>
    tpu.vector_store %arg5[%c0_17, %c253], %30 {strides = array<i32>} : memref<4x326xf32, #tpu.memory_space<vmem>>, vector<4x16xf32>,
    %32 = vector.extract_strided_slice %1 {offsets = [0, 224], sizes = [4, 16], strides = [1, 1]} : vector<4x256xf32> to vector<4x16xf32>
    %c0_18 = arith.constant 0 : index
    %c271 = arith.constant 271 : index
    %33 = vector.load %arg5[%c0_18, %c271] : memref<4x326xf32, #tpu.memory_space<vmem>>, vector<4x16xf32>
    tpu.vector_store %arg5[%c0_18, %c271], %32 {strides = array<i32>} : memref<4x326xf32, #tpu.memory_space<vmem>>, vector<4x16xf32>,
    %34 = vector.extract_strided_slice %1 {offsets = [0, 240], sizes = [4, 16], strides = [1, 1]} : vector<4x256xf32> to vector<4x16xf32>
    %c0_19 = arith.constant 0 : index
    %c289 = arith.constant 289 : index
    %35 = vector.load %arg5[%c0_19, %c289] : memref<4x326xf32, #tpu.memory_space<vmem>>, vector<4x16xf32>
    tpu.vector_store %arg5[%c0_19, %c289], %34 {strides = array<i32>} : memref<4x326xf32, #tpu.memory_space<vmem>>, vector<4x16xf32>,
    %c0_20 = arith.constant 0 : index
    %c0_21 = arith.constant 0 : index
    %36 = vector.load %arg5[%c0_20, %c0_21] : memref<4x326xf32, #tpu.memory_space<vmem>>, vector<4x326xf32>
    %cst_22 = arith.constant 0.000000e+00 : f32
    %37 = vector.broadcast %cst_22 : f32 to vector<8x288xf32>
    %c0_23 = arith.constant 0 : index
    %c0_24 = arith.constant 0 : index
    %c0_25 = arith.constant 0 : index
    %38 = vector.load %arg2[%c0_23, %c0_24, %c0_25] : memref<9x8x4xf32, #tpu.memory_space<vmem>>, vector<1x8x4xf32>
    %39 = vector.shape_cast %38 : vector<1x8x4xf32> to vector<8x4xf32>
    %40 = vector.extract_strided_slice %36 {offsets = [0, 0], sizes = [4, 288], strides = [1, 1]} : vector<4x326xf32> to vector<4x288xf32>
    %cst_26 = arith.constant dense<0.000000e+00> : vector<8x288xf32>
    %41 = tpu.matmul %39, %40, %cst_26 {dimension_numbers = #tpu.dot_dimension_numbers<[1], [0], [0], [1], [0, 0, 1, 1], [], []>} : vector<8x4xf32>, vector<4x288xf32>, vector<8x288xf32> -> vector<8x288xf32>
    %42 = arith.addf %37, %41 : vector<8x288xf32>
    %c1 = arith.constant 1 : index
    %c0_27 = arith.constant 0 : index
    %c0_28 = arith.constant 0 : index
    %43 = vector.load %arg2[%c1, %c0_27, %c0_28] : memref<9x8x4xf32, #tpu.memory_space<vmem>>, vector<1x8x4xf32>
    %44 = vector.shape_cast %43 : vector<1x8x4xf32> to vector<8x4xf32>
    %45 = vector.extract_strided_slice %36 {offsets = [0, 1], sizes = [4, 288], strides = [1, 1]} : vector<4x326xf32> to vector<4x288xf32>
    %cst_29 = arith.constant dense<0.000000e+00> : vector<8x288xf32>
    %46 = tpu.matmul %44, %45, %cst_29 {dimension_numbers = #tpu.dot_dimension_numbers<[1], [0], [0], [1], [0, 0, 1, 1], [], []>} : vector<8x4xf32>, vector<4x288xf32>, vector<8x288xf32> -> vector<8x288xf32>
    %47 = arith.addf %42, %46 : vector<8x288xf32>
    %c2 = arith.constant 2 : index
    %c0_30 = arith.constant 0 : index
    %c0_31 = arith.constant 0 : index
    %48 = vector.load %arg2[%c2, %c0_30, %c0_31] : memref<9x8x4xf32, #tpu.memory_space<vmem>>, vector<1x8x4xf32>
    %49 = vector.shape_cast %48 : vector<1x8x4xf32> to vector<8x4xf32>
    %50 = vector.extract_strided_slice %36 {offsets = [0, 2], sizes = [4, 288], strides = [1, 1]} : vector<4x326xf32> to vector<4x288xf32>
    %cst_32 = arith.constant dense<0.000000e+00> : vector<8x288xf32>
    %51 = tpu.matmul %49, %50, %cst_32 {dimension_numbers = #tpu.dot_dimension_numbers<[1], [0], [0], [1], [0, 0, 1, 1], [], []>} : vector<8x4xf32>, vector<4x288xf32>, vector<8x288xf32> -> vector<8x288xf32>
    %52 = arith.addf %47, %51 : vector<8x288xf32>
    %c3 = arith.constant 3 : index
    %c0_33 = arith.constant 0 : index
    %c0_34 = arith.constant 0 : index
    %53 = vector.load %arg2[%c3, %c0_33, %c0_34] : memref<9x8x4xf32, #tpu.memory_space<vmem>>, vector<1x8x4xf32>
    %54 = vector.shape_cast %53 : vector<1x8x4xf32> to vector<8x4xf32>
    %55 = vector.extract_strided_slice %36 {offsets = [0, 18], sizes = [4, 288], strides = [1, 1]} : vector<4x326xf32> to vector<4x288xf32>
    %cst_35 = arith.constant dense<0.000000e+00> : vector<8x288xf32>
    %56 = tpu.matmul %54, %55, %cst_35 {dimension_numbers = #tpu.dot_dimension_numbers<[1], [0], [0], [1], [0, 0, 1, 1], [], []>} : vector<8x4xf32>, vector<4x288xf32>, vector<8x288xf32> -> vector<8x288xf32>
    %57 = arith.addf %52, %56 : vector<8x288xf32>
    %c4 = arith.constant 4 : index
    %c0_36 = arith.constant 0 : index
    %c0_37 = arith.constant 0 : index
    %58 = vector.load %arg2[%c4, %c0_36, %c0_37] : memref<9x8x4xf32, #tpu.memory_space<vmem>>, vector<1x8x4xf32>
    %59 = vector.shape_cast %58 : vector<1x8x4xf32> to vector<8x4xf32>
    %60 = vector.extract_strided_slice %36 {offsets = [0, 19], sizes = [4, 288], strides = [1, 1]} : vector<4x326xf32> to vector<4x288xf32>
    %cst_38 = arith.constant dense<0.000000e+00> : vector<8x288xf32>
    %61 = tpu.matmul %59, %60, %cst_38 {dimension_numbers = #tpu.dot_dimension_numbers<[1], [0], [0], [1], [0, 0, 1, 1], [], []>} : vector<8x4xf32>, vector<4x288xf32>, vector<8x288xf32> -> vector<8x288xf32>
    %62 = arith.addf %57, %61 : vector<8x288xf32>
    %c5 = arith.constant 5 : index
    %c0_39 = arith.constant 0 : index
    %c0_40 = arith.constant 0 : index
    %63 = vector.load %arg2[%c5, %c0_39, %c0_40] : memref<9x8x4xf32, #tpu.memory_space<vmem>>, vector<1x8x4xf32>
    %64 = vector.shape_cast %63 : vector<1x8x4xf32> to vector<8x4xf32>
    %65 = vector.extract_strided_slice %36 {offsets = [0, 20], sizes = [4, 288], strides = [1, 1]} : vector<4x326xf32> to vector<4x288xf32>
    %cst_41 = arith.constant dense<0.000000e+00> : vector<8x288xf32>
    %66 = tpu.matmul %64, %65, %cst_41 {dimension_numbers = #tpu.dot_dimension_numbers<[1], [0], [0], [1], [0, 0, 1, 1], [], []>} : vector<8x4xf32>, vector<4x288xf32>, vector<8x288xf32> -> vector<8x288xf32>
    %67 = arith.addf %62, %66 : vector<8x288xf32>
    %c6 = arith.constant 6 : index
    %c0_42 = arith.constant 0 : index
    %c0_43 = arith.constant 0 : index
    %68 = vector.load %arg2[%c6, %c0_42, %c0_43] : memref<9x8x4xf32, #tpu.memory_space<vmem>>, vector<1x8x4xf32>
    %69 = vector.shape_cast %68 : vector<1x8x4xf32> to vector<8x4xf32>
    %70 = vector.extract_strided_slice %36 {offsets = [0, 36], sizes = [4, 288], strides = [1, 1]} : vector<4x326xf32> to vector<4x288xf32>
    %cst_44 = arith.constant dense<0.000000e+00> : vector<8x288xf32>
    %71 = tpu.matmul %69, %70, %cst_44 {dimension_numbers = #tpu.dot_dimension_numbers<[1], [0], [0], [1], [0, 0, 1, 1], [], []>} : vector<8x4xf32>, vector<4x288xf32>, vector<8x288xf32> -> vector<8x288xf32>
    %72 = arith.addf %67, %71 : vector<8x288xf32>
    %c7 = arith.constant 7 : index
    %c0_45 = arith.constant 0 : index
    %c0_46 = arith.constant 0 : index
    %73 = vector.load %arg2[%c7, %c0_45, %c0_46] : memref<9x8x4xf32, #tpu.memory_space<vmem>>, vector<1x8x4xf32>
    %74 = vector.shape_cast %73 : vector<1x8x4xf32> to vector<8x4xf32>
    %75 = vector.extract_strided_slice %36 {offsets = [0, 37], sizes = [4, 288], strides = [1, 1]} : vector<4x326xf32> to vector<4x288xf32>
    %cst_47 = arith.constant dense<0.000000e+00> : vector<8x288xf32>
    %76 = tpu.matmul %74, %75, %cst_47 {dimension_numbers = #tpu.dot_dimension_numbers<[1], [0], [0], [1], [0, 0, 1, 1], [], []>} : vector<8x4xf32>, vector<4x288xf32>, vector<8x288xf32> -> vector<8x288xf32>
    %77 = arith.addf %72, %76 : vector<8x288xf32>
    %c8 = arith.constant 8 : index
    %c0_48 = arith.constant 0 : index
    %c0_49 = arith.constant 0 : index
    %78 = vector.load %arg2[%c8, %c0_48, %c0_49] : memref<9x8x4xf32, #tpu.memory_space<vmem>>, vector<1x8x4xf32>
    %79 = vector.shape_cast %78 : vector<1x8x4xf32> to vector<8x4xf32>
    %80 = vector.extract_strided_slice %36 {offsets = [0, 38], sizes = [4, 288], strides = [1, 1]} : vector<4x326xf32> to vector<4x288xf32>
    %cst_50 = arith.constant dense<0.000000e+00> : vector<8x288xf32>
    %81 = tpu.matmul %79, %80, %cst_50 {dimension_numbers = #tpu.dot_dimension_numbers<[1], [0], [0], [1], [0, 0, 1, 1], [], []>} : vector<8x4xf32>, vector<4x288xf32>, vector<8x288xf32> -> vector<8x288xf32>
    %82 = arith.addf %77, %81 : vector<8x288xf32>
    %83 = tpu.iota {dimensions = array<i32: 1>} : vector<1x288xi32>
    %84 = arith.sitofp %83 : vector<1x288xi32> to vector<1x288xf32>
    %cst_51 = arith.constant 0.055555556 : f32
    %85 = vector.broadcast %cst_51 : f32 to vector<1x288xf32>
    %86 = arith.mulf %84, %85 : vector<1x288xf32>
    %cst_52 = arith.constant 0.027777778 : f32
    %87 = vector.broadcast %cst_52 : f32 to vector<1x288xf32>
    %88 = arith.addf %86, %87 : vector<1x288xf32>
    %89 = math.floor %88 : vector<1x288xf32>
    %cst_53 = arith.constant 1.800000e+01 : f32
    %90 = vector.broadcast %cst_53 : f32 to vector<1x288xf32>
    %91 = arith.mulf %89, %90 : vector<1x288xf32>
    %92 = arith.subf %84, %91 : vector<1x288xf32>
    %cst_54 = arith.constant 1.550000e+01 : f32
    %93 = vector.broadcast %cst_54 : f32 to vector<1x288xf32>
    %94 = arith.cmpf olt, %92, %93 : vector<1x288xf32>
    %95 = arith.extui %94 : vector<1x288xi1> to vector<1x288xi32>
    %96 = arith.sitofp %95 : vector<1x288xi32> to vector<1x288xf32>
    %97 = vector.broadcast %96 : vector<1x288xf32> to vector<8x288xf32>
    %98 = arith.mulf %82, %97 : vector<8x288xf32>
    %cst_55 = arith.constant dense<0.000000e+00> : vector<8xf32>
    %99 = vector.multi_reduction <add>, %98, %cst_55 [1] : vector<8x288xf32> to vector<8xf32>
    %100 = vector.shape_cast %99 : vector<8xf32> to vector<8x1xf32>
    %c0_56 = arith.constant 0 : index
    %c0_57 = arith.constant 0 : index
    %c0_58 = arith.constant 0 : index
    %101 = vector.load %arg3[%c0_56, %c0_57, %c0_58] : memref<1x8x1xf32, #tpu.memory_space<vmem>>, vector<1x8x1xf32>
    %102 = vector.shape_cast %101 : vector<1x8x1xf32> to vector<8x1xf32>
    %103 = vector.shape_cast %100 : vector<8x1xf32> to vector<1x8x1xf32>
    tpu.vector_store %arg3[%c0_56, %c0_57, %c0_58], %103 {strides = array<i32>} : memref<1x8x1xf32, #tpu.memory_space<vmem>>, vector<1x8x1xf32>,
    %104 = arith.mulf %98, %82 : vector<8x288xf32>
    %cst_59 = arith.constant dense<0.000000e+00> : vector<8xf32>
    %105 = vector.multi_reduction <add>, %104, %cst_59 [1] : vector<8x288xf32> to vector<8xf32>
    %106 = vector.shape_cast %105 : vector<8xf32> to vector<8x1xf32>
    %c0_60 = arith.constant 0 : index
    %c0_61 = arith.constant 0 : index
    %c0_62 = arith.constant 0 : index
    %107 = vector.load %arg4[%c0_60, %c0_61, %c0_62] : memref<1x8x1xf32, #tpu.memory_space<vmem>>, vector<1x8x1xf32>
    %108 = vector.shape_cast %107 : vector<1x8x1xf32> to vector<8x1xf32>
    %109 = vector.shape_cast %106 : vector<8x1xf32> to vector<1x8x1xf32>
    tpu.vector_store %arg4[%c0_60, %c0_61, %c0_62], %109 {strides = array<i32>} : memref<1x8x1xf32, #tpu.memory_space<vmem>>, vector<1x8x1xf32>,
    return
  }
  func.func @transform_0(%arg0: i32) -> (i32, i32, i32) {
    %c0_i32 = arith.constant 0 : i32
    %c0_i32_0 = arith.constant 0 : i32
    %c0_i32_1 = arith.constant 0 : i32
    return %arg0, %c0_i32, %c0_i32_0 : i32, i32, i32
  }
  func.func @transform_1(%arg0: i32) -> (i32, i32, i32) {
    %c0_i32 = arith.constant 0 : i32
    %c0_i32_0 = arith.constant 0 : i32
    %c0_i32_1 = arith.constant 0 : i32
    %c0_i32_2 = arith.constant 0 : i32
    return %c0_i32, %c0_i32_0, %c0_i32_1 : i32, i32, i32
  }
  func.func @transform_2(%arg0: i32) -> (i32, i32, i32) {
    %c0_i32 = arith.constant 0 : i32
    %c0_i32_0 = arith.constant 0 : i32
    %c0_i32_1 = arith.constant 0 : i32
    return %arg0, %c0_i32, %c0_i32_0 : i32, i32, i32
  }
  func.func @transform_3(%arg0: i32) -> (i32, i32, i32) {
    %c0_i32 = arith.constant 0 : i32
    %c0_i32_0 = arith.constant 0 : i32
    %c0_i32_1 = arith.constant 0 : i32
    return %arg0, %c0_i32, %c0_i32_0 : i32, i32, i32
  }
}

module attributes {stable_mosaic.version = 11 : i64} {
  func.func @bn_apply_kernel(%arg0: i32, %arg1: memref<1x4x256xf32, #tpu.memory_space<vmem>>, %arg2: memref<9x8x4xf32, #tpu.memory_space<vmem>>, %arg3: memref<8x1xf32, #tpu.memory_space<vmem>>, %arg4: memref<8x1xf32, #tpu.memory_space<vmem>>, %arg5: memref<1x8x256xf32, #tpu.memory_space<vmem>>, %arg6: memref<4x326xf32, #tpu.memory_space<vmem>>) attributes {dimension_semantics = [#tpu.dimension_semantics<parallel>], iteration_bounds = array<i64: 2>, scalar_prefetch = 0 : i64, scratch_operands = 1 : i64, tpu.core_type = #tpu.core_type<tc>, window_params = [{transform_indices = @transform_0, window_bounds = array<i64: 1, 4, 256>}, {pipeline_mode = #tpu.pipeline_mode<synchronous>, transform_indices = @transform_1, window_bounds = array<i64: 9, 8, 4>}, {pipeline_mode = #tpu.pipeline_mode<synchronous>, transform_indices = @transform_2, window_bounds = array<i64: 8, 1>}, {pipeline_mode = #tpu.pipeline_mode<synchronous>, transform_indices = @transform_3, window_bounds = array<i64: 8, 1>}, {transform_indices = @transform_4, window_bounds = array<i64: 1, 8, 256>}]} {
    %c0 = arith.constant 0 : index
    %c0_0 = arith.constant 0 : index
    %c0_1 = arith.constant 0 : index
    %0 = vector.load %arg1[%c0, %c0_0, %c0_1] : memref<1x4x256xf32, #tpu.memory_space<vmem>>, vector<1x4x256xf32>
    %1 = vector.shape_cast %0 : vector<1x4x256xf32> to vector<4x256xf32>
    %cst = arith.constant 0.000000e+00 : f32
    %2 = vector.broadcast %cst : f32 to vector<4x326xf32>
    %c0_2 = arith.constant 0 : index
    %c0_3 = arith.constant 0 : index
    %3 = vector.load %arg6[%c0_2, %c0_3] : memref<4x326xf32, #tpu.memory_space<vmem>>, vector<4x326xf32>
    tpu.vector_store %arg6[%c0_2, %c0_3], %2 {strides = array<i32>} : memref<4x326xf32, #tpu.memory_space<vmem>>, vector<4x326xf32>,
    %4 = vector.extract_strided_slice %1 {offsets = [0, 0], sizes = [4, 16], strides = [1, 1]} : vector<4x256xf32> to vector<4x16xf32>
    %c0_4 = arith.constant 0 : index
    %c19 = arith.constant 19 : index
    %5 = vector.load %arg6[%c0_4, %c19] : memref<4x326xf32, #tpu.memory_space<vmem>>, vector<4x16xf32>
    tpu.vector_store %arg6[%c0_4, %c19], %4 {strides = array<i32>} : memref<4x326xf32, #tpu.memory_space<vmem>>, vector<4x16xf32>,
    %6 = vector.extract_strided_slice %1 {offsets = [0, 16], sizes = [4, 16], strides = [1, 1]} : vector<4x256xf32> to vector<4x16xf32>
    %c0_5 = arith.constant 0 : index
    %c37 = arith.constant 37 : index
    %7 = vector.load %arg6[%c0_5, %c37] : memref<4x326xf32, #tpu.memory_space<vmem>>, vector<4x16xf32>
    tpu.vector_store %arg6[%c0_5, %c37], %6 {strides = array<i32>} : memref<4x326xf32, #tpu.memory_space<vmem>>, vector<4x16xf32>,
    %8 = vector.extract_strided_slice %1 {offsets = [0, 32], sizes = [4, 16], strides = [1, 1]} : vector<4x256xf32> to vector<4x16xf32>
    %c0_6 = arith.constant 0 : index
    %c55 = arith.constant 55 : index
    %9 = vector.load %arg6[%c0_6, %c55] : memref<4x326xf32, #tpu.memory_space<vmem>>, vector<4x16xf32>
    tpu.vector_store %arg6[%c0_6, %c55], %8 {strides = array<i32>} : memref<4x326xf32, #tpu.memory_space<vmem>>, vector<4x16xf32>,
    %10 = vector.extract_strided_slice %1 {offsets = [0, 48], sizes = [4, 16], strides = [1, 1]} : vector<4x256xf32> to vector<4x16xf32>
    %c0_7 = arith.constant 0 : index
    %c73 = arith.constant 73 : index
    %11 = vector.load %arg6[%c0_7, %c73] : memref<4x326xf32, #tpu.memory_space<vmem>>, vector<4x16xf32>
    tpu.vector_store %arg6[%c0_7, %c73], %10 {strides = array<i32>} : memref<4x326xf32, #tpu.memory_space<vmem>>, vector<4x16xf32>,
    %12 = vector.extract_strided_slice %1 {offsets = [0, 64], sizes = [4, 16], strides = [1, 1]} : vector<4x256xf32> to vector<4x16xf32>
    %c0_8 = arith.constant 0 : index
    %c91 = arith.constant 91 : index
    %13 = vector.load %arg6[%c0_8, %c91] : memref<4x326xf32, #tpu.memory_space<vmem>>, vector<4x16xf32>
    tpu.vector_store %arg6[%c0_8, %c91], %12 {strides = array<i32>} : memref<4x326xf32, #tpu.memory_space<vmem>>, vector<4x16xf32>,
    %14 = vector.extract_strided_slice %1 {offsets = [0, 80], sizes = [4, 16], strides = [1, 1]} : vector<4x256xf32> to vector<4x16xf32>
    %c0_9 = arith.constant 0 : index
    %c109 = arith.constant 109 : index
    %15 = vector.load %arg6[%c0_9, %c109] : memref<4x326xf32, #tpu.memory_space<vmem>>, vector<4x16xf32>
    tpu.vector_store %arg6[%c0_9, %c109], %14 {strides = array<i32>} : memref<4x326xf32, #tpu.memory_space<vmem>>, vector<4x16xf32>,
    %16 = vector.extract_strided_slice %1 {offsets = [0, 96], sizes = [4, 16], strides = [1, 1]} : vector<4x256xf32> to vector<4x16xf32>
    %c0_10 = arith.constant 0 : index
    %c127 = arith.constant 127 : index
    %17 = vector.load %arg6[%c0_10, %c127] : memref<4x326xf32, #tpu.memory_space<vmem>>, vector<4x16xf32>
    tpu.vector_store %arg6[%c0_10, %c127], %16 {strides = array<i32>} : memref<4x326xf32, #tpu.memory_space<vmem>>, vector<4x16xf32>,
    %18 = vector.extract_strided_slice %1 {offsets = [0, 112], sizes = [4, 16], strides = [1, 1]} : vector<4x256xf32> to vector<4x16xf32>
    %c0_11 = arith.constant 0 : index
    %c145 = arith.constant 145 : index
    %19 = vector.load %arg6[%c0_11, %c145] : memref<4x326xf32, #tpu.memory_space<vmem>>, vector<4x16xf32>
    tpu.vector_store %arg6[%c0_11, %c145], %18 {strides = array<i32>} : memref<4x326xf32, #tpu.memory_space<vmem>>, vector<4x16xf32>,
    %20 = vector.extract_strided_slice %1 {offsets = [0, 128], sizes = [4, 16], strides = [1, 1]} : vector<4x256xf32> to vector<4x16xf32>
    %c0_12 = arith.constant 0 : index
    %c163 = arith.constant 163 : index
    %21 = vector.load %arg6[%c0_12, %c163] : memref<4x326xf32, #tpu.memory_space<vmem>>, vector<4x16xf32>
    tpu.vector_store %arg6[%c0_12, %c163], %20 {strides = array<i32>} : memref<4x326xf32, #tpu.memory_space<vmem>>, vector<4x16xf32>,
    %22 = vector.extract_strided_slice %1 {offsets = [0, 144], sizes = [4, 16], strides = [1, 1]} : vector<4x256xf32> to vector<4x16xf32>
    %c0_13 = arith.constant 0 : index
    %c181 = arith.constant 181 : index
    %23 = vector.load %arg6[%c0_13, %c181] : memref<4x326xf32, #tpu.memory_space<vmem>>, vector<4x16xf32>
    tpu.vector_store %arg6[%c0_13, %c181], %22 {strides = array<i32>} : memref<4x326xf32, #tpu.memory_space<vmem>>, vector<4x16xf32>,
    %24 = vector.extract_strided_slice %1 {offsets = [0, 160], sizes = [4, 16], strides = [1, 1]} : vector<4x256xf32> to vector<4x16xf32>
    %c0_14 = arith.constant 0 : index
    %c199 = arith.constant 199 : index
    %25 = vector.load %arg6[%c0_14, %c199] : memref<4x326xf32, #tpu.memory_space<vmem>>, vector<4x16xf32>
    tpu.vector_store %arg6[%c0_14, %c199], %24 {strides = array<i32>} : memref<4x326xf32, #tpu.memory_space<vmem>>, vector<4x16xf32>,
    %26 = vector.extract_strided_slice %1 {offsets = [0, 176], sizes = [4, 16], strides = [1, 1]} : vector<4x256xf32> to vector<4x16xf32>
    %c0_15 = arith.constant 0 : index
    %c217 = arith.constant 217 : index
    %27 = vector.load %arg6[%c0_15, %c217] : memref<4x326xf32, #tpu.memory_space<vmem>>, vector<4x16xf32>
    tpu.vector_store %arg6[%c0_15, %c217], %26 {strides = array<i32>} : memref<4x326xf32, #tpu.memory_space<vmem>>, vector<4x16xf32>,
    %28 = vector.extract_strided_slice %1 {offsets = [0, 192], sizes = [4, 16], strides = [1, 1]} : vector<4x256xf32> to vector<4x16xf32>
    %c0_16 = arith.constant 0 : index
    %c235 = arith.constant 235 : index
    %29 = vector.load %arg6[%c0_16, %c235] : memref<4x326xf32, #tpu.memory_space<vmem>>, vector<4x16xf32>
    tpu.vector_store %arg6[%c0_16, %c235], %28 {strides = array<i32>} : memref<4x326xf32, #tpu.memory_space<vmem>>, vector<4x16xf32>,
    %30 = vector.extract_strided_slice %1 {offsets = [0, 208], sizes = [4, 16], strides = [1, 1]} : vector<4x256xf32> to vector<4x16xf32>
    %c0_17 = arith.constant 0 : index
    %c253 = arith.constant 253 : index
    %31 = vector.load %arg6[%c0_17, %c253] : memref<4x326xf32, #tpu.memory_space<vmem>>, vector<4x16xf32>
    tpu.vector_store %arg6[%c0_17, %c253], %30 {strides = array<i32>} : memref<4x326xf32, #tpu.memory_space<vmem>>, vector<4x16xf32>,
    %32 = vector.extract_strided_slice %1 {offsets = [0, 224], sizes = [4, 16], strides = [1, 1]} : vector<4x256xf32> to vector<4x16xf32>
    %c0_18 = arith.constant 0 : index
    %c271 = arith.constant 271 : index
    %33 = vector.load %arg6[%c0_18, %c271] : memref<4x326xf32, #tpu.memory_space<vmem>>, vector<4x16xf32>
    tpu.vector_store %arg6[%c0_18, %c271], %32 {strides = array<i32>} : memref<4x326xf32, #tpu.memory_space<vmem>>, vector<4x16xf32>,
    %34 = vector.extract_strided_slice %1 {offsets = [0, 240], sizes = [4, 16], strides = [1, 1]} : vector<4x256xf32> to vector<4x16xf32>
    %c0_19 = arith.constant 0 : index
    %c289 = arith.constant 289 : index
    %35 = vector.load %arg6[%c0_19, %c289] : memref<4x326xf32, #tpu.memory_space<vmem>>, vector<4x16xf32>
    tpu.vector_store %arg6[%c0_19, %c289], %34 {strides = array<i32>} : memref<4x326xf32, #tpu.memory_space<vmem>>, vector<4x16xf32>,
    %c0_20 = arith.constant 0 : index
    %c0_21 = arith.constant 0 : index
    %36 = vector.load %arg6[%c0_20, %c0_21] : memref<4x326xf32, #tpu.memory_space<vmem>>, vector<4x326xf32>
    %cst_22 = arith.constant 0.000000e+00 : f32
    %37 = vector.broadcast %cst_22 : f32 to vector<8x288xf32>
    %c0_23 = arith.constant 0 : index
    %c0_24 = arith.constant 0 : index
    %c0_25 = arith.constant 0 : index
    %38 = vector.load %arg2[%c0_23, %c0_24, %c0_25] : memref<9x8x4xf32, #tpu.memory_space<vmem>>, vector<1x8x4xf32>
    %39 = vector.shape_cast %38 : vector<1x8x4xf32> to vector<8x4xf32>
    %40 = vector.extract_strided_slice %36 {offsets = [0, 0], sizes = [4, 288], strides = [1, 1]} : vector<4x326xf32> to vector<4x288xf32>
    %cst_26 = arith.constant dense<0.000000e+00> : vector<8x288xf32>
    %41 = tpu.matmul %39, %40, %cst_26 {dimension_numbers = #tpu.dot_dimension_numbers<[1], [0], [0], [1], [0, 0, 1, 1], [], []>} : vector<8x4xf32>, vector<4x288xf32>, vector<8x288xf32> -> vector<8x288xf32>
    %42 = arith.addf %37, %41 : vector<8x288xf32>
    %c1 = arith.constant 1 : index
    %c0_27 = arith.constant 0 : index
    %c0_28 = arith.constant 0 : index
    %43 = vector.load %arg2[%c1, %c0_27, %c0_28] : memref<9x8x4xf32, #tpu.memory_space<vmem>>, vector<1x8x4xf32>
    %44 = vector.shape_cast %43 : vector<1x8x4xf32> to vector<8x4xf32>
    %45 = vector.extract_strided_slice %36 {offsets = [0, 1], sizes = [4, 288], strides = [1, 1]} : vector<4x326xf32> to vector<4x288xf32>
    %cst_29 = arith.constant dense<0.000000e+00> : vector<8x288xf32>
    %46 = tpu.matmul %44, %45, %cst_29 {dimension_numbers = #tpu.dot_dimension_numbers<[1], [0], [0], [1], [0, 0, 1, 1], [], []>} : vector<8x4xf32>, vector<4x288xf32>, vector<8x288xf32> -> vector<8x288xf32>
    %47 = arith.addf %42, %46 : vector<8x288xf32>
    %c2 = arith.constant 2 : index
    %c0_30 = arith.constant 0 : index
    %c0_31 = arith.constant 0 : index
    %48 = vector.load %arg2[%c2, %c0_30, %c0_31] : memref<9x8x4xf32, #tpu.memory_space<vmem>>, vector<1x8x4xf32>
    %49 = vector.shape_cast %48 : vector<1x8x4xf32> to vector<8x4xf32>
    %50 = vector.extract_strided_slice %36 {offsets = [0, 2], sizes = [4, 288], strides = [1, 1]} : vector<4x326xf32> to vector<4x288xf32>
    %cst_32 = arith.constant dense<0.000000e+00> : vector<8x288xf32>
    %51 = tpu.matmul %49, %50, %cst_32 {dimension_numbers = #tpu.dot_dimension_numbers<[1], [0], [0], [1], [0, 0, 1, 1], [], []>} : vector<8x4xf32>, vector<4x288xf32>, vector<8x288xf32> -> vector<8x288xf32>
    %52 = arith.addf %47, %51 : vector<8x288xf32>
    %c3 = arith.constant 3 : index
    %c0_33 = arith.constant 0 : index
    %c0_34 = arith.constant 0 : index
    %53 = vector.load %arg2[%c3, %c0_33, %c0_34] : memref<9x8x4xf32, #tpu.memory_space<vmem>>, vector<1x8x4xf32>
    %54 = vector.shape_cast %53 : vector<1x8x4xf32> to vector<8x4xf32>
    %55 = vector.extract_strided_slice %36 {offsets = [0, 18], sizes = [4, 288], strides = [1, 1]} : vector<4x326xf32> to vector<4x288xf32>
    %cst_35 = arith.constant dense<0.000000e+00> : vector<8x288xf32>
    %56 = tpu.matmul %54, %55, %cst_35 {dimension_numbers = #tpu.dot_dimension_numbers<[1], [0], [0], [1], [0, 0, 1, 1], [], []>} : vector<8x4xf32>, vector<4x288xf32>, vector<8x288xf32> -> vector<8x288xf32>
    %57 = arith.addf %52, %56 : vector<8x288xf32>
    %c4 = arith.constant 4 : index
    %c0_36 = arith.constant 0 : index
    %c0_37 = arith.constant 0 : index
    %58 = vector.load %arg2[%c4, %c0_36, %c0_37] : memref<9x8x4xf32, #tpu.memory_space<vmem>>, vector<1x8x4xf32>
    %59 = vector.shape_cast %58 : vector<1x8x4xf32> to vector<8x4xf32>
    %60 = vector.extract_strided_slice %36 {offsets = [0, 19], sizes = [4, 288], strides = [1, 1]} : vector<4x326xf32> to vector<4x288xf32>
    %cst_38 = arith.constant dense<0.000000e+00> : vector<8x288xf32>
    %61 = tpu.matmul %59, %60, %cst_38 {dimension_numbers = #tpu.dot_dimension_numbers<[1], [0], [0], [1], [0, 0, 1, 1], [], []>} : vector<8x4xf32>, vector<4x288xf32>, vector<8x288xf32> -> vector<8x288xf32>
    %62 = arith.addf %57, %61 : vector<8x288xf32>
    %c5 = arith.constant 5 : index
    %c0_39 = arith.constant 0 : index
    %c0_40 = arith.constant 0 : index
    %63 = vector.load %arg2[%c5, %c0_39, %c0_40] : memref<9x8x4xf32, #tpu.memory_space<vmem>>, vector<1x8x4xf32>
    %64 = vector.shape_cast %63 : vector<1x8x4xf32> to vector<8x4xf32>
    %65 = vector.extract_strided_slice %36 {offsets = [0, 20], sizes = [4, 288], strides = [1, 1]} : vector<4x326xf32> to vector<4x288xf32>
    %cst_41 = arith.constant dense<0.000000e+00> : vector<8x288xf32>
    %66 = tpu.matmul %64, %65, %cst_41 {dimension_numbers = #tpu.dot_dimension_numbers<[1], [0], [0], [1], [0, 0, 1, 1], [], []>} : vector<8x4xf32>, vector<4x288xf32>, vector<8x288xf32> -> vector<8x288xf32>
    %67 = arith.addf %62, %66 : vector<8x288xf32>
    %c6 = arith.constant 6 : index
    %c0_42 = arith.constant 0 : index
    %c0_43 = arith.constant 0 : index
    %68 = vector.load %arg2[%c6, %c0_42, %c0_43] : memref<9x8x4xf32, #tpu.memory_space<vmem>>, vector<1x8x4xf32>
    %69 = vector.shape_cast %68 : vector<1x8x4xf32> to vector<8x4xf32>
    %70 = vector.extract_strided_slice %36 {offsets = [0, 36], sizes = [4, 288], strides = [1, 1]} : vector<4x326xf32> to vector<4x288xf32>
    %cst_44 = arith.constant dense<0.000000e+00> : vector<8x288xf32>
    %71 = tpu.matmul %69, %70, %cst_44 {dimension_numbers = #tpu.dot_dimension_numbers<[1], [0], [0], [1], [0, 0, 1, 1], [], []>} : vector<8x4xf32>, vector<4x288xf32>, vector<8x288xf32> -> vector<8x288xf32>
    %72 = arith.addf %67, %71 : vector<8x288xf32>
    %c7 = arith.constant 7 : index
    %c0_45 = arith.constant 0 : index
    %c0_46 = arith.constant 0 : index
    %73 = vector.load %arg2[%c7, %c0_45, %c0_46] : memref<9x8x4xf32, #tpu.memory_space<vmem>>, vector<1x8x4xf32>
    %74 = vector.shape_cast %73 : vector<1x8x4xf32> to vector<8x4xf32>
    %75 = vector.extract_strided_slice %36 {offsets = [0, 37], sizes = [4, 288], strides = [1, 1]} : vector<4x326xf32> to vector<4x288xf32>
    %cst_47 = arith.constant dense<0.000000e+00> : vector<8x288xf32>
    %76 = tpu.matmul %74, %75, %cst_47 {dimension_numbers = #tpu.dot_dimension_numbers<[1], [0], [0], [1], [0, 0, 1, 1], [], []>} : vector<8x4xf32>, vector<4x288xf32>, vector<8x288xf32> -> vector<8x288xf32>
    %77 = arith.addf %72, %76 : vector<8x288xf32>
    %c8 = arith.constant 8 : index
    %c0_48 = arith.constant 0 : index
    %c0_49 = arith.constant 0 : index
    %78 = vector.load %arg2[%c8, %c0_48, %c0_49] : memref<9x8x4xf32, #tpu.memory_space<vmem>>, vector<1x8x4xf32>
    %79 = vector.shape_cast %78 : vector<1x8x4xf32> to vector<8x4xf32>
    %80 = vector.extract_strided_slice %36 {offsets = [0, 38], sizes = [4, 288], strides = [1, 1]} : vector<4x326xf32> to vector<4x288xf32>
    %cst_50 = arith.constant dense<0.000000e+00> : vector<8x288xf32>
    %81 = tpu.matmul %79, %80, %cst_50 {dimension_numbers = #tpu.dot_dimension_numbers<[1], [0], [0], [1], [0, 0, 1, 1], [], []>} : vector<8x4xf32>, vector<4x288xf32>, vector<8x288xf32> -> vector<8x288xf32>
    %82 = arith.addf %77, %81 : vector<8x288xf32>
    %c0_51 = arith.constant 0 : index
    %c0_52 = arith.constant 0 : index
    %83 = vector.load %arg3[%c0_51, %c0_52] : memref<8x1xf32, #tpu.memory_space<vmem>>, vector<8x1xf32>
    %84 = vector.broadcast %83 : vector<8x1xf32> to vector<8x288xf32>
    %85 = arith.mulf %82, %84 : vector<8x288xf32>
    %c0_53 = arith.constant 0 : index
    %c0_54 = arith.constant 0 : index
    %86 = vector.load %arg4[%c0_53, %c0_54] : memref<8x1xf32, #tpu.memory_space<vmem>>, vector<8x1xf32>
    %87 = vector.broadcast %86 : vector<8x1xf32> to vector<8x288xf32>
    %88 = arith.addf %85, %87 : vector<8x288xf32>
    %89 = vector.extract_strided_slice %88 {offsets = [0, 0], sizes = [8, 16], strides = [1, 1]} : vector<8x288xf32> to vector<8x16xf32>
    %c0_55 = arith.constant 0 : index
    %c0_56 = arith.constant 0 : index
    %c0_57 = arith.constant 0 : index
    %90 = vector.load %arg5[%c0_55, %c0_56, %c0_57] : memref<1x8x256xf32, #tpu.memory_space<vmem>>, vector<1x8x16xf32>
    %91 = vector.shape_cast %90 : vector<1x8x16xf32> to vector<8x16xf32>
    %92 = vector.shape_cast %89 : vector<8x16xf32> to vector<1x8x16xf32>
    tpu.vector_store %arg5[%c0_55, %c0_56, %c0_57], %92 {strides = array<i32>} : memref<1x8x256xf32, #tpu.memory_space<vmem>>, vector<1x8x16xf32>,
    %93 = vector.extract_strided_slice %88 {offsets = [0, 18], sizes = [8, 16], strides = [1, 1]} : vector<8x288xf32> to vector<8x16xf32>
    %c0_58 = arith.constant 0 : index
    %c0_59 = arith.constant 0 : index
    %c16 = arith.constant 16 : index
    %94 = vector.load %arg5[%c0_58, %c0_59, %c16] : memref<1x8x256xf32, #tpu.memory_space<vmem>>, vector<1x8x16xf32>
    %95 = vector.shape_cast %94 : vector<1x8x16xf32> to vector<8x16xf32>
    %96 = vector.shape_cast %93 : vector<8x16xf32> to vector<1x8x16xf32>
    tpu.vector_store %arg5[%c0_58, %c0_59, %c16], %96 {strides = array<i32>} : memref<1x8x256xf32, #tpu.memory_space<vmem>>, vector<1x8x16xf32>,
    %97 = vector.extract_strided_slice %88 {offsets = [0, 36], sizes = [8, 16], strides = [1, 1]} : vector<8x288xf32> to vector<8x16xf32>
    %c0_60 = arith.constant 0 : index
    %c0_61 = arith.constant 0 : index
    %c32 = arith.constant 32 : index
    %98 = vector.load %arg5[%c0_60, %c0_61, %c32] : memref<1x8x256xf32, #tpu.memory_space<vmem>>, vector<1x8x16xf32>
    %99 = vector.shape_cast %98 : vector<1x8x16xf32> to vector<8x16xf32>
    %100 = vector.shape_cast %97 : vector<8x16xf32> to vector<1x8x16xf32>
    tpu.vector_store %arg5[%c0_60, %c0_61, %c32], %100 {strides = array<i32>} : memref<1x8x256xf32, #tpu.memory_space<vmem>>, vector<1x8x16xf32>,
    %101 = vector.extract_strided_slice %88 {offsets = [0, 54], sizes = [8, 16], strides = [1, 1]} : vector<8x288xf32> to vector<8x16xf32>
    %c0_62 = arith.constant 0 : index
    %c0_63 = arith.constant 0 : index
    %c48 = arith.constant 48 : index
    %102 = vector.load %arg5[%c0_62, %c0_63, %c48] : memref<1x8x256xf32, #tpu.memory_space<vmem>>, vector<1x8x16xf32>
    %103 = vector.shape_cast %102 : vector<1x8x16xf32> to vector<8x16xf32>
    %104 = vector.shape_cast %101 : vector<8x16xf32> to vector<1x8x16xf32>
    tpu.vector_store %arg5[%c0_62, %c0_63, %c48], %104 {strides = array<i32>} : memref<1x8x256xf32, #tpu.memory_space<vmem>>, vector<1x8x16xf32>,
    %105 = vector.extract_strided_slice %88 {offsets = [0, 72], sizes = [8, 16], strides = [1, 1]} : vector<8x288xf32> to vector<8x16xf32>
    %c0_64 = arith.constant 0 : index
    %c0_65 = arith.constant 0 : index
    %c64 = arith.constant 64 : index
    %106 = vector.load %arg5[%c0_64, %c0_65, %c64] : memref<1x8x256xf32, #tpu.memory_space<vmem>>, vector<1x8x16xf32>
    %107 = vector.shape_cast %106 : vector<1x8x16xf32> to vector<8x16xf32>
    %108 = vector.shape_cast %105 : vector<8x16xf32> to vector<1x8x16xf32>
    tpu.vector_store %arg5[%c0_64, %c0_65, %c64], %108 {strides = array<i32>} : memref<1x8x256xf32, #tpu.memory_space<vmem>>, vector<1x8x16xf32>,
    %109 = vector.extract_strided_slice %88 {offsets = [0, 90], sizes = [8, 16], strides = [1, 1]} : vector<8x288xf32> to vector<8x16xf32>
    %c0_66 = arith.constant 0 : index
    %c0_67 = arith.constant 0 : index
    %c80 = arith.constant 80 : index
    %110 = vector.load %arg5[%c0_66, %c0_67, %c80] : memref<1x8x256xf32, #tpu.memory_space<vmem>>, vector<1x8x16xf32>
    %111 = vector.shape_cast %110 : vector<1x8x16xf32> to vector<8x16xf32>
    %112 = vector.shape_cast %109 : vector<8x16xf32> to vector<1x8x16xf32>
    tpu.vector_store %arg5[%c0_66, %c0_67, %c80], %112 {strides = array<i32>} : memref<1x8x256xf32, #tpu.memory_space<vmem>>, vector<1x8x16xf32>,
    %113 = vector.extract_strided_slice %88 {offsets = [0, 108], sizes = [8, 16], strides = [1, 1]} : vector<8x288xf32> to vector<8x16xf32>
    %c0_68 = arith.constant 0 : index
    %c0_69 = arith.constant 0 : index
    %c96 = arith.constant 96 : index
    %114 = vector.load %arg5[%c0_68, %c0_69, %c96] : memref<1x8x256xf32, #tpu.memory_space<vmem>>, vector<1x8x16xf32>
    %115 = vector.shape_cast %114 : vector<1x8x16xf32> to vector<8x16xf32>
    %116 = vector.shape_cast %113 : vector<8x16xf32> to vector<1x8x16xf32>
    tpu.vector_store %arg5[%c0_68, %c0_69, %c96], %116 {strides = array<i32>} : memref<1x8x256xf32, #tpu.memory_space<vmem>>, vector<1x8x16xf32>,
    %117 = vector.extract_strided_slice %88 {offsets = [0, 126], sizes = [8, 16], strides = [1, 1]} : vector<8x288xf32> to vector<8x16xf32>
    %c0_70 = arith.constant 0 : index
    %c0_71 = arith.constant 0 : index
    %c112 = arith.constant 112 : index
    %118 = vector.load %arg5[%c0_70, %c0_71, %c112] : memref<1x8x256xf32, #tpu.memory_space<vmem>>, vector<1x8x16xf32>
    %119 = vector.shape_cast %118 : vector<1x8x16xf32> to vector<8x16xf32>
    %120 = vector.shape_cast %117 : vector<8x16xf32> to vector<1x8x16xf32>
    tpu.vector_store %arg5[%c0_70, %c0_71, %c112], %120 {strides = array<i32>} : memref<1x8x256xf32, #tpu.memory_space<vmem>>, vector<1x8x16xf32>,
    %121 = vector.extract_strided_slice %88 {offsets = [0, 144], sizes = [8, 16], strides = [1, 1]} : vector<8x288xf32> to vector<8x16xf32>
    %c0_72 = arith.constant 0 : index
    %c0_73 = arith.constant 0 : index
    %c128 = arith.constant 128 : index
    %122 = vector.load %arg5[%c0_72, %c0_73, %c128] : memref<1x8x256xf32, #tpu.memory_space<vmem>>, vector<1x8x16xf32>
    %123 = vector.shape_cast %122 : vector<1x8x16xf32> to vector<8x16xf32>
    %124 = vector.shape_cast %121 : vector<8x16xf32> to vector<1x8x16xf32>
    tpu.vector_store %arg5[%c0_72, %c0_73, %c128], %124 {strides = array<i32>} : memref<1x8x256xf32, #tpu.memory_space<vmem>>, vector<1x8x16xf32>,
    %125 = vector.extract_strided_slice %88 {offsets = [0, 162], sizes = [8, 16], strides = [1, 1]} : vector<8x288xf32> to vector<8x16xf32>
    %c0_74 = arith.constant 0 : index
    %c0_75 = arith.constant 0 : index
    %c144 = arith.constant 144 : index
    %126 = vector.load %arg5[%c0_74, %c0_75, %c144] : memref<1x8x256xf32, #tpu.memory_space<vmem>>, vector<1x8x16xf32>
    %127 = vector.shape_cast %126 : vector<1x8x16xf32> to vector<8x16xf32>
    %128 = vector.shape_cast %125 : vector<8x16xf32> to vector<1x8x16xf32>
    tpu.vector_store %arg5[%c0_74, %c0_75, %c144], %128 {strides = array<i32>} : memref<1x8x256xf32, #tpu.memory_space<vmem>>, vector<1x8x16xf32>,
    %129 = vector.extract_strided_slice %88 {offsets = [0, 180], sizes = [8, 16], strides = [1, 1]} : vector<8x288xf32> to vector<8x16xf32>
    %c0_76 = arith.constant 0 : index
    %c0_77 = arith.constant 0 : index
    %c160 = arith.constant 160 : index
    %130 = vector.load %arg5[%c0_76, %c0_77, %c160] : memref<1x8x256xf32, #tpu.memory_space<vmem>>, vector<1x8x16xf32>
    %131 = vector.shape_cast %130 : vector<1x8x16xf32> to vector<8x16xf32>
    %132 = vector.shape_cast %129 : vector<8x16xf32> to vector<1x8x16xf32>
    tpu.vector_store %arg5[%c0_76, %c0_77, %c160], %132 {strides = array<i32>} : memref<1x8x256xf32, #tpu.memory_space<vmem>>, vector<1x8x16xf32>,
    %133 = vector.extract_strided_slice %88 {offsets = [0, 198], sizes = [8, 16], strides = [1, 1]} : vector<8x288xf32> to vector<8x16xf32>
    %c0_78 = arith.constant 0 : index
    %c0_79 = arith.constant 0 : index
    %c176 = arith.constant 176 : index
    %134 = vector.load %arg5[%c0_78, %c0_79, %c176] : memref<1x8x256xf32, #tpu.memory_space<vmem>>, vector<1x8x16xf32>
    %135 = vector.shape_cast %134 : vector<1x8x16xf32> to vector<8x16xf32>
    %136 = vector.shape_cast %133 : vector<8x16xf32> to vector<1x8x16xf32>
    tpu.vector_store %arg5[%c0_78, %c0_79, %c176], %136 {strides = array<i32>} : memref<1x8x256xf32, #tpu.memory_space<vmem>>, vector<1x8x16xf32>,
    %137 = vector.extract_strided_slice %88 {offsets = [0, 216], sizes = [8, 16], strides = [1, 1]} : vector<8x288xf32> to vector<8x16xf32>
    %c0_80 = arith.constant 0 : index
    %c0_81 = arith.constant 0 : index
    %c192 = arith.constant 192 : index
    %138 = vector.load %arg5[%c0_80, %c0_81, %c192] : memref<1x8x256xf32, #tpu.memory_space<vmem>>, vector<1x8x16xf32>
    %139 = vector.shape_cast %138 : vector<1x8x16xf32> to vector<8x16xf32>
    %140 = vector.shape_cast %137 : vector<8x16xf32> to vector<1x8x16xf32>
    tpu.vector_store %arg5[%c0_80, %c0_81, %c192], %140 {strides = array<i32>} : memref<1x8x256xf32, #tpu.memory_space<vmem>>, vector<1x8x16xf32>,
    %141 = vector.extract_strided_slice %88 {offsets = [0, 234], sizes = [8, 16], strides = [1, 1]} : vector<8x288xf32> to vector<8x16xf32>
    %c0_82 = arith.constant 0 : index
    %c0_83 = arith.constant 0 : index
    %c208 = arith.constant 208 : index
    %142 = vector.load %arg5[%c0_82, %c0_83, %c208] : memref<1x8x256xf32, #tpu.memory_space<vmem>>, vector<1x8x16xf32>
    %143 = vector.shape_cast %142 : vector<1x8x16xf32> to vector<8x16xf32>
    %144 = vector.shape_cast %141 : vector<8x16xf32> to vector<1x8x16xf32>
    tpu.vector_store %arg5[%c0_82, %c0_83, %c208], %144 {strides = array<i32>} : memref<1x8x256xf32, #tpu.memory_space<vmem>>, vector<1x8x16xf32>,
    %145 = vector.extract_strided_slice %88 {offsets = [0, 252], sizes = [8, 16], strides = [1, 1]} : vector<8x288xf32> to vector<8x16xf32>
    %c0_84 = arith.constant 0 : index
    %c0_85 = arith.constant 0 : index
    %c224 = arith.constant 224 : index
    %146 = vector.load %arg5[%c0_84, %c0_85, %c224] : memref<1x8x256xf32, #tpu.memory_space<vmem>>, vector<1x8x16xf32>
    %147 = vector.shape_cast %146 : vector<1x8x16xf32> to vector<8x16xf32>
    %148 = vector.shape_cast %145 : vector<8x16xf32> to vector<1x8x16xf32>
    tpu.vector_store %arg5[%c0_84, %c0_85, %c224], %148 {strides = array<i32>} : memref<1x8x256xf32, #tpu.memory_space<vmem>>, vector<1x8x16xf32>,
    %149 = vector.extract_strided_slice %88 {offsets = [0, 270], sizes = [8, 16], strides = [1, 1]} : vector<8x288xf32> to vector<8x16xf32>
    %c0_86 = arith.constant 0 : index
    %c0_87 = arith.constant 0 : index
    %c240 = arith.constant 240 : index
    %150 = vector.load %arg5[%c0_86, %c0_87, %c240] : memref<1x8x256xf32, #tpu.memory_space<vmem>>, vector<1x8x16xf32>
    %151 = vector.shape_cast %150 : vector<1x8x16xf32> to vector<8x16xf32>
    %152 = vector.shape_cast %149 : vector<8x16xf32> to vector<1x8x16xf32>
    tpu.vector_store %arg5[%c0_86, %c0_87, %c240], %152 {strides = array<i32>} : memref<1x8x256xf32, #tpu.memory_space<vmem>>, vector<1x8x16xf32>,
    return
  }
  func.func @transform_0(%arg0: i32) -> (i32, i32, i32) {
    %c0_i32 = arith.constant 0 : i32
    %c0_i32_0 = arith.constant 0 : i32
    %c0_i32_1 = arith.constant 0 : i32
    return %arg0, %c0_i32, %c0_i32_0 : i32, i32, i32
  }
  func.func @transform_1(%arg0: i32) -> (i32, i32, i32) {
    %c0_i32 = arith.constant 0 : i32
    %c0_i32_0 = arith.constant 0 : i32
    %c0_i32_1 = arith.constant 0 : i32
    %c0_i32_2 = arith.constant 0 : i32
    return %c0_i32, %c0_i32_0, %c0_i32_1 : i32, i32, i32
  }
  func.func @transform_2(%arg0: i32) -> (i32, i32) {
    %c0_i32 = arith.constant 0 : i32
    %c0_i32_0 = arith.constant 0 : i32
    %c0_i32_1 = arith.constant 0 : i32
    return %c0_i32, %c0_i32_0 : i32, i32
  }
  func.func @transform_3(%arg0: i32) -> (i32, i32) {
    %c0_i32 = arith.constant 0 : i32
    %c0_i32_0 = arith.constant 0 : i32
    %c0_i32_1 = arith.constant 0 : i32
    return %c0_i32, %c0_i32_0 : i32, i32
  }
  func.func @transform_4(%arg0: i32) -> (i32, i32, i32) {
    %c0_i32 = arith.constant 0 : i32
    %c0_i32_0 = arith.constant 0 : i32
    %c0_i32_1 = arith.constant 0 : i32
    return %arg0, %c0_i32, %c0_i32_0 : i32, i32, i32
  }
}

</mosaic_0001>

<llo_original>
// kernel: mul.21
$region0: #{mul.21}
  #allocation0 [shape = 's32[1]{0}', space=sflag, size = 0x4, scoped, tag = 'scoped memory for mul.21']
  %s0 = inlined_call_operand.vmem [shape: f32[8,1], index: 0, kind: input, shape index: {}]
  %s1 = inlined_call_operand.vmem [shape: f32[8,1], index: 1, kind: input, shape index: {}]
  %s2 = inlined_call_operand.vmem [shape: f32[8,1], index: 2, kind: output, shape index: {}]
  %v3 = vld [vmem:[%s0] sm:$0xff]
  %v4 = vld [vmem:[%s1] sm:$0xff]
  %5 = xla_tuple %v3, %v4
  %6 = xla_tuple %5
  %v7 = vmul.f32 %v3, %v4
  %8 = xla_tuple %v7
  %9 = vst [vmem:[%s2] sm:$0xff] %v7

// kernel: conv_bn2d.2
$region0: #{conv_bn2d.2}
  #allocation0 [shape = 'u32[]', space=smem, size = 0x4, offset = 0x4, fixed_abs, tag = 'smem constant byte address 0x4 - core index']
  #allocation1 [shape = 'u32[144,128]{1,0:T(1,128)}', space=vmem, size = 0x12000, scoped, tag = 'internal scratch']
  #allocation2 [shape = 'f32[4,326]{1,0:T(4,128)}', space=vmem, size = 0x1800, scoped, tag = 'scratch operand']
  %s0 = inlined_call_operand.vmem [shape: f32[2,4,256], index: 0, kind: input, shape index: {}]
  %s1 = inlined_call_operand.vmem [shape: f32[9,8,4], index: 1, kind: input, shape index: {}]
  %s2 = inlined_call_operand.vmem [shape: f32[2,8,1], index: 2, kind: output, shape index: {0}]
  %s3 = inlined_call_operand.vmem [shape: f32[2,8,1], index: 3, kind: output, shape index: {1}]
  %4 = xla_tuple %s2, %s3
  %s5 = sld [smem:[#allocation0]]
  $region49: #{conv_bn2d.2} parent=0
    _
  %s7 = ssub.s32 1, %s5
  %s8 = scalar_select 0, %s7, %s5
  loop: start=0, step=1, limit=4
  $region2: #{conv_bn2d.2} parent=0 // loop_pre_header
    _
  $region3: #{conv_bn2d.2} parent=0 // loop_header
    %s10 = sphi 0, %s14
    %p11 = scmp.ge.s32.totalorder %s10, 4
    %s20 = sphi 0, %s22
    %s23 = sphi 0, %s20
    %s24 = sphi 0, %s23
    %s40 = sphi 0, %s24
    %s44 = sphi 0, %s44
    %s46 = sphi 0, %s44
    %s47 = sphi 0, %s46
    %s61 = sphi 0, %s47
    %s67 = sphi 0, %s69
    %s70 = sphi 0, %s67
    %s71 = sphi 0, %s70
    %s87 = sphi 0, %s71
    %s93 = sphi 0, %s95
    %s96 = sphi 0, %s93
    %s97 = sphi 0, %s96
    %s113 = sphi 0, %s97
  $region4: #{conv_bn2d.2} parent=0 // loop_header_branch
    %13 = sbr.rel (%p11) target = $region8
  $region5: #{conv_bn2d.2} parent=0 // loop_body
    %s15 = ssub.s32 %s10, 1
    %s16 = ssub.s32 %s10, 2
    %s17 = sadd.s32 %s10, 1
    %s18 = ssub.s32 %s10, %s17
    %p19 = scmp.eq.s32.totalorder %s18, 0
    %s21 = sadd.s32 %s20, 1
    %s22 = scalar_select %p19, %s20, %s21
    %p25 = pneg %p19
    %p26 = scmp.eq.s32.totalorder %s10, 1
    %p27 = por %p25, %p26
    %p28 = scmp.ne.s32.totalorder %s20, %s23
    %p29 = scmp.eq.s32.totalorder %s10, 0
    %p30 = por %p28, %p29
    %p31 = scmp.ne.s32.totalorder %s20, %s23
    %p32 = scmp.eq.s32.totalorder %s15, 1
    %p33 = por %p31, %p32
    %p34 = scmp.ne.s32.totalorder %s23, %s24
    %p35 = scmp.eq.s32.totalorder %s15, 0
    %p36 = por %p34, %p35
    %p37 = scmp.ne.s32.totalorder %s23, %s24
    %p38 = scmp.eq.s32.totalorder %s16, 1
    %p39 = por %p37, %p38
    %p41 = scmp.ne.s32.totalorder %s24, %s40
    %p42 = scmp.eq.s32.totalorder %s16, 0
    %p43 = por %p41, %p42
    %s45 = sadd.s32 %s44, 1
    %p48 = scmp.eq.s32.totalorder %s10, 1
    %p49 = scmp.ne.s32.totalorder %s44, %s46
    %p50 = scmp.eq.s32.totalorder %s10, 0
    %p51 = por %p49, %p50
    %p52 = scmp.ne.s32.totalorder %s44, %s46
    %p53 = scmp.eq.s32.totalorder %s15, 1
    %p54 = por %p52, %p53
    %p55 = scmp.ne.s32.totalorder %s46, %s47
    %p56 = scmp.eq.s32.totalorder %s15, 0
    %p57 = por %p55, %p56
    %p58 = scmp.ne.s32.totalorder %s46, %s47
    %p59 = scmp.eq.s32.totalorder %s16, 1
    %p60 = por %p58, %p59
    %p62 = scmp.ne.s32.totalorder %s47, %s61
    %p63 = scmp.eq.s32.totalorder %s16, 0
    %p64 = por %p62, %p63
    %s65 = ssub.s32 %s10, %s17
    %p66 = scmp.eq.s32.totalorder %s65, 0
    %s68 = sadd.s32 %s67, 1
    %s69 = scalar_select %p66, %s67, %s68
    %p72 = pneg %p66
    %p73 = scmp.eq.s32.totalorder %s10, 1
    %p74 = por %p72, %p73
    %p75 = scmp.ne.s32.totalorder %s67, %s70
    %p76 = scmp.eq.s32.totalorder %s10, 0
    %p77 = por %p75, %p76
    %p78 = scmp.ne.s32.totalorder %s67, %s70
    %p79 = scmp.eq.s32.totalorder %s15, 1
    %p80 = por %p78, %p79
    %p81 = scmp.ne.s32.totalorder %s70, %s71
    %p82 = scmp.eq.s32.totalorder %s15, 0
    %p83 = por %p81, %p82
    %p84 = scmp.ne.s32.totalorder %s70, %s71
    %p85 = scmp.eq.s32.totalorder %s16, 1
    %p86 = por %p84, %p85
    %p88 = scmp.ne.s32.totalorder %s71, %s87
    %p89 = scmp.eq.s32.totalorder %s16, 0
    %p90 = por %p88, %p89
    %s91 = ssub.s32 %s10, %s17
    %p92 = scmp.eq.s32.totalorder %s91, 0
    %s94 = sadd.s32 %s93, 1
    %s95 = scalar_select %p92, %s93, %s94
    %p98 = pneg %p92
    %p99 = scmp.eq.s32.totalorder %s10, 1
    %p100 = por %p98, %p99
    %p101 = scmp.ne.s32.totalorder %s93, %s96
    %p102 = scmp.eq.s32.totalorder %s10, 0
    %p103 = por %p101, %p102
    %p104 = scmp.ne.s32.totalorder %s93, %s96
    %p105 = scmp.eq.s32.totalorder %s15, 1
    %p106 = por %p104, %p105
    %p107 = scmp.ne.s32.totalorder %s96, %s97
    %p108 = scmp.eq.s32.totalorder %s15, 0
    %p109 = por %p107, %p108
    %p110 = scmp.ne.s32.totalorder %s96, %s97
    %p111 = scmp.eq.s32.totalorder %s16, 1
    %p112 = por %p110, %p111
    %p114 = scmp.ne.s32.totalorder %s97, %s113
    %p115 = scmp.eq.s32.totalorder %s16, 0
    %p116 = por %p114, %p115
    %p117 = scmp.le.s32.totalorder 1, %s10
    %p118 = scmp.lt.s32.totalorder %s10, 3
    %p119 = pnand %p117, %p118
    %p120 = pneg %p119
    // Predicated region
    $region9: #{conv_bn2d.2} parent=5 // pred_check
      _
    $region10: #{conv_bn2d.2} parent=5 // pred_check_branch
      %122 = sbr.rel (%p119) target = $region12
    $region11: #{conv_bn2d.2} parent=5 // pred_region
      %s123 = ssub.s32 %s10, 1
      // Predicated region
      $region13: #{conv_bn2d.2} parent=11 // pred_check
        %p124 = pneg %p57
      $region14: #{conv_bn2d.2} parent=11 // pred_check_branch
        %126 = sbr.rel (%p124) target = $region16
      $region15: #{conv_bn2d.2} parent=11 // pred_region
        _
      $region16: #{conv_bn2d.2} parent=11 // pred_fallthru
        _
    $region12: #{conv_bn2d.2} parent=5 // pred_fallthru
      _
    %p127 = scmp.lt.s32.totalorder %s10, 2
    // Predicated region
    $region17: #{conv_bn2d.2} parent=5 // pred_check
      %p128 = pneg %p127
    $region18: #{conv_bn2d.2} parent=5 // pred_check_branch
      %130 = sbr.rel (%p128) target = $region20
    $region19: #{conv_bn2d.2} parent=5 // pred_region
      // Predicated region
      $region21: #{conv_bn2d.2} parent=19 // pred_check
        %p131 = pneg %p30
      $region22: #{conv_bn2d.2} parent=19 // pred_check_branch
        %133 = sbr.rel (%p131) target = $region24
      $region23: #{conv_bn2d.2} parent=19 // pred_region
        %p134 = scmp.lt.s32.totalorder %s10, 1
        %s135 = scalar_select %p134, %s10, 1
        %s136 = smul.addr %s135, 2
        %s137 = smul.addr %s136, 4
        %s138 = scalar_lea.vmem %s0, %s137
      $region24: #{conv_bn2d.2} parent=19 // pred_fallthru
        _
    $region20: #{conv_bn2d.2} parent=5 // pred_fallthru
      _
    %p139 = scmp.le.s32.totalorder 1, %s10
    %p140 = scmp.lt.s32.totalorder %s10, 3
    %p141 = pnand %p139, %p140
    %p142 = pneg %p141
    // Predicated region
    $region25: #{conv_bn2d.2} parent=5 // pred_check
      _
    $region26: #{conv_bn2d.2} parent=5 // pred_check_branch
      %144 = sbr.rel (%p141) target = $region28
    $region27: #{conv_bn2d.2} parent=5 // pred_region
      %s145 = ssub.s32 %s10, 1
      %p146 = scmp.lt.s32.totalorder %s15, 1
      %s147 = scalar_select %p146, %s15, 1
      %s148 = smul.addr %s147, 2
      %s149 = smul.addr %s148, 4
      %s150 = scalar_lea.vmem %s0, %s149
      %p151 = pneg %p36
      %p152 = pneg %p33
      %p153 = pneg %p57
      %p154 = pneg %p54
      %p155 = pneg %p83
      %p156 = pneg %p80
      %p157 = scmp.lt.s32.totalorder %s15, 1
      %s158 = scalar_select %p157, %s15, 1
      %s159 = smul.addr %s158, 8
      %s160 = scalar_lea.vmem %s2, %s159
      %p161 = pneg %p109
      %p162 = pneg %p106
      %p163 = scmp.lt.s32.totalorder %s15, 1
      %s164 = scalar_select %p163, %s15, 1
      %s165 = smul.addr %s164, 8
      %s166 = scalar_lea.vmem %s3, %s165
      %p167 = scmp.lt.s32.totalorder %s15, 1
      %s168 = scalar_select %p167, %s15, 1
      %s169 = smul.addr %s168, 2
      %s170 = smul.addr %s169, 4
      %s171 = scalar_lea.vmem %s0, %s170
      %p172 = scmp.lt.s32.totalorder %s15, 1
      %s173 = scalar_select %p172, %s15, 1
      %s174 = smul.addr %s173, 8
      %s175 = scalar_lea.vmem %s2, %s174
      %p176 = scmp.lt.s32.totalorder %s15, 1
      %s177 = scalar_select %p176, %s15, 1
      %s178 = smul.addr %s177, 8
      %s179 = scalar_lea.vmem %s3, %s178
      %v180 = vld [vmem:[%s171] sm:$0xff]
      %181 = vst [vmem:[#allocation2] sm:$0xff] 0.0
      %vm182 = vcmask 568320
      %183 = vst.msk [vmem:[#allocation2 + $0x8] sm:$0xf] %vm182, 0.0
      %185 = vrot.lane.b32.xlu0 %v180, 19
      %v186 = vpop.permute.xlu0 %185
      %vm188 = vcmask 281752
      %189 = vst.msk [vmem:[#allocation2] sm:$0xf] %vm188, %v186
      %190 = vrot.lane.b32.xlu0 %v180, 21
      %v191 = vpop.permute.xlu0 %190
      %vm193 = vcmask 429352
      %194 = vst.msk [vmem:[#allocation2] sm:$0xf] %vm193, %v191
      %195 = vrot.lane.b32.xlu0 %v180, 23
      %v196 = vpop.permute.xlu0 %195
      %vm198 = vcmask 576952
      %199 = vst.msk [vmem:[#allocation2] sm:$0xf] %vm198, %v196
      %200 = vrot.lane.b32.xlu0 %v180, 25
      %v201 = vpop.permute.xlu0 %200
      %vm203 = vcmask 724552
      %204 = vst.msk [vmem:[#allocation2] sm:$0xf] %vm203, %v201
      %205 = vrot.lane.b32.xlu0 %v180, 27
      %v206 = vpop.permute.xlu0 %205
      %vm208 = vcmask 872152
      %209 = vst.msk [vmem:[#allocation2] sm:$0xf] %vm208, %v206
      %210 = vrot.lane.b32.xlu0 %v180, 29
      %v211 = vpop.permute.xlu0 %210
      %vm213 = vcmask 1019752
      %214 = vst.msk [vmem:[#allocation2] sm:$0xf] %vm213, %v211
      %215 = vrot.lane.b32.xlu0 %v180, 31
      %v216 = vpop.permute.xlu0 %215
      %v217 = vrot.slane %v216, 4
      %vm218 = vcmask 252928
      %v219 = vsel %vm218, %v217, %v216
      %vm221 = vcmask 1044472
      %vm222 = vcmask 121860
      %vm223 = vmor %vm222, %vm221
      %224 = vst.msk [vmem:[#allocation2] sm:$0xff] %vm223, %v219
      %225 = vrot.lane.b32.xlu0 %v180, 33
      %v226 = vpop.permute.xlu0 %225
      %vm228 = vcmask 265352
      %229 = vst.msk [vmem:[#allocation2 + $0x4] sm:$0xf] %vm228, %v226
      %230 = vrot.lane.b32.xlu0 %v180, 35
      %v231 = vpop.permute.xlu0 %230
      %v232 = vrot.slane %v231, 4
      %vm233 = vcmask 285696
      %v234 = vsel %vm233, %v231, %v232
      %vm236 = vcmask 412952
      %237 = vst.msk [vmem:[#allocation2 + $0x4] sm:$0xf] %vm236, %v234
      %238 = vrot.lane.b32.xlu0 %v180, 37
      %v239 = vpop.permute.xlu0 %238
      %v240 = vrot.slane %v239, 4
      %vm241 = vcmask 302080
      %v242 = vsel %vm241, %v239, %v240
      %vm244 = vcmask 560552
      %245 = vst.msk [vmem:[#allocation2 + $0x4] sm:$0xf] %vm244, %v242
      %246 = vrot.lane.b32.xlu0 %v180, 39
      %v247 = vpop.permute.xlu0 %246
      %v248 = vrot.slane %v247, 4
      %vm249 = vcmask 318464
      %v250 = vsel %vm249, %v247, %v248
      %vm252 = vcmask 708152
      %253 = vst.msk [vmem:[#allocation2 + $0x4] sm:$0xf] %vm252, %v250
      %254 = vrot.lane.b32.xlu0 %v180, 41
      %v255 = vpop.permute.xlu0 %254
      %v256 = vrot.slane %v255, 4
      %vm257 = vcmask 334848
      %v258 = vsel %vm257, %v255, %v256
      %vm260 = vcmask 855752
      %261 = vst.msk [vmem:[#allocation2 + $0x4] sm:$0xf] %vm260, %v258
      %262 = vrot.lane.b32.xlu0 %v180, 43
      %v263 = vpop.permute.xlu0 %262
      %v264 = vrot.slane %v263, 4
      %vm265 = vcmask 351232
      %v266 = vsel %vm265, %v263, %v264
      %vm268 = vcmask 1003352
      %269 = vst.msk [vmem:[#allocation2 + $0x4] sm:$0xf] %vm268, %v266
      %270 = vrot.lane.b32.xlu0 %v180, 45
      %v271 = vpop.permute.xlu0 %270
      %v272 = vrot.slane %v271, 4
      %vm273 = vcmask 367616
      %v274 = vsel %vm273, %v271, %v272
      %vm276 = vcmask 1044456
      %vm277 = vcmask 105476
      %vm278 = vmor %vm277, %vm276
      %279 = vst.msk [vmem:[#allocation2 + $0x4] sm:$0xff] %vm278, %v274
      %280 = vrot.lane.b32.xlu0 %v180, 47
      %v281 = vpop.permute.xlu0 %280
      %v282 = vrot.slane %v281, 4
      %vm284 = vcmask 248952
      %285 = vst.msk [vmem:[#allocation2 + $0x8] sm:$0xf] %vm284, %v282
      %286 = vrot.lane.b32.xlu0 %v180, 49
      %v287 = vpop.permute.xlu0 %286
      %v288 = vrot.slane %v287, 4
      %vm290 = vcmask 396552
      %291 = vst.msk [vmem:[#allocation2 + $0x8] sm:$0xf] %vm290, %v288
      %v292 = vld [vmem:[#allocation2] sm:$0xff]
      %v293 = vld [vmem:[#allocation2 + $0x8] sm:$0xf]
      %v294 = vld [vmem:[%s1] sm:$0xff]
      %s295 = scalar_lea.vmem %s1, 8
      %v296 = vld [vmem:[%s295] sm:$0xff]
      %v299 = vcombine.high %v292, %v292
      %300 = vrot.lane.b32.xlu0 %v292, 127
      %v301 = vpop.permute.xlu0 %300
      %302 = vrot.lane.b32.xlu0 %v299, 127
      %v303 = vpop.permute.xlu0 %302
      %304 = vrot.lane.b32.xlu0 %v293, 127
      %v305 = vpop.permute.xlu0 %304
      %vm306 = vcmask 1039360
      %v307 = vsel %vm306, %v301, %v303
      %v308 = vsel %vm306, %v303, %v305
      %vm309 = vcmask 31744
      %v311 = vsel %vm309, %v296, 0
      %vm313 = vcmask 1043456
      %v314 = vsel %vm313, %v307, 0
      %v316 = vsel %vm313, %v308, 0
      %v318 = vsel %vm313, %v305, 0
      %320 = vmatprep.subr.mxu0 %v316
      %321 = vmatpush1.msra.mxu0 %v314
      %322 = vmatprep.subr.mxu0 0.0
      %323 = vmatpush1.msra.mxu0 0.0
      %324 = vmatprep.subr.mxu0 0.0
      %325 = vmatpush1.msra.mxu0 0.0
      %326 = vmatprep.subr.mxu0 0.0
      %327 = vmatpush1.msra.mxu0 0.0
      %328 = vmatprep.subr.mxu0 0.0
      %329 = vmatpush1.msra.mxu0 0.0
      %330 = vmatprep.subr.mxu0 0.0
      %331 = vmatpush1.msra.mxu0 0.0
      %332 = vmatprep.subr.mxu0 0.0
      %333 = vmatpush1.msra.mxu0 0.0
      %334 = vmatprep.subr.mxu0 0.0
      %335 = vmatpush1.msra.mxu0 0.0
      %336 = vmatprep.subr.mxu0 0.0
      %337 = vmatpush1.msra.mxu0 0.0
      %338 = vmatprep.subr.mxu0 0.0
      %339 = vmatpush1.msra.mxu0 0.0
      %340 = vmatprep.subr.mxu0 0.0
      %341 = vmatpush1.msra.mxu0 0.0
      %342 = vmatprep.subr.mxu0 0.0
      %343 = vmatpush1.msra.mxu0 0.0
      %344 = vmatprep.subr.mxu0 0.0
      %345 = vmatpush1.msra.mxu0 0.0
      %346 = vmatprep.subr.mxu0 0.0
      %347 = vmatpush1.msra.mxu0 0.0
      %348 = vmatprep.subr.mxu0 0.0
      %349 = vmatpush1.msra.mxu0 0.0
      %350 = vmatprep.subr.mxu0 0.0
      %351 = vmatpush1.msra.mxu0 0.0
      %352 = vmatprep.subr.mxu0 0.0
      %353 = vmatpush1.msra.mxu0 0.0
      %354 = vmatprep.subr.mxu0 0.0
      %355 = vmatpush1.msra.mxu0 0.0
      %356 = vmatprep.subr.mxu0 0.0
      %357 = vmatpush1.msra.mxu0 0.0
      %358 = vmatprep.subr.mxu0 0.0
      %359 = vmatpush1.msra.mxu0 0.0
      %360 = vmatprep.subr.mxu0 0.0
      %361 = vmatpush1.msra.mxu0 0.0
      %362 = vmatprep.subr.mxu0 0.0
      %363 = vmatpush1.msra.mxu0 0.0
      %364 = vmatprep.subr.mxu0 0.0
      %365 = vmatpush1.msra.mxu0 0.0
      %366 = vmatprep.subr.mxu0 0.0
      %367 = vmatpush1.msra.mxu0 0.0
      %368 = vmatprep.subr.mxu0 0.0
      %369 = vmatpush1.msra.mxu0 0.0
      %370 = vmatprep.subr.mxu0 0.0
      %371 = vmatpush1.msra.mxu0 0.0
      %372 = vmatprep.subr.mxu0 0.0
      %373 = vmatpush1.msra.mxu0 0.0
      %374 = vmatprep.subr.mxu0 0.0
      %375 = vmatpush1.msra.mxu0 0.0
      %376 = vmatprep.subr.mxu0 0.0
      %377 = vmatpush1.msra.mxu0 0.0
      %378 = vmatprep.subr.mxu0 0.0
      %379 = vmatpush1.msra.mxu0 0.0
      %380 = vmatprep.subr.mxu0 0.0
      %381 = vmatpush1.msra.mxu0 0.0
      %382 = vmatprep.subr.mxu0 0.0
      %383 = vmatpush1.msra.mxu0 0.0
      %384 = vmatprep.mubr.f32.mxu0 0.0
      %385 = vmatmul.mubr.f32.gmra.mrb[0].mxu0 %v311
      %v386 = vpop.f32.mrb[0].mxu0
      %v387 = vadd.f32 0.0, %v386
      %v388 = vpop.f32.mrb[0].mxu0
      %v389 = vadd.f32 0.0, %v388
      %390 = vdwg.mxu0
      %391 = vmatprep.subr.mxu0 0.0
      %392 = vmatpush1.msra.mxu0 %v318
      %393 = vmatprep.subr.mxu0 0.0
      %394 = vmatpush1.msra.mxu0 0.0
      %395 = vmatprep.subr.mxu0 0.0
      %396 = vmatpush1.msra.mxu0 0.0
      %397 = vmatprep.subr.mxu0 0.0
      %398 = vmatpush1.msra.mxu0 0.0
      %399 = vmatprep.subr.mxu0 0.0
      %400 = vmatpush1.msra.mxu0 0.0
      %401 = vmatprep.subr.mxu0 0.0
      %402 = vmatpush1.msra.mxu0 0.0
      %403 = vmatprep.subr.mxu0 0.0
      %404 = vmatpush1.msra.mxu0 0.0
      %405 = vmatprep.subr.mxu0 0.0
      %406 = vmatpush1.msra.mxu0 0.0
      %407 = vmatprep.subr.mxu0 0.0
      %408 = vmatpush1.msra.mxu0 0.0
      %409 = vmatprep.subr.mxu0 0.0
      %410 = vmatpush1.msra.mxu0 0.0
      %411 = vmatprep.subr.mxu0 0.0
      %412 = vmatpush1.msra.mxu0 0.0
      %413 = vmatprep.subr.mxu0 0.0
      %414 = vmatpush1.msra.mxu0 0.0
      %415 = vmatprep.subr.mxu0 0.0
      %416 = vmatpush1.msra.mxu0 0.0
      %417 = vmatprep.subr.mxu0 0.0
      %418 = vmatpush1.msra.mxu0 0.0
      %419 = vmatprep.subr.mxu0 0.0
      %420 = vmatpush1.msra.mxu0 0.0
      %421 = vmatprep.subr.mxu0 0.0
      %422 = vmatpush1.msra.mxu0 0.0
      %423 = vmatprep.subr.mxu0 0.0
      %424 = vmatpush1.msra.mxu0 0.0
      %425 = vmatprep.subr.mxu0 0.0
      %426 = vmatpush1.msra.mxu0 0.0
      %427 = vmatprep.subr.mxu0 0.0
      %428 = vmatpush1.msra.mxu0 0.0
      %429 = vmatprep.subr.mxu0 0.0
      %430 = vmatpush1.msra.mxu0 0.0
      %431 = vmatprep.subr.mxu0 0.0
      %432 = vmatpush1.msra.mxu0 0.0
      %433 = vmatprep.subr.mxu0 0.0
      %434 = vmatpush1.msra.mxu0 0.0
      %435 = vmatprep.subr.mxu0 0.0
      %436 = vmatpush1.msra.mxu0 0.0
      %437 = vmatprep.subr.mxu0 0.0
      %438 = vmatpush1.msra.mxu0 0.0
      %439 = vmatprep.subr.mxu0 0.0
      %440 = vmatpush1.msra.mxu0 0.0
      %441 = vmatprep.subr.mxu0 0.0
      %442 = vmatpush1.msra.mxu0 0.0
      %443 = vmatprep.subr.mxu0 0.0
      %444 = vmatpush1.msra.mxu0 0.0
      %445 = vmatprep.subr.mxu0 0.0
      %446 = vmatpush1.msra.mxu0 0.0
      %447 = vmatprep.subr.mxu0 0.0
      %448 = vmatpush1.msra.mxu0 0.0
      %449 = vmatprep.subr.mxu0 0.0
      %450 = vmatpush1.msra.mxu0 0.0
      %451 = vmatprep.subr.mxu0 0.0
      %452 = vmatpush1.msra.mxu0 0.0
      %453 = vmatprep.subr.mxu0 0.0
      %454 = vmatpush1.msra.mxu0 0.0
      %455 = vmatprep.mubr.f32.mxu0 0.0
      %456 = vmatmul.mubr.f32.gmra.mrb[0].mxu0 %v311
      %v457 = vpop.f32.mrb[0].mxu0
      %v458 = vadd.f32 0.0, %v457
      %v459 = vpop.f32.mrb[0].mxu0
      %460 = vdwg.mxu0
      %v462 = vsel %vm309, %v294, 0
      %v464 = vsel %vm313, %v292, 0
      %v466 = vsel %vm313, %v299, 0
      %v468 = vsel %vm313, %v293, 0
      %470 = vmatprep.subr.mxu0 %v466
      %471 = vmatpush1.msra.mxu0 %v464
      %472 = vmatprep.subr.mxu0 0.0
      %473 = vmatpush1.msra.mxu0 0.0
      %474 = vmatprep.subr.mxu0 0.0
      %475 = vmatpush1.msra.mxu0 0.0
      %476 = vmatprep.subr.mxu0 0.0
      %477 = vmatpush1.msra.mxu0 0.0
      %478 = vmatprep.subr.mxu0 0.0
      %479 = vmatpush1.msra.mxu0 0.0
      %480 = vmatprep.subr.mxu0 0.0
      %481 = vmatpush1.msra.mxu0 0.0
      %482 = vmatprep.subr.mxu0 0.0
      %483 = vmatpush1.msra.mxu0 0.0
      %484 = vmatprep.subr.mxu0 0.0
      %485 = vmatpush1.msra.mxu0 0.0
      %486 = vmatprep.subr.mxu0 0.0
      %487 = vmatpush1.msra.mxu0 0.0
      %488 = vmatprep.subr.mxu0 0.0
      %489 = vmatpush1.msra.mxu0 0.0
      %490 = vmatprep.subr.mxu0 0.0
      %491 = vmatpush1.msra.mxu0 0.0
      %492 = vmatprep.subr.mxu0 0.0
      %493 = vmatpush1.msra.mxu0 0.0
      %494 = vmatprep.subr.mxu0 0.0
      %495 = vmatpush1.msra.mxu0 0.0
      %496 = vmatprep.subr.mxu0 0.0
      %497 = vmatpush1.msra.mxu0 0.0
      %498 = vmatprep.subr.mxu0 0.0
      %499 = vmatpush1.msra.mxu0 0.0
      %500 = vmatprep.subr.mxu0 0.0
      %501 = vmatpush1.msra.mxu0 0.0
      %502 = vmatprep.subr.mxu0 0.0
      %503 = vmatpush1.msra.mxu0 0.0
      %504 = vmatprep.subr.mxu0 0.0
      %505 = vmatpush1.msra.mxu0 0.0
      %506 = vmatprep.subr.mxu0 0.0
      %507 = vmatpush1.msra.mxu0 0.0
      %508 = vmatprep.subr.mxu0 0.0
      %509 = vmatpush1.msra.mxu0 0.0
      %510 = vmatprep.subr.mxu0 0.0
      %511 = vmatpush1.msra.mxu0 0.0
      %512 = vmatprep.subr.mxu0 0.0
      %513 = vmatpush1.msra.mxu0 0.0
      %514 = vmatprep.subr.mxu0 0.0
      %515 = vmatpush1.msra.mxu0 0.0
      %516 = vmatprep.subr.mxu0 0.0
      %517 = vmatpush1.msra.mxu0 0.0
      %518 = vmatprep.subr.mxu0 0.0
      %519 = vmatpush1.msra.mxu0 0.0
      %520 = vmatprep.subr.mxu0 0.0
      %521 = vmatpush1.msra.mxu0 0.0
      %522 = vmatprep.subr.mxu0 0.0
      %523 = vmatpush1.msra.mxu0 0.0
      %524 = vmatprep.subr.mxu0 0.0
      %525 = vmatpush1.msra.mxu0 0.0
      %526 = vmatprep.subr.mxu0 0.0
      %527 = vmatpush1.msra.mxu0 0.0
      %528 = vmatprep.subr.mxu0 0.0
      %529 = vmatpush1.msra.mxu0 0.0
      %530 = vmatprep.subr.mxu0 0.0
      %531 = vmatpush1.msra.mxu0 0.0
      %532 = vmatprep.subr.mxu0 0.0
      %533 = vmatpush1.msra.mxu0 0.0
      %534 = vmatprep.mubr.f32.mxu0 0.0
      %535 = vmatmul.mubr.f32.gmra.mrb[0].mxu0 %v462
      %v536 = vpop.f32.mrb[0].mxu0
      %v537 = vadd.f32 %v387, %v536
      %v538 = vpop.f32.mrb[0].mxu0
      %v539 = vadd.f32 %v389, %v538
      %540 = vdwg.mxu0
      %541 = vmatprep.subr.mxu0 0.0
      %542 = vmatpush1.msra.mxu0 %v468
      %543 = vmatprep.subr.mxu0 0.0
      %544 = vmatpush1.msra.mxu0 0.0
      %545 = vmatprep.subr.mxu0 0.0
      %546 = vmatpush1.msra.mxu0 0.0
      %547 = vmatprep.subr.mxu0 0.0
      %548 = vmatpush1.msra.mxu0 0.0
      %549 = vmatprep.subr.mxu0 0.0
      %550 = vmatpush1.msra.mxu0 0.0
      %551 = vmatprep.subr.mxu0 0.0
      %552 = vmatpush1.msra.mxu0 0.0
      %553 = vmatprep.subr.mxu0 0.0
      %554 = vmatpush1.msra.mxu0 0.0
      %555 = vmatprep.subr.mxu0 0.0
      %556 = vmatpush1.msra.mxu0 0.0
      %557 = vmatprep.subr.mxu0 0.0
      %558 = vmatpush1.msra.mxu0 0.0
      %559 = vmatprep.subr.mxu0 0.0
      %560 = vmatpush1.msra.mxu0 0.0
      %561 = vmatprep.subr.mxu0 0.0
      %562 = vmatpush1.msra.mxu0 0.0
      %563 = vmatprep.subr.mxu0 0.0
      %564 = vmatpush1.msra.mxu0 0.0
      %565 = vmatprep.subr.mxu0 0.0
      %566 = vmatpush1.msra.mxu0 0.0
      %567 = vmatprep.subr.mxu0 0.0
      %568 = vmatpush1.msra.mxu0 0.0
      %569 = vmatprep.subr.mxu0 0.0
      %570 = vmatpush1.msra.mxu0 0.0
      %571 = vmatprep.subr.mxu0 0.0
      %572 = vmatpush1.msra.mxu0 0.0
      %573 = vmatprep.subr.mxu0 0.0
      %574 = vmatpush1.msra.mxu0 0.0
      %575 = vmatprep.subr.mxu0 0.0
      %576 = vmatpush1.msra.mxu0 0.0
      %577 = vmatprep.subr.mxu0 0.0
      %578 = vmatpush1.msra.mxu0 0.0
      %579 = vmatprep.subr.mxu0 0.0
      %580 = vmatpush1.msra.mxu0 0.0
      %581 = vmatprep.subr.mxu0 0.0
      %582 = vmatpush1.msra.mxu0 0.0
      %583 = vmatprep.subr.mxu0 0.0
      %584 = vmatpush1.msra.mxu0 0.0
      %585 = vmatprep.subr.mxu0 0.0
      %586 = vmatpush1.msra.mxu0 0.0
      %587 = vmatprep.subr.mxu0 0.0
      %588 = vmatpush1.msra.mxu0 0.0
      %589 = vmatprep.subr.mxu0 0.0
      %590 = vmatpush1.msra.mxu0 0.0
      %591 = vmatprep.subr.mxu0 0.0
      %592 = vmatpush1.msra.mxu0 0.0
      %593 = vmatprep.subr.mxu0 0.0
      %594 = vmatpush1.msra.mxu0 0.0
      %595 = vmatprep.subr.mxu0 0.0
      %596 = vmatpush1.msra.mxu0 0.0
      %597 = vmatprep.subr.mxu0 0.0
      %598 = vmatpush1.msra.mxu0 0.0
      %599 = vmatprep.subr.mxu0 0.0
      %600 = vmatpush1.msra.mxu0 0.0
      %601 = vmatprep.subr.mxu0 0.0
      %602 = vmatpush1.msra.mxu0 0.0
      %603 = vmatprep.subr.mxu0 0.0
      %604 = vmatpush1.msra.mxu0 0.0
      %605 = vmatprep.mubr.f32.mxu0 0.0
      %606 = vmatmul.mubr.f32.gmra.mrb[0].mxu0 %v462
      %v607 = vpop.f32.mrb[0].mxu0
      %v608 = vadd.f32 %v458, %v607
      %v609 = vpop.f32.mrb[0].mxu0
      %610 = vdwg.mxu0
      %s611 = scalar_lea.vmem %s1, 16
      %v612 = vld [vmem:[%s611] sm:$0xff]
      %613 = vrot.lane.b32.xlu0 %v292, 126
      %v614 = vpop.permute.xlu0 %613
      %615 = vrot.lane.b32.xlu0 %v299, 126
      %v616 = vpop.permute.xlu0 %615
      %617 = vrot.lane.b32.xlu0 %v293, 126
      %v618 = vpop.permute.xlu0 %617
      %vm619 = vcmask 1031168
      %v620 = vsel %vm619, %v614, %v616
      %v621 = vsel %vm619, %v616, %v618
      %v623 = vsel %vm309, %v612, 0
      %v625 = vsel %vm313, %v620, 0
      %v627 = vsel %vm313, %v621, 0
      %v629 = vsel %vm313, %v618, 0
      %631 = vmatprep.subr.mxu0 %v627
      %632 = vmatpush1.msra.mxu0 %v625
      %633 = vmatprep.subr.mxu0 0.0
      %634 = vmatpush1.msra.mxu0 0.0
      %635 = vmatprep.subr.mxu0 0.0
      %636 = vmatpush1.msra.mxu0 0.0
      %637 = vmatprep.subr.mxu0 0.0
      %638 = vmatpush1.msra.mxu0 0.0
      %639 = vmatprep.subr.mxu0 0.0
      %640 = vmatpush1.msra.mxu0 0.0
      %641 = vmatprep.subr.mxu0 0.0
      %642 = vmatpush1.msra.mxu0 0.0
      %643 = vmatprep.subr.mxu0 0.0
      %644 = vmatpush1.msra.mxu0 0.0
      %645 = vmatprep.subr.mxu0 0.0
      %646 = vmatpush1.msra.mxu0 0.0
      %647 = vmatprep.subr.mxu0 0.0
      %648 = vmatpush1.msra.mxu0 0.0
      %649 = vmatprep.subr.mxu0 0.0
      %650 = vmatpush1.msra.mxu0 0.0
      %651 = vmatprep.subr.mxu0 0.0
      %652 = vmatpush1.msra.mxu0 0.0
      %653 = vmatprep.subr.mxu0 0.0
      %654 = vmatpush1.msra.mxu0 0.0
      %655 = vmatprep.subr.mxu0 0.0
      %656 = vmatpush1.msra.mxu0 0.0
      %657 = vmatprep.subr.mxu0 0.0
      %658 = vmatpush1.msra.mxu0 0.0
      %659 = vmatprep.subr.mxu0 0.0
      %660 = vmatpush1.msra.mxu0 0.0
      %661 = vmatprep.subr.mxu0 0.0
      %662 = vmatpush1.msra.mxu0 0.0
      %663 = vmatprep.subr.mxu0 0.0
      %664 = vmatpush1.msra.mxu0 0.0
      %665 = vmatprep.subr.mxu0 0.0
      %666 = vmatpush1.msra.mxu0 0.0
      %667 = vmatprep.subr.mxu0 0.0
      %668 = vmatpush1.msra.mxu0 0.0
      %669 = vmatprep.subr.mxu0 0.0
      %670 = vmatpush1.msra.mxu0 0.0
      %671 = vmatprep.subr.mxu0 0.0
      %672 = vmatpush1.msra.mxu0 0.0
      %673 = vmatprep.subr.mxu0 0.0
      %674 = vmatpush1.msra.mxu0 0.0
      %675 = vmatprep.subr.mxu0 0.0
      %676 = vmatpush1.msra.mxu0 0.0
      %677 = vmatprep.subr.mxu0 0.0
      %678 = vmatpush1.msra.mxu0 0.0
      %679 = vmatprep.subr.mxu0 0.0
      %680 = vmatpush1.msra.mxu0 0.0
      %681 = vmatprep.subr.mxu0 0.0
      %682 = vmatpush1.msra.mxu0 0.0
      %683 = vmatprep.subr.mxu0 0.0
      %684 = vmatpush1.msra.mxu0 0.0
      %685 = vmatprep.subr.mxu0 0.0
      %686 = vmatpush1.msra.mxu0 0.0
      %687 = vmatprep.subr.mxu0 0.0
      %688 = vmatpush1.msra.mxu0 0.0
      %689 = vmatprep.subr.mxu0 0.0
      %690 = vmatpush1.msra.mxu0 0.0
      %691 = vmatprep.subr.mxu0 0.0
      %692 = vmatpush1.msra.mxu0 0.0
      %693 = vmatprep.subr.mxu0 0.0
      %694 = vmatpush1.msra.mxu0 0.0
      %695 = vmatprep.mubr.f32.mxu0 0.0
      %696 = vmatmul.mubr.f32.gmra.mrb[0].mxu0 %v623
      %v697 = vpop.f32.mrb[0].mxu0
      %v698 = vadd.f32 0.0, %v697
      %v699 = vpop.f32.mrb[0].mxu0
      %v700 = vadd.f32 0.0, %v699
      %701 = vdwg.mxu0
      %702 = vmatprep.subr.mxu0 0.0
      %703 = vmatpush1.msra.mxu0 %v629
      %704 = vmatprep.subr.mxu0 0.0
      %705 = vmatpush1.msra.mxu0 0.0
      %706 = vmatprep.subr.mxu0 0.0
      %707 = vmatpush1.msra.mxu0 0.0
      %708 = vmatprep.subr.mxu0 0.0
      %709 = vmatpush1.msra.mxu0 0.0
      %710 = vmatprep.subr.mxu0 0.0
      %711 = vmatpush1.msra.mxu0 0.0
      %712 = vmatprep.subr.mxu0 0.0
      %713 = vmatpush1.msra.mxu0 0.0
      %714 = vmatprep.subr.mxu0 0.0
      %715 = vmatpush1.msra.mxu0 0.0
      %716 = vmatprep.subr.mxu0 0.0
      %717 = vmatpush1.msra.mxu0 0.0
      %718 = vmatprep.subr.mxu0 0.0
      %719 = vmatpush1.msra.mxu0 0.0
      %720 = vmatprep.subr.mxu0 0.0
      %721 = vmatpush1.msra.mxu0 0.0
      %722 = vmatprep.subr.mxu0 0.0
      %723 = vmatpush1.msra.mxu0 0.0
      %724 = vmatprep.subr.mxu0 0.0
      %725 = vmatpush1.msra.mxu0 0.0
      %726 = vmatprep.subr.mxu0 0.0
      %727 = vmatpush1.msra.mxu0 0.0
      %728 = vmatprep.subr.mxu0 0.0
      %729 = vmatpush1.msra.mxu0 0.0
      %730 = vmatprep.subr.mxu0 0.0
      %731 = vmatpush1.msra.mxu0 0.0
      %732 = vmatprep.subr.mxu0 0.0
      %733 = vmatpush1.msra.mxu0 0.0
      %734 = vmatprep.subr.mxu0 0.0
      %735 = vmatpush1.msra.mxu0 0.0
      %736 = vmatprep.subr.mxu0 0.0
      %737 = vmatpush1.msra.mxu0 0.0
      %738 = vmatprep.subr.mxu0 0.0
      %739 = vmatpush1.msra.mxu0 0.0
      %740 = vmatprep.subr.mxu0 0.0
      %741 = vmatpush1.msra.mxu0 0.0
      %742 = vmatprep.subr.mxu0 0.0
      %743 = vmatpush1.msra.mxu0 0.0
      %744 = vmatprep.subr.mxu0 0.0
      %745 = vmatpush1.msra.mxu0 0.0
      %746 = vmatprep.subr.mxu0 0.0
      %747 = vmatpush1.msra.mxu0 0.0
      %748 = vmatprep.subr.mxu0 0.0
      %749 = vmatpush1.msra.mxu0 0.0
      %750 = vmatprep.subr.mxu0 0.0
      %751 = vmatpush1.msra.mxu0 0.0
      %752 = vmatprep.subr.mxu0 0.0
      %753 = vmatpush1.msra.mxu0 0.0
      %754 = vmatprep.subr.mxu0 0.0
      %755 = vmatpush1.msra.mxu0 0.0
      %756 = vmatprep.subr.mxu0 0.0
      %757 = vmatpush1.msra.mxu0 0.0
      %758 = vmatprep.subr.mxu0 0.0
      %759 = vmatpush1.msra.mxu0 0.0
      %760 = vmatprep.subr.mxu0 0.0
      %761 = vmatpush1.msra.mxu0 0.0
      %762 = vmatprep.subr.mxu0 0.0
      %763 = vmatpush1.msra.mxu0 0.0
      %764 = vmatprep.subr.mxu0 0.0
      %765 = vmatpush1.msra.mxu0 0.0
      %766 = vmatprep.mubr.f32.mxu0 0.0
      %767 = vmatmul.mubr.f32.gmra.mrb[0].mxu0 %v623
      %v768 = vpop.f32.mrb[0].mxu0
      %v769 = vadd.f32 0.0, %v768
      %v770 = vpop.f32.mrb[0].mxu0
      %771 = vdwg.mxu0
      %v772 = vadd.f32 %v537, %v698
      %v773 = vadd.f32 %v539, %v700
      %v774 = vadd.f32 %v608, %v769
      %s775 = scalar_lea.vmem %s1, 24
      %v776 = vld [vmem:[%s775] sm:$0xff]
      %777 = vrot.lane.b32.xlu0 %v292, 110
      %v778 = vpop.permute.xlu0 %777
      %779 = vrot.lane.b32.xlu0 %v299, 110
      %v780 = vpop.permute.xlu0 %779
      %781 = vrot.lane.b32.xlu0 %v293, 110
      %v782 = vpop.permute.xlu0 %781
      %vm783 = vcmask 900096
      %v784 = vsel %vm783, %v778, %v780
      %v785 = vsel %vm783, %v780, %v782
      %v787 = vsel %vm309, %v776, 0
      %v789 = vsel %vm313, %v784, 0
      %v791 = vsel %vm313, %v785, 0
      %v793 = vsel %vm313, %v782, 0
      %795 = vmatprep.subr.mxu0 %v791
      %796 = vmatpush1.msra.mxu0 %v789
      %797 = vmatprep.subr.mxu0 0.0
      %798 = vmatpush1.msra.mxu0 0.0
      %799 = vmatprep.subr.mxu0 0.0
      %800 = vmatpush1.msra.mxu0 0.0
      %801 = vmatprep.subr.mxu0 0.0
      %802 = vmatpush1.msra.mxu0 0.0
      %803 = vmatprep.subr.mxu0 0.0
      %804 = vmatpush1.msra.mxu0 0.0
      %805 = vmatprep.subr.mxu0 0.0
      %806 = vmatpush1.msra.mxu0 0.0
      %807 = vmatprep.subr.mxu0 0.0
      %808 = vmatpush1.msra.mxu0 0.0
      %809 = vmatprep.subr.mxu0 0.0
      %810 = vmatpush1.msra.mxu0 0.0
      %811 = vmatprep.subr.mxu0 0.0
      %812 = vmatpush1.msra.mxu0 0.0
      %813 = vmatprep.subr.mxu0 0.0
      %814 = vmatpush1.msra.mxu0 0.0
      %815 = vmatprep.subr.mxu0 0.0
      %816 = vmatpush1.msra.mxu0 0.0
      %817 = vmatprep.subr.mxu0 0.0
      %818 = vmatpush1.msra.mxu0 0.0
      %819 = vmatprep.subr.mxu0 0.0
      %820 = vmatpush1.msra.mxu0 0.0
      %821 = vmatprep.subr.mxu0 0.0
      %822 = vmatpush1.msra.mxu0 0.0
      %823 = vmatprep.subr.mxu0 0.0
      %824 = vmatpush1.msra.mxu0 0.0
      %825 = vmatprep.subr.mxu0 0.0
      %826 = vmatpush1.msra.mxu0 0.0
      %827 = vmatprep.subr.mxu0 0.0
      %828 = vmatpush1.msra.mxu0 0.0
      %829 = vmatprep.subr.mxu0 0.0
      %830 = vmatpush1.msra.mxu0 0.0
      %831 = vmatprep.subr.mxu0 0.0
      %832 = vmatpush1.msra.mxu0 0.0
      %833 = vmatprep.subr.mxu0 0.0
      %834 = vmatpush1.msra.mxu0 0.0
      %835 = vmatprep.subr.mxu0 0.0
      %836 = vmatpush1.msra.mxu0 0.0
      %837 = vmatprep.subr.mxu0 0.0
      %838 = vmatpush1.msra.mxu0 0.0
      %839 = vmatprep.subr.mxu0 0.0
      %840 = vmatpush1.msra.mxu0 0.0
      %841 = vmatprep.subr.mxu0 0.0
      %842 = vmatpush1.msra.mxu0 0.0
      %843 = vmatprep.subr.mxu0 0.0
      %844 = vmatpush1.msra.mxu0 0.0
      %845 = vmatprep.subr.mxu0 0.0
      %846 = vmatpush1.msra.mxu0 0.0
      %847 = vmatprep.subr.mxu0 0.0
      %848 = vmatpush1.msra.mxu0 0.0
      %849 = vmatprep.subr.mxu0 0.0
      %850 = vmatpush1.msra.mxu0 0.0
      %851 = vmatprep.subr.mxu0 0.0
      %852 = vmatpush1.msra.mxu0 0.0
      %853 = vmatprep.subr.mxu0 0.0
      %854 = vmatpush1.msra.mxu0 0.0
      %855 = vmatprep.subr.mxu0 0.0
      %856 = vmatpush1.msra.mxu0 0.0
      %857 = vmatprep.subr.mxu0 0.0
      %858 = vmatpush1.msra.mxu0 0.0
      %859 = vmatprep.mubr.f32.mxu0 0.0
      %860 = vmatmul.mubr.f32.gmra.mrb[0].mxu0 %v787
      %v861 = vpop.f32.mrb[0].mxu0
      %v862 = vadd.f32 0.0, %v861
      %v863 = vpop.f32.mrb[0].mxu0
      %v864 = vadd.f32 0.0, %v863
      %865 = vdwg.mxu0
      %866 = vmatprep.subr.mxu0 0.0
      %867 = vmatpush1.msra.mxu0 %v793
      %868 = vmatprep.subr.mxu0 0.0
      %869 = vmatpush1.msra.mxu0 0.0
      %870 = vmatprep.subr.mxu0 0.0
      %871 = vmatpush1.msra.mxu0 0.0
      %872 = vmatprep.subr.mxu0 0.0
      %873 = vmatpush1.msra.mxu0 0.0
      %874 = vmatprep.subr.mxu0 0.0
      %875 = vmatpush1.msra.mxu0 0.0
      %876 = vmatprep.subr.mxu0 0.0
      %877 = vmatpush1.msra.mxu0 0.0
      %878 = vmatprep.subr.mxu0 0.0
      %879 = vmatpush1.msra.mxu0 0.0
      %880 = vmatprep.subr.mxu0 0.0
      %881 = vmatpush1.msra.mxu0 0.0
      %882 = vmatprep.subr.mxu0 0.0
      %883 = vmatpush1.msra.mxu0 0.0
      %884 = vmatprep.subr.mxu0 0.0
      %885 = vmatpush1.msra.mxu0 0.0
      %886 = vmatprep.subr.mxu0 0.0
      %887 = vmatpush1.msra.mxu0 0.0
      %888 = vmatprep.subr.mxu0 0.0
      %889 = vmatpush1.msra.mxu0 0.0
      %890 = vmatprep.subr.mxu0 0.0
      %891 = vmatpush1.msra.mxu0 0.0
      %892 = vmatprep.subr.mxu0 0.0
      %893 = vmatpush1.msra.mxu0 0.0
      %894 = vmatprep.subr.mxu0 0.0
      %895 = vmatpush1.msra.mxu0 0.0
      %896 = vmatprep.subr.mxu0 0.0
      %897 = vmatpush1.msra.mxu0 0.0
      %898 = vmatprep.subr.mxu0 0.0
      %899 = vmatpush1.msra.mxu0 0.0
      %900 = vmatprep.subr.mxu0 0.0
      %901 = vmatpush1.msra.mxu0 0.0
      %902 = vmatprep.subr.mxu0 0.0
      %903 = vmatpush1.msra.mxu0 0.0
      %904 = vmatprep.subr.mxu0 0.0
      %905 = vmatpush1.msra.mxu0 0.0
      %906 = vmatprep.subr.mxu0 0.0
      %907 = vmatpush1.msra.mxu0 0.0
      %908 = vmatprep.subr.mxu0 0.0
      %909 = vmatpush1.msra.mxu0 0.0
      %910 = vmatprep.subr.mxu0 0.0
      %911 = vmatpush1.msra.mxu0 0.0
      %912 = vmatprep.subr.mxu0 0.0
      %913 = vmatpush1.msra.mxu0 0.0
      %914 = vmatprep.subr.mxu0 0.0
      %915 = vmatpush1.msra.mxu0 0.0
      %916 = vmatprep.subr.mxu0 0.0
      %917 = vmatpush1.msra.mxu0 0.0
      %918 = vmatprep.subr.mxu0 0.0
      %919 = vmatpush1.msra.mxu0 0.0
      %920 = vmatprep.subr.mxu0 0.0
      %921 = vmatpush1.msra.mxu0 0.0
      %922 = vmatprep.subr.mxu0 0.0
      %923 = vmatpush1.msra.mxu0 0.0
      %924 = vmatprep.subr.mxu0 0.0
      %925 = vmatpush1.msra.mxu0 0.0
      %926 = vmatprep.subr.mxu0 0.0
      %927 = vmatpush1.msra.mxu0 0.0
      %928 = vmatprep.subr.mxu0 0.0
      %929 = vmatpush1.msra.mxu0 0.0
      %930 = vmatprep.mubr.f32.mxu0 0.0
      %931 = vmatmul.mubr.f32.gmra.mrb[0].mxu0 %v787
      %v932 = vpop.f32.mrb[0].mxu0
      %v933 = vadd.f32 0.0, %v932
      %v934 = vpop.f32.mrb[0].mxu0
      %935 = vdwg.mxu0
      %v936 = vadd.f32 %v772, %v862
      %v937 = vadd.f32 %v773, %v864
      %v938 = vadd.f32 %v774, %v933
      %s939 = scalar_lea.vmem %s1, 32
      %v940 = vld [vmem:[%s939] sm:$0xff]
      %941 = vrot.lane.b32.xlu0 %v292, 109
      %v942 = vpop.permute.xlu0 %941
      %943 = vrot.lane.b32.xlu0 %v299, 109
      %v944 = vpop.permute.xlu0 %943
      %945 = vrot.lane.b32.xlu0 %v293, 109
      %v946 = vpop.permute.xlu0 %945
      %vm947 = vcmask 891904
      %v948 = vsel %vm947, %v942, %v944
      %v949 = vsel %vm947, %v944, %v946
      %v951 = vsel %vm309, %v940, 0
      %v953 = vsel %vm313, %v948, 0
      %v955 = vsel %vm313, %v949, 0
      %v957 = vsel %vm313, %v946, 0
      %959 = vmatprep.subr.mxu0 %v955
      %960 = vmatpush1.msra.mxu0 %v953
      %961 = vmatprep.subr.mxu0 0.0
      %962 = vmatpush1.msra.mxu0 0.0
      %963 = vmatprep.subr.mxu0 0.0
      %964 = vmatpush1.msra.mxu0 0.0
      %965 = vmatprep.subr.mxu0 0.0
      %966 = vmatpush1.msra.mxu0 0.0
      %967 = vmatprep.subr.mxu0 0.0
      %968 = vmatpush1.msra.mxu0 0.0
      %969 = vmatprep.subr.mxu0 0.0
      %970 = vmatpush1.msra.mxu0 0.0
      %971 = vmatprep.subr.mxu0 0.0
      %972 = vmatpush1.msra.mxu0 0.0
      %973 = vmatprep.subr.mxu0 0.0
      %974 = vmatpush1.msra.mxu0 0.0
      %975 = vmatprep.subr.mxu0 0.0
      %976 = vmatpush1.msra.mxu0 0.0
      %977 = vmatprep.subr.mxu0 0.0
      %978 = vmatpush1.msra.mxu0 0.0
      %979 = vmatprep.subr.mxu0 0.0
      %980 = vmatpush1.msra.mxu0 0.0
      %981 = vmatprep.subr.mxu0 0.0
      %982 = vmatpush1.msra.mxu0 0.0
      %983 = vmatprep.subr.mxu0 0.0
      %984 = vmatpush1.msra.mxu0 0.0
      %985 = vmatprep.subr.mxu0 0.0
      %986 = vmatpush1.msra.mxu0 0.0
      %987 = vmatprep.subr.mxu0 0.0
      %988 = vmatpush1.msra.mxu0 0.0
      %989 = vmatprep.subr.mxu0 0.0
      %990 = vmatpush1.msra.mxu0 0.0
      %991 = vmatprep.subr.mxu0 0.0
      %992 = vmatpush1.msra.mxu0 0.0
      %993 = vmatprep.subr.mxu0 0.0
      %994 = vmatpush1.msra.mxu0 0.0
      %995 = vmatprep.subr.mxu0 0.0
      %996 = vmatpush1.msra.mxu0 0.0
      %997 = vmatprep.subr.mxu0 0.0
      %998 = vmatpush1.msra.mxu0 0.0
      %999 = vmatprep.subr.mxu0 0.0
      %1000 = vmatpush1.msra.mxu0 0.0
      %1001 = vmatprep.subr.mxu0 0.0
      %1002 = vmatpush1.msra.mxu0 0.0
      %1003 = vmatprep.subr.mxu0 0.0
      %1004 = vmatpush1.msra.mxu0 0.0
      %1005 = vmatprep.subr.mxu0 0.0
      %1006 = vmatpush1.msra.mxu0 0.0
      %1007 = vmatprep.subr.mxu0 0.0
      %1008 = vmatpush1.msra.mxu0 0.0
      %1009 = vmatprep.subr.mxu0 0.0
      %1010 = vmatpush1.msra.mxu0 0.0
      %1011 = vmatprep.subr.mxu0 0.0
      %1012 = vmatpush1.msra.mxu0 0.0
      %1013 = vmatprep.subr.mxu0 0.0
      %1014 = vmatpush1.msra.mxu0 0.0
      %1015 = vmatprep.subr.mxu0 0.0
      %1016 = vmatpush1.msra.mxu0 0.0
      %1017 = vmatprep.subr.mxu0 0.0
      %1018 = vmatpush1.msra.mxu0 0.0
      %1019 = vmatprep.subr.mxu0 0.0
      %1020 = vmatpush1.msra.mxu0 0.0
      %1021 = vmatprep.subr.mxu0 0.0
      %1022 = vmatpush1.msra.mxu0 0.0
      %1023 = vmatprep.mubr.f32.mxu0 0.0
      %1024 = vmatmul.mubr.f32.gmra.mrb[0].mxu0 %v951
      %v1025 = vpop.f32.mrb[0].mxu0
      %v1026 = vadd.f32 0.0, %v1025
      %v1027 = vpop.f32.mrb[0].mxu0
      %v1028 = vadd.f32 0.0, %v1027
      %1029 = vdwg.mxu0
      %1030 = vmatprep.subr.mxu0 0.0
      %1031 = vmatpush1.msra.mxu0 %v957
      %1032 = vmatprep.subr.mxu0 0.0
      %1033 = vmatpush1.msra.mxu0 0.0
      %1034 = vmatprep.subr.mxu0 0.0
      %1035 = vmatpush1.msra.mxu0 0.0
      %1036 = vmatprep.subr.mxu0 0.0
      %1037 = vmatpush1.msra.mxu0 0.0
      %1038 = vmatprep.subr.mxu0 0.0
      %1039 = vmatpush1.msra.mxu0 0.0
      %1040 = vmatprep.subr.mxu0 0.0
      %1041 = vmatpush1.msra.mxu0 0.0
      %1042 = vmatprep.subr.mxu0 0.0
      %1043 = vmatpush1.msra.mxu0 0.0
      %1044 = vmatprep.subr.mxu0 0.0
      %1045 = vmatpush1.msra.mxu0 0.0
      %1046 = vmatprep.subr.mxu0 0.0
      %1047 = vmatpush1.msra.mxu0 0.0
      %1048 = vmatprep.subr.mxu0 0.0
      %1049 = vmatpush1.msra.mxu0 0.0
      %1050 = vmatprep.subr.mxu0 0.0
      %1051 = vmatpush1.msra.mxu0 0.0
      %1052 = vmatprep.subr.mxu0 0.0
      %1053 = vmatpush1.msra.mxu0 0.0
      %1054 = vmatprep.subr.mxu0 0.0
      %1055 = vmatpush1.msra.mxu0 0.0
      %1056 = vmatprep.subr.mxu0 0.0
      %1057 = vmatpush1.msra.mxu0 0.0
      %1058 = vmatprep.subr.mxu0 0.0
      %1059 = vmatpush1.msra.mxu0 0.0
      %1060 = vmatprep.subr.mxu0 0.0
      %1061 = vmatpush1.msra.mxu0 0.0
      %1062 = vmatprep.subr.mxu0 0.0
      %1063 = vmatpush1.msra.mxu0 0.0
      %1064 = vmatprep.subr.mxu0 0.0
      %1065 = vmatpush1.msra.mxu0 0.0
      %1066 = vmatprep.subr.mxu0 0.0
      %1067 = vmatpush1.msra.mxu0 0.0
      %1068 = vmatprep.subr.mxu0 0.0
      %1069 = vmatpush1.msra.mxu0 0.0
      %1070 = vmatprep.subr.mxu0 0.0
      %1071 = vmatpush1.msra.mxu0 0.0
      %1072 = vmatprep.subr.mxu0 0.0
      %1073 = vmatpush1.msra.mxu0 0.0
      %1074 = vmatprep.subr.mxu0 0.0
      %1075 = vmatpush1.msra.mxu0 0.0
      %1076 = vmatprep.subr.mxu0 0.0
      %1077 = vmatpush1.msra.mxu0 0.0
      %1078 = vmatprep.subr.mxu0 0.0
      %1079 = vmatpush1.msra.mxu0 0.0
      %1080 = vmatprep.subr.mxu0 0.0
      %1081 = vmatpush1.msra.mxu0 0.0
      %1082 = vmatprep.subr.mxu0 0.0
      %1083 = vmatpush1.msra.mxu0 0.0
      %1084 = vmatprep.subr.mxu0 0.0
      %1085 = vmatpush1.msra.mxu0 0.0
      %1086 = vmatprep.subr.mxu0 0.0
      %1087 = vmatpush1.msra.mxu0 0.0
      %1088 = vmatprep.subr.mxu0 0.0
      %1089 = vmatpush1.msra.mxu0 0.0
      %1090 = vmatprep.subr.mxu0 0.0
      %1091 = vmatpush1.msra.mxu0 0.0
      %1092 = vmatprep.subr.mxu0 0.0
      %1093 = vmatpush1.msra.mxu0 0.0
      %1094 = vmatprep.mubr.f32.mxu0 0.0
      %1095 = vmatmul.mubr.f32.gmra.mrb[0].mxu0 %v951
      %v1096 = vpop.f32.mrb[0].mxu0
      %v1097 = vadd.f32 0.0, %v1096
      %v1098 = vpop.f32.mrb[0].mxu0
      %1099 = vdwg.mxu0
      %v1100 = vadd.f32 %v936, %v1026
      %v1101 = vadd.f32 %v937, %v1028
      %v1102 = vadd.f32 %v938, %v1097
      %s1103 = scalar_lea.vmem %s1, 40
      %v1104 = vld [vmem:[%s1103] sm:$0xff]
      %1105 = vrot.lane.b32.xlu0 %v292, 108
      %v1106 = vpop.permute.xlu0 %1105
      %1107 = vrot.lane.b32.xlu0 %v299, 108
      %v1108 = vpop.permute.xlu0 %1107
      %1109 = vrot.lane.b32.xlu0 %v293, 108
      %v1110 = vpop.permute.xlu0 %1109
      %vm1111 = vcmask 883712
      %v1112 = vsel %vm1111, %v1106, %v1108
      %v1113 = vsel %vm1111, %v1108, %v1110
      %v1115 = vsel %vm309, %v1104, 0
      %v1117 = vsel %vm313, %v1112, 0
      %v1119 = vsel %vm313, %v1113, 0
      %v1121 = vsel %vm313, %v1110, 0
      %1123 = vmatprep.subr.mxu0 %v1119
      %1124 = vmatpush1.msra.mxu0 %v1117
      %1125 = vmatprep.subr.mxu0 0.0
      %1126 = vmatpush1.msra.mxu0 0.0
      %1127 = vmatprep.subr.mxu0 0.0
      %1128 = vmatpush1.msra.mxu0 0.0
      %1129 = vmatprep.subr.mxu0 0.0
      %1130 = vmatpush1.msra.mxu0 0.0
      %1131 = vmatprep.subr.mxu0 0.0
      %1132 = vmatpush1.msra.mxu0 0.0
      %1133 = vmatprep.subr.mxu0 0.0
      %1134 = vmatpush1.msra.mxu0 0.0
      %1135 = vmatprep.subr.mxu0 0.0
      %1136 = vmatpush1.msra.mxu0 0.0
      %1137 = vmatprep.subr.mxu0 0.0
      %1138 = vmatpush1.msra.mxu0 0.0
      %1139 = vmatprep.subr.mxu0 0.0
      %1140 = vmatpush1.msra.mxu0 0.0
      %1141 = vmatprep.subr.mxu0 0.0
      %1142 = vmatpush1.msra.mxu0 0.0
      %1143 = vmatprep.subr.mxu0 0.0
      %1144 = vmatpush1.msra.mxu0 0.0
      %1145 = vmatprep.subr.mxu0 0.0
      %1146 = vmatpush1.msra.mxu0 0.0
      %1147 = vmatprep.subr.mxu0 0.0
      %1148 = vmatpush1.msra.mxu0 0.0
      %1149 = vmatprep.subr.mxu0 0.0
      %1150 = vmatpush1.msra.mxu0 0.0
      %1151 = vmatprep.subr.mxu0 0.0
      %1152 = vmatpush1.msra.mxu0 0.0
      %1153 = vmatprep.subr.mxu0 0.0
      %1154 = vmatpush1.msra.mxu0 0.0
      %1155 = vmatprep.subr.mxu0 0.0
      %1156 = vmatpush1.msra.mxu0 0.0
      %1157 = vmatprep.subr.mxu0 0.0
      %1158 = vmatpush1.msra.mxu0 0.0
      %1159 = vmatprep.subr.mxu0 0.0
      %1160 = vmatpush1.msra.mxu0 0.0
      %1161 = vmatprep.subr.mxu0 0.0
      %1162 = vmatpush1.msra.mxu0 0.0
      %1163 = vmatprep.subr.mxu0 0.0
      %1164 = vmatpush1.msra.mxu0 0.0
      %1165 = vmatprep.subr.mxu0 0.0
      %1166 = vmatpush1.msra.mxu0 0.0
      %1167 = vmatprep.subr.mxu0 0.0
      %1168 = vmatpush1.msra.mxu0 0.0
      %1169 = vmatprep.subr.mxu0 0.0
      %1170 = vmatpush1.msra.mxu0 0.0
      %1171 = vmatprep.subr.mxu0 0.0
      %1172 = vmatpush1.msra.mxu0 0.0
      %1173 = vmatprep.subr.mxu0 0.0
      %1174 = vmatpush1.msra.mxu0 0.0
      %1175 = vmatprep.subr.mxu0 0.0
      %1176 = vmatpush1.msra.mxu0 0.0
      %1177 = vmatprep.subr.mxu0 0.0
      %1178 = vmatpush1.msra.mxu0 0.0
      %1179 = vmatprep.subr.mxu0 0.0
      %1180 = vmatpush1.msra.mxu0 0.0
      %1181 = vmatprep.subr.mxu0 0.0
      %1182 = vmatpush1.msra.mxu0 0.0
      %1183 = vmatprep.subr.mxu0 0.0
      %1184 = vmatpush1.msra.mxu0 0.0
      %1185 = vmatprep.subr.mxu0 0.0
      %1186 = vmatpush1.msra.mxu0 0.0
      %1187 = vmatprep.mubr.f32.mxu0 0.0
      %1188 = vmatmul.mubr.f32.gmra.mrb[0].mxu0 %v1115
      %v1189 = vpop.f32.mrb[0].mxu0
      %v1190 = vadd.f32 0.0, %v1189
      %v1191 = vpop.f32.mrb[0].mxu0
      %v1192 = vadd.f32 0.0, %v1191
      %1193 = vdwg.mxu0
      %1194 = vmatprep.subr.mxu0 0.0
      %1195 = vmatpush1.msra.mxu0 %v1121
      %1196 = vmatprep.subr.mxu0 0.0
      %1197 = vmatpush1.msra.mxu0 0.0
      %1198 = vmatprep.subr.mxu0 0.0
      %1199 = vmatpush1.msra.mxu0 0.0
      %1200 = vmatprep.subr.mxu0 0.0
      %1201 = vmatpush1.msra.mxu0 0.0
      %1202 = vmatprep.subr.mxu0 0.0
      %1203 = vmatpush1.msra.mxu0 0.0
      %1204 = vmatprep.subr.mxu0 0.0
      %1205 = vmatpush1.msra.mxu0 0.0
      %1206 = vmatprep.subr.mxu0 0.0
      %1207 = vmatpush1.msra.mxu0 0.0
      %1208 = vmatprep.subr.mxu0 0.0
      %1209 = vmatpush1.msra.mxu0 0.0
      %1210 = vmatprep.subr.mxu0 0.0
      %1211 = vmatpush1.msra.mxu0 0.0
      %1212 = vmatprep.subr.mxu0 0.0
      %1213 = vmatpush1.msra.mxu0 0.0
      %1214 = vmatprep.subr.mxu0 0.0
      %1215 = vmatpush1.msra.mxu0 0.0
      %1216 = vmatprep.subr.mxu0 0.0
      %1217 = vmatpush1.msra.mxu0 0.0
      %1218 = vmatprep.subr.mxu0 0.0
      %1219 = vmatpush1.msra.mxu0 0.0
      %1220 = vmatprep.subr.mxu0 0.0
      %1221 = vmatpush1.msra.mxu0 0.0
      %1222 = vmatprep.subr.mxu0 0.0
      %1223 = vmatpush1.msra.mxu0 0.0
      %1224 = vmatprep.subr.mxu0 0.0
      %1225 = vmatpush1.msra.mxu0 0.0
      %1226 = vmatprep.subr.mxu0 0.0
      %1227 = vmatpush1.msra.mxu0 0.0
      %1228 = vmatprep.subr.mxu0 0.0
      %1229 = vmatpush1.msra.mxu0 0.0
      %1230 = vmatprep.subr.mxu0 0.0
      %1231 = vmatpush1.msra.mxu0 0.0
      %1232 = vmatprep.subr.mxu0 0.0
      %1233 = vmatpush1.msra.mxu0 0.0
      %1234 = vmatprep.subr.mxu0 0.0
      %1235 = vmatpush1.msra.mxu0 0.0
      %1236 = vmatprep.subr.mxu0 0.0
      %1237 = vmatpush1.msra.mxu0 0.0
      %1238 = vmatprep.subr.mxu0 0.0
      %1239 = vmatpush1.msra.mxu0 0.0
      %1240 = vmatprep.subr.mxu0 0.0
      %1241 = vmatpush1.msra.mxu0 0.0
      %1242 = vmatprep.subr.mxu0 0.0
      %1243 = vmatpush1.msra.mxu0 0.0
      %1244 = vmatprep.subr.mxu0 0.0
      %1245 = vmatpush1.msra.mxu0 0.0
      %1246 = vmatprep.subr.mxu0 0.0
      %1247 = vmatpush1.msra.mxu0 0.0
      %1248 = vmatprep.subr.mxu0 0.0
      %1249 = vmatpush1.msra.mxu0 0.0
      %1250 = vmatprep.subr.mxu0 0.0
      %1251 = vmatpush1.msra.mxu0 0.0
      %1252 = vmatprep.subr.mxu0 0.0
      %1253 = vmatpush1.msra.mxu0 0.0
      %1254 = vmatprep.subr.mxu0 0.0
      %1255 = vmatpush1.msra.mxu0 0.0
      %1256 = vmatprep.subr.mxu0 0.0
      %1257 = vmatpush1.msra.mxu0 0.0
      %1258 = vmatprep.mubr.f32.mxu0 0.0
      %1259 = vmatmul.mubr.f32.gmra.mrb[0].mxu0 %v1115
      %v1260 = vpop.f32.mrb[0].mxu0
      %v1261 = vadd.f32 0.0, %v1260
      %v1262 = vpop.f32.mrb[0].mxu0
      %1263 = vdwg.mxu0
      %v1264 = vadd.f32 %v1100, %v1190
      %v1265 = vadd.f32 %v1101, %v1192
      %v1266 = vadd.f32 %v1102, %v1261
      %s1267 = scalar_lea.vmem %s1, 48
      %v1268 = vld [vmem:[%s1267] sm:$0xff]
      %1269 = vrot.lane.b32.xlu0 %v292, 92
      %v1270 = vpop.permute.xlu0 %1269
      %1271 = vrot.lane.b32.xlu0 %v299, 92
      %v1272 = vpop.permute.xlu0 %1271
      %1273 = vrot.lane.b32.xlu0 %v293, 92
      %v1274 = vpop.permute.xlu0 %1273
      %vm1275 = vcmask 752640
      %v1276 = vsel %vm1275, %v1270, %v1272
      %v1277 = vsel %vm1275, %v1272, %v1274
      %v1279 = vsel %vm309, %v1268, 0
      %v1281 = vsel %vm313, %v1276, 0
      %v1283 = vsel %vm313, %v1277, 0
      %v1285 = vsel %vm313, %v1274, 0
      %1287 = vmatprep.subr.mxu0 %v1283
      %1288 = vmatpush1.msra.mxu0 %v1281
      %1289 = vmatprep.subr.mxu0 0.0
      %1290 = vmatpush1.msra.mxu0 0.0
      %1291 = vmatprep.subr.mxu0 0.0
      %1292 = vmatpush1.msra.mxu0 0.0
      %1293 = vmatprep.subr.mxu0 0.0
      %1294 = vmatpush1.msra.mxu0 0.0
      %1295 = vmatprep.subr.mxu0 0.0
      %1296 = vmatpush1.msra.mxu0 0.0
      %1297 = vmatprep.subr.mxu0 0.0
      %1298 = vmatpush1.msra.mxu0 0.0
      %1299 = vmatprep.subr.mxu0 0.0
      %1300 = vmatpush1.msra.mxu0 0.0
      %1301 = vmatprep.subr.mxu0 0.0
      %1302 = vmatpush1.msra.mxu0 0.0
      %1303 = vmatprep.subr.mxu0 0.0
      %1304 = vmatpush1.msra.mxu0 0.0
      %1305 = vmatprep.subr.mxu0 0.0
      %1306 = vmatpush1.msra.mxu0 0.0
      %1307 = vmatprep.subr.mxu0 0.0
      %1308 = vmatpush1.msra.mxu0 0.0
      %1309 = vmatprep.subr.mxu0 0.0
      %1310 = vmatpush1.msra.mxu0 0.0
      %1311 = vmatprep.subr.mxu0 0.0
      %1312 = vmatpush1.msra.mxu0 0.0
      %1313 = vmatprep.subr.mxu0 0.0
      %1314 = vmatpush1.msra.mxu0 0.0
      %1315 = vmatprep.subr.mxu0 0.0
      %1316 = vmatpush1.msra.mxu0 0.0
      %1317 = vmatprep.subr.mxu0 0.0
      %1318 = vmatpush1.msra.mxu0 0.0
      %1319 = vmatprep.subr.mxu0 0.0
      %1320 = vmatpush1.msra.mxu0 0.0
      %1321 = vmatprep.subr.mxu0 0.0
      %1322 = vmatpush1.msra.mxu0 0.0
      %1323 = vmatprep.subr.mxu0 0.0
      %1324 = vmatpush1.msra.mxu0 0.0
      %1325 = vmatprep.subr.mxu0 0.0
      %1326 = vmatpush1.msra.mxu0 0.0
      %1327 = vmatprep.subr.mxu0 0.0
      %1328 = vmatpush1.msra.mxu0 0.0
      %1329 = vmatprep.subr.mxu0 0.0
      %1330 = vmatpush1.msra.mxu0 0.0
      %1331 = vmatprep.subr.mxu0 0.0
      %1332 = vmatpush1.msra.mxu0 0.0
      %1333 = vmatprep.subr.mxu0 0.0
      %1334 = vmatpush1.msra.mxu0 0.0
      %1335 = vmatprep.subr.mxu0 0.0
      %1336 = vmatpush1.msra.mxu0 0.0
      %1337 = vmatprep.subr.mxu0 0.0
      %1338 = vmatpush1.msra.mxu0 0.0
      %1339 = vmatprep.subr.mxu0 0.0
      %1340 = vmatpush1.msra.mxu0 0.0
      %1341 = vmatprep.subr.mxu0 0.0
      %1342 = vmatpush1.msra.mxu0 0.0
      %1343 = vmatprep.subr.mxu0 0.0
      %1344 = vmatpush1.msra.mxu0 0.0
      %1345 = vmatprep.subr.mxu0 0.0
      %1346 = vmatpush1.msra.mxu0 0.0
      %1347 = vmatprep.subr.mxu0 0.0
      %1348 = vmatpush1.msra.mxu0 0.0
      %1349 = vmatprep.subr.mxu0 0.0
      %1350 = vmatpush1.msra.mxu0 0.0
      %1351 = vmatprep.mubr.f32.mxu0 0.0
      %1352 = vmatmul.mubr.f32.gmra.mrb[0].mxu0 %v1279
      %v1353 = vpop.f32.mrb[0].mxu0
      %v1354 = vadd.f32 0.0, %v1353
      %v1355 = vpop.f32.mrb[0].mxu0
      %v1356 = vadd.f32 0.0, %v1355
      %1357 = vdwg.mxu0
      %1358 = vmatprep.subr.mxu0 0.0
      %1359 = vmatpush1.msra.mxu0 %v1285
      %1360 = vmatprep.subr.mxu0 0.0
      %1361 = vmatpush1.msra.mxu0 0.0
      %1362 = vmatprep.subr.mxu0 0.0
      %1363 = vmatpush1.msra.mxu0 0.0
      %1364 = vmatprep.subr.mxu0 0.0
      %1365 = vmatpush1.msra.mxu0 0.0
      %1366 = vmatprep.subr.mxu0 0.0
      %1367 = vmatpush1.msra.mxu0 0.0
      %1368 = vmatprep.subr.mxu0 0.0
      %1369 = vmatpush1.msra.mxu0 0.0
      %1370 = vmatprep.subr.mxu0 0.0
      %1371 = vmatpush1.msra.mxu0 0.0
      %1372 = vmatprep.subr.mxu0 0.0
      %1373 = vmatpush1.msra.mxu0 0.0
      %1374 = vmatprep.subr.mxu0 0.0
      %1375 = vmatpush1.msra.mxu0 0.0
      %1376 = vmatprep.subr.mxu0 0.0
      %1377 = vmatpush1.msra.mxu0 0.0
      %1378 = vmatprep.subr.mxu0 0.0
      %1379 = vmatpush1.msra.mxu0 0.0
      %1380 = vmatprep.subr.mxu0 0.0
      %1381 = vmatpush1.msra.mxu0 0.0
      %1382 = vmatprep.subr.mxu0 0.0
      %1383 = vmatpush1.msra.mxu0 0.0
      %1384 = vmatprep.subr.mxu0 0.0
      %1385 = vmatpush1.msra.mxu0 0.0
      %1386 = vmatprep.subr.mxu0 0.0
      %1387 = vmatpush1.msra.mxu0 0.0
      %1388 = vmatprep.subr.mxu0 0.0
      %1389 = vmatpush1.msra.mxu0 0.0
      %1390 = vmatprep.subr.mxu0 0.0
      %1391 = vmatpush1.msra.mxu0 0.0
      %1392 = vmatprep.subr.mxu0 0.0
      %1393 = vmatpush1.msra.mxu0 0.0
      %1394 = vmatprep.subr.mxu0 0.0
      %1395 = vmatpush1.msra.mxu0 0.0
      %1396 = vmatprep.subr.mxu0 0.0
      %1397 = vmatpush1.msra.mxu0 0.0
      %1398 = vmatprep.subr.mxu0 0.0
      %1399 = vmatpush1.msra.mxu0 0.0
      %1400 = vmatprep.subr.mxu0 0.0
      %1401 = vmatpush1.msra.mxu0 0.0
      %1402 = vmatprep.subr.mxu0 0.0
      %1403 = vmatpush1.msra.mxu0 0.0
      %1404 = vmatprep.subr.mxu0 0.0
      %1405 = vmatpush1.msra.mxu0 0.0
      %1406 = vmatprep.subr.mxu0 0.0
      %1407 = vmatpush1.msra.mxu0 0.0
      %1408 = vmatprep.subr.mxu0 0.0
      %1409 = vmatpush1.msra.mxu0 0.0
      %1410 = vmatprep.subr.mxu0 0.0
      %1411 = vmatpush1.msra.mxu0 0.0
      %1412 = vmatprep.subr.mxu0 0.0
      %1413 = vmatpush1.msra.mxu0 0.0
      %1414 = vmatprep.subr.mxu0 0.0
      %1415 = vmatpush1.msra.mxu0 0.0
      %1416 = vmatprep.subr.mxu0 0.0
      %1417 = vmatpush1.msra.mxu0 0.0
      %1418 = vmatprep.subr.mxu0 0.0
      %1419 = vmatpush1.msra.mxu0 0.0
      %1420 = vmatprep.subr.mxu0 0.0
      %1421 = vmatpush1.msra.mxu0 0.0
      %1422 = vmatprep.mubr.f32.mxu0 0.0
      %1423 = vmatmul.mubr.f32.gmra.mrb[0].mxu0 %v1279
      %v1424 = vpop.f32.mrb[0].mxu0
      %v1425 = vadd.f32 0.0, %v1424
      %v1426 = vpop.f32.mrb[0].mxu0
      %1427 = vdwg.mxu0
      %v1428 = vadd.f32 %v1264, %v1354
      %v1429 = vadd.f32 %v1265, %v1356
      %v1430 = vadd.f32 %v1266, %v1425
      %s1431 = scalar_lea.vmem %s1, 56
      %v1432 = vld [vmem:[%s1431] sm:$0xff]
      %1433 = vrot.lane.b32.xlu0 %v292, 91
      %v1434 = vpop.permute.xlu0 %1433
      %1435 = vrot.lane.b32.xlu0 %v299, 91
      %v1436 = vpop.permute.xlu0 %1435
      %1437 = vrot.lane.b32.xlu0 %v293, 91
      %v1438 = vpop.permute.xlu0 %1437
      %vm1439 = vcmask 744448
      %v1440 = vsel %vm1439, %v1434, %v1436
      %v1441 = vsel %vm1439, %v1436, %v1438
      %v1443 = vsel %vm309, %v1432, 0
      %v1445 = vsel %vm313, %v1440, 0
      %v1447 = vsel %vm313, %v1441, 0
      %v1449 = vsel %vm313, %v1438, 0
      %1451 = vmatprep.subr.mxu0 %v1447
      %1452 = vmatpush1.msra.mxu0 %v1445
      %1453 = vmatprep.subr.mxu0 0.0
      %1454 = vmatpush1.msra.mxu0 0.0
      %1455 = vmatprep.subr.mxu0 0.0
      %1456 = vmatpush1.msra.mxu0 0.0
      %1457 = vmatprep.subr.mxu0 0.0
      %1458 = vmatpush1.msra.mxu0 0.0
      %1459 = vmatprep.subr.mxu0 0.0
      %1460 = vmatpush1.msra.mxu0 0.0
      %1461 = vmatprep.subr.mxu0 0.0
      %1462 = vmatpush1.msra.mxu0 0.0
      %1463 = vmatprep.subr.mxu0 0.0
      %1464 = vmatpush1.msra.mxu0 0.0
      %1465 = vmatprep.subr.mxu0 0.0
      %1466 = vmatpush1.msra.mxu0 0.0
      %1467 = vmatprep.subr.mxu0 0.0
      %1468 = vmatpush1.msra.mxu0 0.0
      %1469 = vmatprep.subr.mxu0 0.0
      %1470 = vmatpush1.msra.mxu0 0.0
      %1471 = vmatprep.subr.mxu0 0.0
      %1472 = vmatpush1.msra.mxu0 0.0
      %1473 = vmatprep.subr.mxu0 0.0
      %1474 = vmatpush1.msra.mxu0 0.0
      %1475 = vmatprep.subr.mxu0 0.0
      %1476 = vmatpush1.msra.mxu0 0.0
      %1477 = vmatprep.subr.mxu0 0.0
      %1478 = vmatpush1.msra.mxu0 0.0
      %1479 = vmatprep.subr.mxu0 0.0
      %1480 = vmatpush1.msra.mxu0 0.0
      %1481 = vmatprep.subr.mxu0 0.0
      %1482 = vmatpush1.msra.mxu0 0.0
      %1483 = vmatprep.subr.mxu0 0.0
      %1484 = vmatpush1.msra.mxu0 0.0
      %1485 = vmatprep.subr.mxu0 0.0
      %1486 = vmatpush1.msra.mxu0 0.0
      %1487 = vmatprep.subr.mxu0 0.0
      %1488 = vmatpush1.msra.mxu0 0.0
      %1489 = vmatprep.subr.mxu0 0.0
      %1490 = vmatpush1.msra.mxu0 0.0
      %1491 = vmatprep.subr.mxu0 0.0
      %1492 = vmatpush1.msra.mxu0 0.0
      %1493 = vmatprep.subr.mxu0 0.0
      %1494 = vmatpush1.msra.mxu0 0.0
      %1495 = vmatprep.subr.mxu0 0.0
      %1496 = vmatpush1.msra.mxu0 0.0
      %1497 = vmatprep.subr.mxu0 0.0
      %1498 = vmatpush1.msra.mxu0 0.0
      %1499 = vmatprep.subr.mxu0 0.0
      %1500 = vmatpush1.msra.mxu0 0.0
      %1501 = vmatprep.subr.mxu0 0.0
      %1502 = vmatpush1.msra.mxu0 0.0
      %1503 = vmatprep.subr.mxu0 0.0
      %1504 = vmatpush1.msra.mxu0 0.0
      %1505 = vmatprep.subr.mxu0 0.0
      %1506 = vmatpush1.msra.mxu0 0.0
      %1507 = vmatprep.subr.mxu0 0.0
      %1508 = vmatpush1.msra.mxu0 0.0
      %1509 = vmatprep.subr.mxu0 0.0
      %1510 = vmatpush1.msra.mxu0 0.0
      %1511 = vmatprep.subr.mxu0 0.0
      %1512 = vmatpush1.msra.mxu0 0.0
      %1513 = vmatprep.subr.mxu0 0.0
      %1514 = vmatpush1.msra.mxu0 0.0
      %1515 = vmatprep.mubr.f32.mxu0 0.0
      %1516 = vmatmul.mubr.f32.gmra.mrb[0].mxu0 %v1443
      %v1517 = vpop.f32.mrb[0].mxu0
      %v1518 = vadd.f32 0.0, %v1517
      %v1519 = vpop.f32.mrb[0].mxu0
      %v1520 = vadd.f32 0.0, %v1519
      %1521 = vdwg.mxu0
      %1522 = vmatprep.subr.mxu0 0.0
      %1523 = vmatpush1.msra.mxu0 %v1449
      %1524 = vmatprep.subr.mxu0 0.0
      %1525 = vmatpush1.msra.mxu0 0.0
      %1526 = vmatprep.subr.mxu0 0.0
      %1527 = vmatpush1.msra.mxu0 0.0
      %1528 = vmatprep.subr.mxu0 0.0
      %1529 = vmatpush1.msra.mxu0 0.0
      %1530 = vmatprep.subr.mxu0 0.0
      %1531 = vmatpush1.msra.mxu0 0.0
      %1532 = vmatprep.subr.mxu0 0.0
      %1533 = vmatpush1.msra.mxu0 0.0
      %1534 = vmatprep.subr.mxu0 0.0
      %1535 = vmatpush1.msra.mxu0 0.0
      %1536 = vmatprep.subr.mxu0 0.0
      %1537 = vmatpush1.msra.mxu0 0.0
      %1538 = vmatprep.subr.mxu0 0.0
      %1539 = vmatpush1.msra.mxu0 0.0
      %1540 = vmatprep.subr.mxu0 0.0
      %1541 = vmatpush1.msra.mxu0 0.0
      %1542 = vmatprep.subr.mxu0 0.0
      %1543 = vmatpush1.msra.mxu0 0.0
      %1544 = vmatprep.subr.mxu0 0.0
      %1545 = vmatpush1.msra.mxu0 0.0
      %1546 = vmatprep.subr.mxu0 0.0
      %1547 = vmatpush1.msra.mxu0 0.0
      %1548 = vmatprep.subr.mxu0 0.0
      %1549 = vmatpush1.msra.mxu0 0.0
      %1550 = vmatprep.subr.mxu0 0.0
      %1551 = vmatpush1.msra.mxu0 0.0
      %1552 = vmatprep.subr.mxu0 0.0
      %1553 = vmatpush1.msra.mxu0 0.0
      %1554 = vmatprep.subr.mxu0 0.0
      %1555 = vmatpush1.msra.mxu0 0.0
      %1556 = vmatprep.subr.mxu0 0.0
      %1557 = vmatpush1.msra.mxu0 0.0
      %1558 = vmatprep.subr.mxu0 0.0
      %1559 = vmatpush1.msra.mxu0 0.0
      %1560 = vmatprep.subr.mxu0 0.0
      %1561 = vmatpush1.msra.mxu0 0.0
      %1562 = vmatprep.subr.mxu0 0.0
      %1563 = vmatpush1.msra.mxu0 0.0
      %1564 = vmatprep.subr.mxu0 0.0
      %1565 = vmatpush1.msra.mxu0 0.0
      %1566 = vmatprep.subr.mxu0 0.0
      %1567 = vmatpush1.msra.mxu0 0.0
      %1568 = vmatprep.subr.mxu0 0.0
      %1569 = vmatpush1.msra.mxu0 0.0
      %1570 = vmatprep.subr.mxu0 0.0
      %1571 = vmatpush1.msra.mxu0 0.0
      %1572 = vmatprep.subr.mxu0 0.0
      %1573 = vmatpush1.msra.mxu0 0.0
      %1574 = vmatprep.subr.mxu0 0.0
      %1575 = vmatpush1.msra.mxu0 0.0
      %1576 = vmatprep.subr.mxu0 0.0
      %1577 = vmatpush1.msra.mxu0 0.0
      %1578 = vmatprep.subr.mxu0 0.0
      %1579 = vmatpush1.msra.mxu0 0.0
      %1580 = vmatprep.subr.mxu0 0.0
      %1581 = vmatpush1.msra.mxu0 0.0
      %1582 = vmatprep.subr.mxu0 0.0
      %1583 = vmatpush1.msra.mxu0 0.0
      %1584 = vmatprep.subr.mxu0 0.0
      %1585 = vmatpush1.msra.mxu0 0.0
      %1586 = vmatprep.mubr.f32.mxu0 0.0
      %1587 = vmatmul.mubr.f32.gmra.mrb[0].mxu0 %v1443
      %v1588 = vpop.f32.mrb[0].mxu0
      %v1589 = vadd.f32 0.0, %v1588
      %v1590 = vpop.f32.mrb[0].mxu0
      %1591 = vdwg.mxu0
      %v1592 = vadd.f32 %v1428, %v1518
      %v1593 = vadd.f32 %v1429, %v1520
      %v1594 = vadd.f32 %v1430, %v1589
      %s1595 = scalar_lea.vmem %s1, 64
      %v1596 = vld [vmem:[%s1595] sm:$0xff]
      %1597 = vrot.lane.b32.xlu0 %v292, 90
      %v1598 = vpop.permute.xlu0 %1597
      %1599 = vrot.lane.b32.xlu0 %v299, 90
      %v1600 = vpop.permute.xlu0 %1599
      %1601 = vrot.lane.b32.xlu0 %v293, 90
      %v1602 = vpop.permute.xlu0 %1601
      %vm1603 = vcmask 736256
      %v1604 = vsel %vm1603, %v1598, %v1600
      %v1605 = vsel %vm1603, %v1600, %v1602
      %v1607 = vsel %vm309, %v1596, 0
      %v1609 = vsel %vm313, %v1604, 0
      %v1611 = vsel %vm313, %v1605, 0
      %v1613 = vsel %vm313, %v1602, 0
      %1615 = vmatprep.subr.mxu0 %v1611
      %1616 = vmatpush1.msra.mxu0 %v1609
      %1617 = vmatprep.subr.mxu0 0.0
      %1618 = vmatpush1.msra.mxu0 0.0
      %1619 = vmatprep.subr.mxu0 0.0
      %1620 = vmatpush1.msra.mxu0 0.0
      %1621 = vmatprep.subr.mxu0 0.0
      %1622 = vmatpush1.msra.mxu0 0.0
      %1623 = vmatprep.subr.mxu0 0.0
      %1624 = vmatpush1.msra.mxu0 0.0
      %1625 = vmatprep.subr.mxu0 0.0
      %1626 = vmatpush1.msra.mxu0 0.0
      %1627 = vmatprep.subr.mxu0 0.0
      %1628 = vmatpush1.msra.mxu0 0.0
      %1629 = vmatprep.subr.mxu0 0.0
      %1630 = vmatpush1.msra.mxu0 0.0
      %1631 = vmatprep.subr.mxu0 0.0
      %1632 = vmatpush1.msra.mxu0 0.0
      %1633 = vmatprep.subr.mxu0 0.0
      %1634 = vmatpush1.msra.mxu0 0.0
      %1635 = vmatprep.subr.mxu0 0.0
      %1636 = vmatpush1.msra.mxu0 0.0
      %1637 = vmatprep.subr.mxu0 0.0
      %1638 = vmatpush1.msra.mxu0 0.0
      %1639 = vmatprep.subr.mxu0 0.0
      %1640 = vmatpush1.msra.mxu0 0.0
      %1641 = vmatprep.subr.mxu0 0.0
      %1642 = vmatpush1.msra.mxu0 0.0
      %1643 = vmatprep.subr.mxu0 0.0
      %1644 = vmatpush1.msra.mxu0 0.0
      %1645 = vmatprep.subr.mxu0 0.0
      %1646 = vmatpush1.msra.mxu0 0.0
      %1647 = vmatprep.subr.mxu0 0.0
      %1648 = vmatpush1.msra.mxu0 0.0
      %1649 = vmatprep.subr.mxu0 0.0
      %1650 = vmatpush1.msra.mxu0 0.0
      %1651 = vmatprep.subr.mxu0 0.0
      %1652 = vmatpush1.msra.mxu0 0.0
      %1653 = vmatprep.subr.mxu0 0.0
      %1654 = vmatpush1.msra.mxu0 0.0
      %1655 = vmatprep.subr.mxu0 0.0
      %1656 = vmatpush1.msra.mxu0 0.0
      %1657 = vmatprep.subr.mxu0 0.0
      %1658 = vmatpush1.msra.mxu0 0.0
      %1659 = vmatprep.subr.mxu0 0.0
      %1660 = vmatpush1.msra.mxu0 0.0
      %1661 = vmatprep.subr.mxu0 0.0
      %1662 = vmatpush1.msra.mxu0 0.0
      %1663 = vmatprep.subr.mxu0 0.0
      %1664 = vmatpush1.msra.mxu0 0.0
      %1665 = vmatprep.subr.mxu0 0.0
      %1666 = vmatpush1.msra.mxu0 0.0
      %1667 = vmatprep.subr.mxu0 0.0
      %1668 = vmatpush1.msra.mxu0 0.0
      %1669 = vmatprep.subr.mxu0 0.0
      %1670 = vmatpush1.msra.mxu0 0.0
      %1671 = vmatprep.subr.mxu0 0.0
      %1672 = vmatpush1.msra.mxu0 0.0
      %1673 = vmatprep.subr.mxu0 0.0
      %1674 = vmatpush1.msra.mxu0 0.0
      %1675 = vmatprep.subr.mxu0 0.0
      %1676 = vmatpush1.msra.mxu0 0.0
      %1677 = vmatprep.subr.mxu0 0.0
      %1678 = vmatpush1.msra.mxu0 0.0
      %1679 = vmatprep.mubr.f32.mxu0 0.0
      %1680 = vmatmul.mubr.f32.gmra.mrb[0].mxu0 %v1607
      %v1681 = vpop.f32.mrb[0].mxu0
      %v1682 = vadd.f32 0.0, %v1681
      %v1683 = vpop.f32.mrb[0].mxu0
      %v1684 = vadd.f32 0.0, %v1683
      %1685 = vdwg.mxu0
      %1686 = vmatprep.subr.mxu0 0.0
      %1687 = vmatpush1.msra.mxu0 %v1613
      %1688 = vmatprep.subr.mxu0 0.0
      %1689 = vmatpush1.msra.mxu0 0.0
      %1690 = vmatprep.subr.mxu0 0.0
      %1691 = vmatpush1.msra.mxu0 0.0
      %1692 = vmatprep.subr.mxu0 0.0
      %1693 = vmatpush1.msra.mxu0 0.0
      %1694 = vmatprep.subr.mxu0 0.0
      %1695 = vmatpush1.msra.mxu0 0.0
      %1696 = vmatprep.subr.mxu0 0.0
      %1697 = vmatpush1.msra.mxu0 0.0
      %1698 = vmatprep.subr.mxu0 0.0
      %1699 = vmatpush1.msra.mxu0 0.0
      %1700 = vmatprep.subr.mxu0 0.0
      %1701 = vmatpush1.msra.mxu0 0.0
      %1702 = vmatprep.subr.mxu0 0.0
      %1703 = vmatpush1.msra.mxu0 0.0
      %1704 = vmatprep.subr.mxu0 0.0
      %1705 = vmatpush1.msra.mxu0 0.0
      %1706 = vmatprep.subr.mxu0 0.0
      %1707 = vmatpush1.msra.mxu0 0.0
      %1708 = vmatprep.subr.mxu0 0.0
      %1709 = vmatpush1.msra.mxu0 0.0
      %1710 = vmatprep.subr.mxu0 0.0
      %1711 = vmatpush1.msra.mxu0 0.0
      %1712 = vmatprep.subr.mxu0 0.0
      %1713 = vmatpush1.msra.mxu0 0.0
      %1714 = vmatprep.subr.mxu0 0.0
      %1715 = vmatpush1.msra.mxu0 0.0
      %1716 = vmatprep.subr.mxu0 0.0
      %1717 = vmatpush1.msra.mxu0 0.0
      %1718 = vmatprep.subr.mxu0 0.0
      %1719 = vmatpush1.msra.mxu0 0.0
      %1720 = vmatprep.subr.mxu0 0.0
      %1721 = vmatpush1.msra.mxu0 0.0
      %1722 = vmatprep.subr.mxu0 0.0
      %1723 = vmatpush1.msra.mxu0 0.0
      %1724 = vmatprep.subr.mxu0 0.0
      %1725 = vmatpush1.msra.mxu0 0.0
      %1726 = vmatprep.subr.mxu0 0.0
      %1727 = vmatpush1.msra.mxu0 0.0
      %1728 = vmatprep.subr.mxu0 0.0
      %1729 = vmatpush1.msra.mxu0 0.0
      %1730 = vmatprep.subr.mxu0 0.0
      %1731 = vmatpush1.msra.mxu0 0.0
      %1732 = vmatprep.subr.mxu0 0.0
      %1733 = vmatpush1.msra.mxu0 0.0
      %1734 = vmatprep.subr.mxu0 0.0
      %1735 = vmatpush1.msra.mxu0 0.0
      %1736 = vmatprep.subr.mxu0 0.0
      %1737 = vmatpush1.msra.mxu0 0.0
      %1738 = vmatprep.subr.mxu0 0.0
      %1739 = vmatpush1.msra.mxu0 0.0
      %1740 = vmatprep.subr.mxu0 0.0
      %1741 = vmatpush1.msra.mxu0 0.0
      %1742 = vmatprep.subr.mxu0 0.0
      %1743 = vmatpush1.msra.mxu0 0.0
      %1744 = vmatprep.subr.mxu0 0.0
      %1745 = vmatpush1.msra.mxu0 0.0
      %1746 = vmatprep.subr.mxu0 0.0
      %1747 = vmatpush1.msra.mxu0 0.0
      %1748 = vmatprep.subr.mxu0 0.0
      %1749 = vmatpush1.msra.mxu0 0.0
      %1750 = vmatprep.mubr.f32.mxu0 0.0
      %1751 = vmatmul.mubr.f32.gmra.mrb[0].mxu0 %v1607
      %v1752 = vpop.f32.mrb[0].mxu0
      %v1753 = vadd.f32 0.0, %v1752
      %v1754 = vpop.f32.mrb[0].mxu0
      %1755 = vdwg.mxu0
      %v1756 = vadd.f32 %v1592, %v1682
      %v1757 = vadd.f32 %v1593, %v1684
      %v1758 = vadd.f32 %v1594, %v1753
      %v1759 = vlaneseq
      %v1760 = vand.u32 %v1759, 127
      %v1761 = vadd.s32 %v1760, 128
      %v1762 = vadd.s32 %v1760, 256
      %v1763 = vcvt.s32.f32 %v1760
      %v1764 = vcvt.s32.f32 %v1761
      %v1765 = vcvt.s32.f32 %v1762
      %v1766 = vmul.f32 %v1763, 0.055555556
      %v1767 = vmul.f32 %v1764, 0.055555556
      %v1768 = vmul.f32 %v1765, 0.055555556
      %v1769 = vadd.f32 %v1766, 0.027777778
      %v1770 = vadd.f32 %v1767, 0.027777778
      %v1771 = vadd.f32 %v1768, 0.027777778
      %v1772 = vfloor.f32 %v1769
      %v1773 = vfloor.f32 %v1770
      %v1774 = vfloor.f32 %v1771
      %v1775 = vmul.f32 %v1772, 18.0
      %v1776 = vmul.f32 %v1773, 18.0
      %v1777 = vmul.f32 %v1774, 18.0
      %v1778 = vsub.f32 %v1763, %v1775
      %v1779 = vsub.f32 %v1764, %v1776
      %v1780 = vsub.f32 %v1765, %v1777
      %vm1781 = vcmp.lt.f32.partialorder %v1778, 15.5
      %vm1782 = vcmp.lt.f32.partialorder %v1779, 15.5
      %vm1783 = vcmp.lt.f32.partialorder %v1780, 15.5
      %v1784 = vsel %vm1781, 1, 0
      %v1785 = vsel %vm1782, 1, 0
      %v1786 = vsel %vm1783, 1, 0
      %v1787 = vcvt.s32.f32 %v1784
      %v1788 = vcvt.s32.f32 %v1785
      %v1789 = vcvt.s32.f32 %v1786
      %v1790 = vmul.f32 %v1756, %v1787
      %v1791 = vmul.f32 %v1757, %v1788
      %v1792 = vmul.f32 %v1758, %v1789
      %v1793 = vadd.f32 %v1790, %v1791
      %vm1794 = vcmask 261120
      %v1795 = vsel %vm1794, %v1792, 0.0
      %v1796 = vadd.f32 %v1793, %v1795
      %1797 = vadd.xlane.f32.xlu0 %v1796
      %v1798 = vpop.xlane.xlu0 %1797
      %vm1799 = vcmask 7168
      %1800 = vst.msk [vmem:[%s175] sm:$0xff] %vm1799, %v1798
      %v1801 = vmul.f32 %v1790, %v1756
      %v1802 = vmul.f32 %v1791, %v1757
      %v1803 = vmul.f32 %v1792, %v1758
      %v1804 = vadd.f32 %v1801, %v1802
      %v1805 = vsel %vm1794, %v1803, 0.0
      %v1806 = vadd.f32 %v1804, %v1805
      %1807 = vadd.xlane.f32.xlu0 %v1806
      %v1808 = vpop.xlane.xlu0 %1807
      %1809 = vst.msk [vmem:[%s179] sm:$0xff] %vm1799, %v1808
      %p1810 = scmp.lt.s32.totalorder %s15, 1
      %s1811 = scalar_select %p1810, %s15, 1
      %s1812 = smul.addr %s1811, 8
      %s1813 = scalar_lea.vmem %s2, %s1812
      %p1814 = scmp.lt.s32.totalorder %s15, 1
      %s1815 = scalar_select %p1814, %s15, 1
      %s1816 = smul.addr %s1815, 8
      %s1817 = scalar_lea.vmem %s3, %s1816
      // Predicated region
      $region29: #{conv_bn2d.2} parent=27 // pred_check
        %p1818 = pneg %p80
      $region30: #{conv_bn2d.2} parent=27 // pred_check_branch
        %1820 = sbr.rel (%p1818) target = $region32
      $region31: #{conv_bn2d.2} parent=27 // pred_region
        _
      $region32: #{conv_bn2d.2} parent=27 // pred_fallthru
        _
      // Predicated region
      $region33: #{conv_bn2d.2} parent=27 // pred_check
        %p1821 = pneg %p106
      $region34: #{conv_bn2d.2} parent=27 // pred_check_branch
        %1823 = sbr.rel (%p1821) target = $region36
      $region35: #{conv_bn2d.2} parent=27 // pred_region
        _
      $region36: #{conv_bn2d.2} parent=27 // pred_fallthru
        _
    $region28: #{conv_bn2d.2} parent=5 // pred_fallthru
      _
    %p1824 = scmp.le.s32.totalorder 2, %s10
    // Predicated region
    $region37: #{conv_bn2d.2} parent=5 // pred_check
      %p1825 = pneg %p1824
    $region38: #{conv_bn2d.2} parent=5 // pred_check_branch
      %1827 = sbr.rel (%p1825) target = $region40
    $region39: #{conv_bn2d.2} parent=5 // pred_region
      %s1828 = ssub.s32 %s10, 2
      // Predicated region
      $region41: #{conv_bn2d.2} parent=39 // pred_check
        %p1829 = pneg %p86
      $region42: #{conv_bn2d.2} parent=39 // pred_check_branch
        %1831 = sbr.rel (%p1829) target = $region44
      $region43: #{conv_bn2d.2} parent=39 // pred_region
        %p1832 = scmp.lt.s32.totalorder %s16, 1
        %s1833 = scalar_select %p1832, %s16, 1
        %s1834 = smul.addr %s1833, 8
        %s1835 = scalar_lea.vmem %s2, %s1834
      $region44: #{conv_bn2d.2} parent=39 // pred_fallthru
        _
      // Predicated region
      $region45: #{conv_bn2d.2} parent=39 // pred_check
        %p1836 = pneg %p112
      $region46: #{conv_bn2d.2} parent=39 // pred_check_branch
        %1838 = sbr.rel (%p1836) target = $region48
      $region47: #{conv_bn2d.2} parent=39 // pred_region
        %p1839 = scmp.lt.s32.totalorder %s16, 1
        %s1840 = scalar_select %p1839, %s16, 1
        %s1841 = smul.addr %s1840, 8
        %s1842 = scalar_lea.vmem %s3, %s1841
      $region48: #{conv_bn2d.2} parent=39 // pred_fallthru
        _
    $region40: #{conv_bn2d.2} parent=5 // pred_fallthru
      _
  $region6: #{conv_bn2d.2} parent=0 // loop_footer
    %s14 = sadd.s32 1, %s10
  $region7: #{conv_bn2d.2} parent=0 // loop_footer_branch
    %9 = sbr.rel target = $region3
  $region8: #{conv_bn2d.2} parent=0 // loop_exit
    _

// kernel: conv_bn2d.3
$region0: #{conv_bn2d.3}
  #allocation0 [shape = 'u32[]', space=smem, size = 0x4, offset = 0x4, fixed_abs, tag = 'smem constant byte address 0x4 - core index']
  #allocation1 [shape = 'u32[144,128]{1,0:T(1,128)}', space=vmem, size = 0x12000, scoped, tag = 'internal scratch']
  #allocation2 [shape = 'f32[4,326]{1,0:T(4,128)}', space=vmem, size = 0x1800, scoped, tag = 'scratch operand']
  %s0 = inlined_call_operand.vmem [shape: f32[2,4,256], index: 0, kind: input, shape index: {}]
  %s1 = inlined_call_operand.vmem [shape: f32[9,8,4], index: 1, kind: input, shape index: {}]
  %s2 = inlined_call_operand.vmem [shape: f32[8,1], index: 2, kind: input, shape index: {}]
  %s3 = inlined_call_operand.vmem [shape: f32[8,1], index: 3, kind: input, shape index: {}]
  %s4 = inlined_call_operand.vmem [shape: f32[2,8,256], index: 4, kind: output, shape index: {}]
  %s5 = sld [smem:[#allocation0]]
  $region49: #{conv_bn2d.3} parent=0
    _
  %s7 = ssub.s32 1, %s5
  %s8 = scalar_select 0, %s7, %s5
  loop: start=0, step=1, limit=4
  $region2: #{conv_bn2d.3} parent=0 // loop_pre_header
    _
  $region3: #{conv_bn2d.3} parent=0 // loop_header
    %s10 = sphi 0, %s14
    %p11 = scmp.ge.s32.totalorder %s10, 4
    %s20 = sphi 0, %s22
    %s23 = sphi 0, %s20
    %s24 = sphi 0, %s23
    %s40 = sphi 0, %s24
    %s44 = sphi 0, %s44
    %s46 = sphi 0, %s44
    %s47 = sphi 0, %s46
    %s61 = sphi 0, %s47
    %s65 = sphi 0, %s65
    %s67 = sphi 0, %s65
    %s68 = sphi 0, %s67
    %s82 = sphi 0, %s68
    %s86 = sphi 0, %s86
    %s88 = sphi 0, %s86
    %s89 = sphi 0, %s88
    %s103 = sphi 0, %s89
    %s109 = sphi 0, %s111
    %s112 = sphi 0, %s109
    %s113 = sphi 0, %s112
    %s129 = sphi 0, %s113
  $region4: #{conv_bn2d.3} parent=0 // loop_header_branch
    %13 = sbr.rel (%p11) target = $region8
  $region5: #{conv_bn2d.3} parent=0 // loop_body
    %s15 = ssub.s32 %s10, 1
    %s16 = ssub.s32 %s10, 2
    %s17 = sadd.s32 %s10, 1
    %s18 = ssub.s32 %s10, %s17
    %p19 = scmp.eq.s32.totalorder %s18, 0
    %s21 = sadd.s32 %s20, 1
    %s22 = scalar_select %p19, %s20, %s21
    %p25 = pneg %p19
    %p26 = scmp.eq.s32.totalorder %s10, 1
    %p27 = por %p25, %p26
    %p28 = scmp.ne.s32.totalorder %s20, %s23
    %p29 = scmp.eq.s32.totalorder %s10, 0
    %p30 = por %p28, %p29
    %p31 = scmp.ne.s32.totalorder %s20, %s23
    %p32 = scmp.eq.s32.totalorder %s15, 1
    %p33 = por %p31, %p32
    %p34 = scmp.ne.s32.totalorder %s23, %s24
    %p35 = scmp.eq.s32.totalorder %s15, 0
    %p36 = por %p34, %p35
    %p37 = scmp.ne.s32.totalorder %s23, %s24
    %p38 = scmp.eq.s32.totalorder %s16, 1
    %p39 = por %p37, %p38
    %p41 = scmp.ne.s32.totalorder %s24, %s40
    %p42 = scmp.eq.s32.totalorder %s16, 0
    %p43 = por %p41, %p42
    %s45 = sadd.s32 %s44, 1
    %p48 = scmp.eq.s32.totalorder %s10, 1
    %p49 = scmp.ne.s32.totalorder %s44, %s46
    %p50 = scmp.eq.s32.totalorder %s10, 0
    %p51 = por %p49, %p50
    %p52 = scmp.ne.s32.totalorder %s44, %s46
    %p53 = scmp.eq.s32.totalorder %s15, 1
    %p54 = por %p52, %p53
    %p55 = scmp.ne.s32.totalorder %s46, %s47
    %p56 = scmp.eq.s32.totalorder %s15, 0
    %p57 = por %p55, %p56
    %p58 = scmp.ne.s32.totalorder %s46, %s47
    %p59 = scmp.eq.s32.totalorder %s16, 1
    %p60 = por %p58, %p59
    %p62 = scmp.ne.s32.totalorder %s47, %s61
    %p63 = scmp.eq.s32.totalorder %s16, 0
    %p64 = por %p62, %p63
    %s66 = sadd.s32 %s65, 1
    %p69 = scmp.eq.s32.totalorder %s10, 1
    %p70 = scmp.ne.s32.totalorder %s65, %s67
    %p71 = scmp.eq.s32.totalorder %s10, 0
    %p72 = por %p70, %p71
    %p73 = scmp.ne.s32.totalorder %s65, %s67
    %p74 = scmp.eq.s32.totalorder %s15, 1
    %p75 = por %p73, %p74
    %p76 = scmp.ne.s32.totalorder %s67, %s68
    %p77 = scmp.eq.s32.totalorder %s15, 0
    %p78 = por %p76, %p77
    %p79 = scmp.ne.s32.totalorder %s67, %s68
    %p80 = scmp.eq.s32.totalorder %s16, 1
    %p81 = por %p79, %p80
    %p83 = scmp.ne.s32.totalorder %s68, %s82
    %p84 = scmp.eq.s32.totalorder %s16, 0
    %p85 = por %p83, %p84
    %s87 = sadd.s32 %s86, 1
    %p90 = scmp.eq.s32.totalorder %s10, 1
    %p91 = scmp.ne.s32.totalorder %s86, %s88
    %p92 = scmp.eq.s32.totalorder %s10, 0
    %p93 = por %p91, %p92
    %p94 = scmp.ne.s32.totalorder %s86, %s88
    %p95 = scmp.eq.s32.totalorder %s15, 1
    %p96 = por %p94, %p95
    %p97 = scmp.ne.s32.totalorder %s88, %s89
    %p98 = scmp.eq.s32.totalorder %s15, 0
    %p99 = por %p97, %p98
    %p100 = scmp.ne.s32.totalorder %s88, %s89
    %p101 = scmp.eq.s32.totalorder %s16, 1
    %p102 = por %p100, %p101
    %p104 = scmp.ne.s32.totalorder %s89, %s103
    %p105 = scmp.eq.s32.totalorder %s16, 0
    %p106 = por %p104, %p105
    %s107 = ssub.s32 %s10, %s17
    %p108 = scmp.eq.s32.totalorder %s107, 0
    %s110 = sadd.s32 %s109, 1
    %s111 = scalar_select %p108, %s109, %s110
    %p114 = pneg %p108
    %p115 = scmp.eq.s32.totalorder %s10, 1
    %p116 = por %p114, %p115
    %p117 = scmp.ne.s32.totalorder %s109, %s112
    %p118 = scmp.eq.s32.totalorder %s10, 0
    %p119 = por %p117, %p118
    %p120 = scmp.ne.s32.totalorder %s109, %s112
    %p121 = scmp.eq.s32.totalorder %s15, 1
    %p122 = por %p120, %p121
    %p123 = scmp.ne.s32.totalorder %s112, %s113
    %p124 = scmp.eq.s32.totalorder %s15, 0
    %p125 = por %p123, %p124
    %p126 = scmp.ne.s32.totalorder %s112, %s113
    %p127 = scmp.eq.s32.totalorder %s16, 1
    %p128 = por %p126, %p127
    %p130 = scmp.ne.s32.totalorder %s113, %s129
    %p131 = scmp.eq.s32.totalorder %s16, 0
    %p132 = por %p130, %p131
    %p133 = scmp.le.s32.totalorder 1, %s10
    %p134 = scmp.lt.s32.totalorder %s10, 3
    %p135 = pnand %p133, %p134
    %p136 = pneg %p135
    // Predicated region
    $region9: #{conv_bn2d.3} parent=5 // pred_check
      _
    $region10: #{conv_bn2d.3} parent=5 // pred_check_branch
      %138 = sbr.rel (%p135) target = $region12
    $region11: #{conv_bn2d.3} parent=5 // pred_region
      %s139 = ssub.s32 %s10, 1
      // Predicated region
      $region13: #{conv_bn2d.3} parent=11 // pred_check
        %p140 = pneg %p57
      $region14: #{conv_bn2d.3} parent=11 // pred_check_branch
        %142 = sbr.rel (%p140) target = $region16
      $region15: #{conv_bn2d.3} parent=11 // pred_region
        _
      $region16: #{conv_bn2d.3} parent=11 // pred_fallthru
        _
      // Predicated region
      $region17: #{conv_bn2d.3} parent=11 // pred_check
        %p143 = pneg %p78
      $region18: #{conv_bn2d.3} parent=11 // pred_check_branch
        %145 = sbr.rel (%p143) target = $region20
      $region19: #{conv_bn2d.3} parent=11 // pred_region
        _
      $region20: #{conv_bn2d.3} parent=11 // pred_fallthru
        _
      // Predicated region
      $region21: #{conv_bn2d.3} parent=11 // pred_check
        %p146 = pneg %p99
      $region22: #{conv_bn2d.3} parent=11 // pred_check_branch
        %148 = sbr.rel (%p146) target = $region24
      $region23: #{conv_bn2d.3} parent=11 // pred_region
        _
      $region24: #{conv_bn2d.3} parent=11 // pred_fallthru
        _
    $region12: #{conv_bn2d.3} parent=5 // pred_fallthru
      _
    %p149 = scmp.lt.s32.totalorder %s10, 2
    // Predicated region
    $region25: #{conv_bn2d.3} parent=5 // pred_check
      %p150 = pneg %p149
    $region26: #{conv_bn2d.3} parent=5 // pred_check_branch
      %152 = sbr.rel (%p150) target = $region28
    $region27: #{conv_bn2d.3} parent=5 // pred_region
      // Predicated region
      $region29: #{conv_bn2d.3} parent=27 // pred_check
        %p153 = pneg %p30
      $region30: #{conv_bn2d.3} parent=27 // pred_check_branch
        %155 = sbr.rel (%p153) target = $region32
      $region31: #{conv_bn2d.3} parent=27 // pred_region
        %p156 = scmp.lt.s32.totalorder %s10, 1
        %s157 = scalar_select %p156, %s10, 1
        %s158 = smul.addr %s157, 2
        %s159 = smul.addr %s158, 4
        %s160 = scalar_lea.vmem %s0, %s159
      $region32: #{conv_bn2d.3} parent=27 // pred_fallthru
        _
    $region28: #{conv_bn2d.3} parent=5 // pred_fallthru
      _
    %p161 = scmp.le.s32.totalorder 1, %s10
    %p162 = scmp.lt.s32.totalorder %s10, 3
    %p163 = pnand %p161, %p162
    %p164 = pneg %p163
    // Predicated region
    $region33: #{conv_bn2d.3} parent=5 // pred_check
      _
    $region34: #{conv_bn2d.3} parent=5 // pred_check_branch
      %166 = sbr.rel (%p163) target = $region36
    $region35: #{conv_bn2d.3} parent=5 // pred_region
      %s167 = ssub.s32 %s10, 1
      %p168 = scmp.lt.s32.totalorder %s15, 1
      %s169 = scalar_select %p168, %s15, 1
      %s170 = smul.addr %s169, 2
      %s171 = smul.addr %s170, 4
      %s172 = scalar_lea.vmem %s0, %s171
      %p173 = pneg %p36
      %p174 = pneg %p33
      %p175 = pneg %p57
      %p176 = pneg %p54
      %p177 = pneg %p78
      %p178 = pneg %p75
      %p179 = pneg %p99
      %p180 = pneg %p96
      %p181 = pneg %p125
      %p182 = pneg %p122
      %p183 = scmp.lt.s32.totalorder %s15, 1
      %s184 = scalar_select %p183, %s15, 1
      %s185 = smul.addr %s184, 2
      %s186 = smul.addr %s185, 8
      %s187 = scalar_lea.vmem %s4, %s186
      %p188 = scmp.lt.s32.totalorder %s15, 1
      %s189 = scalar_select %p188, %s15, 1
      %s190 = smul.addr %s189, 2
      %s191 = smul.addr %s190, 4
      %s192 = scalar_lea.vmem %s0, %s191
      %p193 = scmp.lt.s32.totalorder %s15, 1
      %s194 = scalar_select %p193, %s15, 1
      %s195 = smul.addr %s194, 2
      %s196 = smul.addr %s195, 8
      %s197 = scalar_lea.vmem %s4, %s196
      %v198 = vld [vmem:[%s192] sm:$0xff]
      %199 = vst [vmem:[#allocation2] sm:$0xff] 0.0
      %vm200 = vcmask 568320
      %201 = vst.msk [vmem:[#allocation2 + $0x8] sm:$0xf] %vm200, 0.0
      %203 = vrot.lane.b32.xlu0 %v198, 19
      %v204 = vpop.permute.xlu0 %203
      %vm206 = vcmask 281752
      %207 = vst.msk [vmem:[#allocation2] sm:$0xf] %vm206, %v204
      %208 = vrot.lane.b32.xlu0 %v198, 21
      %v209 = vpop.permute.xlu0 %208
      %vm211 = vcmask 429352
      %212 = vst.msk [vmem:[#allocation2] sm:$0xf] %vm211, %v209
      %213 = vrot.lane.b32.xlu0 %v198, 23
      %v214 = vpop.permute.xlu0 %213
      %vm216 = vcmask 576952
      %217 = vst.msk [vmem:[#allocation2] sm:$0xf] %vm216, %v214
      %218 = vrot.lane.b32.xlu0 %v198, 25
      %v219 = vpop.permute.xlu0 %218
      %vm221 = vcmask 724552
      %222 = vst.msk [vmem:[#allocation2] sm:$0xf] %vm221, %v219
      %223 = vrot.lane.b32.xlu0 %v198, 27
      %v224 = vpop.permute.xlu0 %223
      %vm226 = vcmask 872152
      %227 = vst.msk [vmem:[#allocation2] sm:$0xf] %vm226, %v224
      %228 = vrot.lane.b32.xlu0 %v198, 29
      %v229 = vpop.permute.xlu0 %228
      %vm231 = vcmask 1019752
      %232 = vst.msk [vmem:[#allocation2] sm:$0xf] %vm231, %v229
      %233 = vrot.lane.b32.xlu0 %v198, 31
      %v234 = vpop.permute.xlu0 %233
      %v235 = vrot.slane %v234, 4
      %vm236 = vcmask 252928
      %v237 = vsel %vm236, %v235, %v234
      %vm239 = vcmask 1044472
      %vm240 = vcmask 121860
      %vm241 = vmor %vm240, %vm239
      %242 = vst.msk [vmem:[#allocation2] sm:$0xff] %vm241, %v237
      %243 = vrot.lane.b32.xlu0 %v198, 33
      %v244 = vpop.permute.xlu0 %243
      %vm246 = vcmask 265352
      %247 = vst.msk [vmem:[#allocation2 + $0x4] sm:$0xf] %vm246, %v244
      %248 = vrot.lane.b32.xlu0 %v198, 35
      %v249 = vpop.permute.xlu0 %248
      %v250 = vrot.slane %v249, 4
      %vm251 = vcmask 285696
      %v252 = vsel %vm251, %v249, %v250
      %vm254 = vcmask 412952
      %255 = vst.msk [vmem:[#allocation2 + $0x4] sm:$0xf] %vm254, %v252
      %256 = vrot.lane.b32.xlu0 %v198, 37
      %v257 = vpop.permute.xlu0 %256
      %v258 = vrot.slane %v257, 4
      %vm259 = vcmask 302080
      %v260 = vsel %vm259, %v257, %v258
      %vm262 = vcmask 560552
      %263 = vst.msk [vmem:[#allocation2 + $0x4] sm:$0xf] %vm262, %v260
      %264 = vrot.lane.b32.xlu0 %v198, 39
      %v265 = vpop.permute.xlu0 %264
      %v266 = vrot.slane %v265, 4
      %vm267 = vcmask 318464
      %v268 = vsel %vm267, %v265, %v266
      %vm270 = vcmask 708152
      %271 = vst.msk [vmem:[#allocation2 + $0x4] sm:$0xf] %vm270, %v268
      %272 = vrot.lane.b32.xlu0 %v198, 41
      %v273 = vpop.permute.xlu0 %272
      %v274 = vrot.slane %v273, 4
      %vm275 = vcmask 334848
      %v276 = vsel %vm275, %v273, %v274
      %vm278 = vcmask 855752
      %279 = vst.msk [vmem:[#allocation2 + $0x4] sm:$0xf] %vm278, %v276
      %280 = vrot.lane.b32.xlu0 %v198, 43
      %v281 = vpop.permute.xlu0 %280
      %v282 = vrot.slane %v281, 4
      %vm283 = vcmask 351232
      %v284 = vsel %vm283, %v281, %v282
      %vm286 = vcmask 1003352
      %287 = vst.msk [vmem:[#allocation2 + $0x4] sm:$0xf] %vm286, %v284
      %288 = vrot.lane.b32.xlu0 %v198, 45
      %v289 = vpop.permute.xlu0 %288
      %v290 = vrot.slane %v289, 4
      %vm291 = vcmask 367616
      %v292 = vsel %vm291, %v289, %v290
      %vm294 = vcmask 1044456
      %vm295 = vcmask 105476
      %vm296 = vmor %vm295, %vm294
      %297 = vst.msk [vmem:[#allocation2 + $0x4] sm:$0xff] %vm296, %v292
      %298 = vrot.lane.b32.xlu0 %v198, 47
      %v299 = vpop.permute.xlu0 %298
      %v300 = vrot.slane %v299, 4
      %vm302 = vcmask 248952
      %303 = vst.msk [vmem:[#allocation2 + $0x8] sm:$0xf] %vm302, %v300
      %304 = vrot.lane.b32.xlu0 %v198, 49
      %v305 = vpop.permute.xlu0 %304
      %v306 = vrot.slane %v305, 4
      %vm308 = vcmask 396552
      %309 = vst.msk [vmem:[#allocation2 + $0x8] sm:$0xf] %vm308, %v306
      %v310 = vld [vmem:[#allocation2] sm:$0xff]
      %v311 = vld [vmem:[#allocation2 + $0x8] sm:$0xf]
      %v312 = vld [vmem:[%s1] sm:$0xff]
      %s313 = scalar_lea.vmem %s1, 8
      %v314 = vld [vmem:[%s313] sm:$0xff]
      %v317 = vcombine.high %v310, %v310
      %318 = vrot.lane.b32.xlu0 %v310, 127
      %v319 = vpop.permute.xlu0 %318
      %320 = vrot.lane.b32.xlu0 %v317, 127
      %v321 = vpop.permute.xlu0 %320
      %322 = vrot.lane.b32.xlu0 %v311, 127
      %v323 = vpop.permute.xlu0 %322
      %vm324 = vcmask 1039360
      %v325 = vsel %vm324, %v319, %v321
      %v326 = vsel %vm324, %v321, %v323
      %vm327 = vcmask 31744
      %v329 = vsel %vm327, %v314, 0
      %vm331 = vcmask 1043456
      %v332 = vsel %vm331, %v325, 0
      %v334 = vsel %vm331, %v326, 0
      %v336 = vsel %vm331, %v323, 0
      %338 = vmatprep.subr.mxu0 %v334
      %339 = vmatpush1.msra.mxu0 %v332
      %340 = vmatprep.subr.mxu0 0.0
      %341 = vmatpush1.msra.mxu0 0.0
      %342 = vmatprep.subr.mxu0 0.0
      %343 = vmatpush1.msra.mxu0 0.0
      %344 = vmatprep.subr.mxu0 0.0
      %345 = vmatpush1.msra.mxu0 0.0
      %346 = vmatprep.subr.mxu0 0.0
      %347 = vmatpush1.msra.mxu0 0.0
      %348 = vmatprep.subr.mxu0 0.0
      %349 = vmatpush1.msra.mxu0 0.0
      %350 = vmatprep.subr.mxu0 0.0
      %351 = vmatpush1.msra.mxu0 0.0
      %352 = vmatprep.subr.mxu0 0.0
      %353 = vmatpush1.msra.mxu0 0.0
      %354 = vmatprep.subr.mxu0 0.0
      %355 = vmatpush1.msra.mxu0 0.0
      %356 = vmatprep.subr.mxu0 0.0
      %357 = vmatpush1.msra.mxu0 0.0
      %358 = vmatprep.subr.mxu0 0.0
      %359 = vmatpush1.msra.mxu0 0.0
      %360 = vmatprep.subr.mxu0 0.0
      %361 = vmatpush1.msra.mxu0 0.0
      %362 = vmatprep.subr.mxu0 0.0
      %363 = vmatpush1.msra.mxu0 0.0
      %364 = vmatprep.subr.mxu0 0.0
      %365 = vmatpush1.msra.mxu0 0.0
      %366 = vmatprep.subr.mxu0 0.0
      %367 = vmatpush1.msra.mxu0 0.0
      %368 = vmatprep.subr.mxu0 0.0
      %369 = vmatpush1.msra.mxu0 0.0
      %370 = vmatprep.subr.mxu0 0.0
      %371 = vmatpush1.msra.mxu0 0.0
      %372 = vmatprep.subr.mxu0 0.0
      %373 = vmatpush1.msra.mxu0 0.0
      %374 = vmatprep.subr.mxu0 0.0
      %375 = vmatpush1.msra.mxu0 0.0
      %376 = vmatprep.subr.mxu0 0.0
      %377 = vmatpush1.msra.mxu0 0.0
      %378 = vmatprep.subr.mxu0 0.0
      %379 = vmatpush1.msra.mxu0 0.0
      %380 = vmatprep.subr.mxu0 0.0
      %381 = vmatpush1.msra.mxu0 0.0
      %382 = vmatprep.subr.mxu0 0.0
      %383 = vmatpush1.msra.mxu0 0.0
      %384 = vmatprep.subr.mxu0 0.0
      %385 = vmatpush1.msra.mxu0 0.0
      %386 = vmatprep.subr.mxu0 0.0
      %387 = vmatpush1.msra.mxu0 0.0
      %388 = vmatprep.subr.mxu0 0.0
      %389 = vmatpush1.msra.mxu0 0.0
      %390 = vmatprep.subr.mxu0 0.0
      %391 = vmatpush1.msra.mxu0 0.0
      %392 = vmatprep.subr.mxu0 0.0
      %393 = vmatpush1.msra.mxu0 0.0
      %394 = vmatprep.subr.mxu0 0.0
      %395 = vmatpush1.msra.mxu0 0.0
      %396 = vmatprep.subr.mxu0 0.0
      %397 = vmatpush1.msra.mxu0 0.0
      %398 = vmatprep.subr.mxu0 0.0
      %399 = vmatpush1.msra.mxu0 0.0
      %400 = vmatprep.subr.mxu0 0.0
      %401 = vmatpush1.msra.mxu0 0.0
      %402 = vmatprep.mubr.f32.mxu0 0.0
      %403 = vmatmul.mubr.f32.gmra.mrb[0].mxu0 %v329
      %v404 = vpop.f32.mrb[0].mxu0
      %v405 = vadd.f32 0.0, %v404
      %v406 = vpop.f32.mrb[0].mxu0
      %v407 = vadd.f32 0.0, %v406
      %408 = vdwg.mxu0
      %409 = vmatprep.subr.mxu0 0.0
      %410 = vmatpush1.msra.mxu0 %v336
      %411 = vmatprep.subr.mxu0 0.0
      %412 = vmatpush1.msra.mxu0 0.0
      %413 = vmatprep.subr.mxu0 0.0
      %414 = vmatpush1.msra.mxu0 0.0
      %415 = vmatprep.subr.mxu0 0.0
      %416 = vmatpush1.msra.mxu0 0.0
      %417 = vmatprep.subr.mxu0 0.0
      %418 = vmatpush1.msra.mxu0 0.0
      %419 = vmatprep.subr.mxu0 0.0
      %420 = vmatpush1.msra.mxu0 0.0
      %421 = vmatprep.subr.mxu0 0.0
      %422 = vmatpush1.msra.mxu0 0.0
      %423 = vmatprep.subr.mxu0 0.0
      %424 = vmatpush1.msra.mxu0 0.0
      %425 = vmatprep.subr.mxu0 0.0
      %426 = vmatpush1.msra.mxu0 0.0
      %427 = vmatprep.subr.mxu0 0.0
      %428 = vmatpush1.msra.mxu0 0.0
      %429 = vmatprep.subr.mxu0 0.0
      %430 = vmatpush1.msra.mxu0 0.0
      %431 = vmatprep.subr.mxu0 0.0
      %432 = vmatpush1.msra.mxu0 0.0
      %433 = vmatprep.subr.mxu0 0.0
      %434 = vmatpush1.msra.mxu0 0.0
      %435 = vmatprep.subr.mxu0 0.0
      %436 = vmatpush1.msra.mxu0 0.0
      %437 = vmatprep.subr.mxu0 0.0
      %438 = vmatpush1.msra.mxu0 0.0
      %439 = vmatprep.subr.mxu0 0.0
      %440 = vmatpush1.msra.mxu0 0.0
      %441 = vmatprep.subr.mxu0 0.0
      %442 = vmatpush1.msra.mxu0 0.0
      %443 = vmatprep.subr.mxu0 0.0
      %444 = vmatpush1.msra.mxu0 0.0
      %445 = vmatprep.subr.mxu0 0.0
      %446 = vmatpush1.msra.mxu0 0.0
      %447 = vmatprep.subr.mxu0 0.0
      %448 = vmatpush1.msra.mxu0 0.0
      %449 = vmatprep.subr.mxu0 0.0
      %450 = vmatpush1.msra.mxu0 0.0
      %451 = vmatprep.subr.mxu0 0.0
      %452 = vmatpush1.msra.mxu0 0.0
      %453 = vmatprep.subr.mxu0 0.0
      %454 = vmatpush1.msra.mxu0 0.0
      %455 = vmatprep.subr.mxu0 0.0
      %456 = vmatpush1.msra.mxu0 0.0
      %457 = vmatprep.subr.mxu0 0.0
      %458 = vmatpush1.msra.mxu0 0.0
      %459 = vmatprep.subr.mxu0 0.0
      %460 = vmatpush1.msra.mxu0 0.0
      %461 = vmatprep.subr.mxu0 0.0
      %462 = vmatpush1.msra.mxu0 0.0
      %463 = vmatprep.subr.mxu0 0.0
      %464 = vmatpush1.msra.mxu0 0.0
      %465 = vmatprep.subr.mxu0 0.0
      %466 = vmatpush1.msra.mxu0 0.0
      %467 = vmatprep.subr.mxu0 0.0
      %468 = vmatpush1.msra.mxu0 0.0
      %469 = vmatprep.subr.mxu0 0.0
      %470 = vmatpush1.msra.mxu0 0.0
      %471 = vmatprep.subr.mxu0 0.0
      %472 = vmatpush1.msra.mxu0 0.0
      %473 = vmatprep.mubr.f32.mxu0 0.0
      %474 = vmatmul.mubr.f32.gmra.mrb[0].mxu0 %v329
      %v475 = vpop.f32.mrb[0].mxu0
      %v476 = vadd.f32 0.0, %v475
      %v477 = vpop.f32.mrb[0].mxu0
      %478 = vdwg.mxu0
      %v480 = vsel %vm327, %v312, 0
      %v482 = vsel %vm331, %v310, 0
      %v484 = vsel %vm331, %v317, 0
      %v486 = vsel %vm331, %v311, 0
      %488 = vmatprep.subr.mxu0 %v484
      %489 = vmatpush1.msra.mxu0 %v482
      %490 = vmatprep.subr.mxu0 0.0
      %491 = vmatpush1.msra.mxu0 0.0
      %492 = vmatprep.subr.mxu0 0.0
      %493 = vmatpush1.msra.mxu0 0.0
      %494 = vmatprep.subr.mxu0 0.0
      %495 = vmatpush1.msra.mxu0 0.0
      %496 = vmatprep.subr.mxu0 0.0
      %497 = vmatpush1.msra.mxu0 0.0
      %498 = vmatprep.subr.mxu0 0.0
      %499 = vmatpush1.msra.mxu0 0.0
      %500 = vmatprep.subr.mxu0 0.0
      %501 = vmatpush1.msra.mxu0 0.0
      %502 = vmatprep.subr.mxu0 0.0
      %503 = vmatpush1.msra.mxu0 0.0
      %504 = vmatprep.subr.mxu0 0.0
      %505 = vmatpush1.msra.mxu0 0.0
      %506 = vmatprep.subr.mxu0 0.0
      %507 = vmatpush1.msra.mxu0 0.0
      %508 = vmatprep.subr.mxu0 0.0
      %509 = vmatpush1.msra.mxu0 0.0
      %510 = vmatprep.subr.mxu0 0.0
      %511 = vmatpush1.msra.mxu0 0.0
      %512 = vmatprep.subr.mxu0 0.0
      %513 = vmatpush1.msra.mxu0 0.0
      %514 = vmatprep.subr.mxu0 0.0
      %515 = vmatpush1.msra.mxu0 0.0
      %516 = vmatprep.subr.mxu0 0.0
      %517 = vmatpush1.msra.mxu0 0.0
      %518 = vmatprep.subr.mxu0 0.0
      %519 = vmatpush1.msra.mxu0 0.0
      %520 = vmatprep.subr.mxu0 0.0
      %521 = vmatpush1.msra.mxu0 0.0
      %522 = vmatprep.subr.mxu0 0.0
      %523 = vmatpush1.msra.mxu0 0.0
      %524 = vmatprep.subr.mxu0 0.0
      %525 = vmatpush1.msra.mxu0 0.0
      %526 = vmatprep.subr.mxu0 0.0
      %527 = vmatpush1.msra.mxu0 0.0
      %528 = vmatprep.subr.mxu0 0.0
      %529 = vmatpush1.msra.mxu0 0.0
      %530 = vmatprep.subr.mxu0 0.0
      %531 = vmatpush1.msra.mxu0 0.0
      %532 = vmatprep.subr.mxu0 0.0
      %533 = vmatpush1.msra.mxu0 0.0
      %534 = vmatprep.subr.mxu0 0.0
      %535 = vmatpush1.msra.mxu0 0.0
      %536 = vmatprep.subr.mxu0 0.0
      %537 = vmatpush1.msra.mxu0 0.0
      %538 = vmatprep.subr.mxu0 0.0
      %539 = vmatpush1.msra.mxu0 0.0
      %540 = vmatprep.subr.mxu0 0.0
      %541 = vmatpush1.msra.mxu0 0.0
      %542 = vmatprep.subr.mxu0 0.0
      %543 = vmatpush1.msra.mxu0 0.0
      %544 = vmatprep.subr.mxu0 0.0
      %545 = vmatpush1.msra.mxu0 0.0
      %546 = vmatprep.subr.mxu0 0.0
      %547 = vmatpush1.msra.mxu0 0.0
      %548 = vmatprep.subr.mxu0 0.0
      %549 = vmatpush1.msra.mxu0 0.0
      %550 = vmatprep.subr.mxu0 0.0
      %551 = vmatpush1.msra.mxu0 0.0
      %552 = vmatprep.mubr.f32.mxu0 0.0
      %553 = vmatmul.mubr.f32.gmra.mrb[0].mxu0 %v480
      %v554 = vpop.f32.mrb[0].mxu0
      %v555 = vadd.f32 %v405, %v554
      %v556 = vpop.f32.mrb[0].mxu0
      %v557 = vadd.f32 %v407, %v556
      %558 = vdwg.mxu0
      %559 = vmatprep.subr.mxu0 0.0
      %560 = vmatpush1.msra.mxu0 %v486
      %561 = vmatprep.subr.mxu0 0.0
      %562 = vmatpush1.msra.mxu0 0.0
      %563 = vmatprep.subr.mxu0 0.0
      %564 = vmatpush1.msra.mxu0 0.0
      %565 = vmatprep.subr.mxu0 0.0
      %566 = vmatpush1.msra.mxu0 0.0
      %567 = vmatprep.subr.mxu0 0.0
      %568 = vmatpush1.msra.mxu0 0.0
      %569 = vmatprep.subr.mxu0 0.0
      %570 = vmatpush1.msra.mxu0 0.0
      %571 = vmatprep.subr.mxu0 0.0
      %572 = vmatpush1.msra.mxu0 0.0
      %573 = vmatprep.subr.mxu0 0.0
      %574 = vmatpush1.msra.mxu0 0.0
      %575 = vmatprep.subr.mxu0 0.0
      %576 = vmatpush1.msra.mxu0 0.0
      %577 = vmatprep.subr.mxu0 0.0
      %578 = vmatpush1.msra.mxu0 0.0
      %579 = vmatprep.subr.mxu0 0.0
      %580 = vmatpush1.msra.mxu0 0.0
      %581 = vmatprep.subr.mxu0 0.0
      %582 = vmatpush1.msra.mxu0 0.0
      %583 = vmatprep.subr.mxu0 0.0
      %584 = vmatpush1.msra.mxu0 0.0
      %585 = vmatprep.subr.mxu0 0.0
      %586 = vmatpush1.msra.mxu0 0.0
      %587 = vmatprep.subr.mxu0 0.0
      %588 = vmatpush1.msra.mxu0 0.0
      %589 = vmatprep.subr.mxu0 0.0
      %590 = vmatpush1.msra.mxu0 0.0
      %591 = vmatprep.subr.mxu0 0.0
      %592 = vmatpush1.msra.mxu0 0.0
      %593 = vmatprep.subr.mxu0 0.0
      %594 = vmatpush1.msra.mxu0 0.0
      %595 = vmatprep.subr.mxu0 0.0
      %596 = vmatpush1.msra.mxu0 0.0
      %597 = vmatprep.subr.mxu0 0.0
      %598 = vmatpush1.msra.mxu0 0.0
      %599 = vmatprep.subr.mxu0 0.0
      %600 = vmatpush1.msra.mxu0 0.0
      %601 = vmatprep.subr.mxu0 0.0
      %602 = vmatpush1.msra.mxu0 0.0
      %603 = vmatprep.subr.mxu0 0.0
      %604 = vmatpush1.msra.mxu0 0.0
      %605 = vmatprep.subr.mxu0 0.0
      %606 = vmatpush1.msra.mxu0 0.0
      %607 = vmatprep.subr.mxu0 0.0
      %608 = vmatpush1.msra.mxu0 0.0
      %609 = vmatprep.subr.mxu0 0.0
      %610 = vmatpush1.msra.mxu0 0.0
      %611 = vmatprep.subr.mxu0 0.0
      %612 = vmatpush1.msra.mxu0 0.0
      %613 = vmatprep.subr.mxu0 0.0
      %614 = vmatpush1.msra.mxu0 0.0
      %615 = vmatprep.subr.mxu0 0.0
      %616 = vmatpush1.msra.mxu0 0.0
      %617 = vmatprep.subr.mxu0 0.0
      %618 = vmatpush1.msra.mxu0 0.0
      %619 = vmatprep.subr.mxu0 0.0
      %620 = vmatpush1.msra.mxu0 0.0
      %621 = vmatprep.subr.mxu0 0.0
      %622 = vmatpush1.msra.mxu0 0.0
      %623 = vmatprep.mubr.f32.mxu0 0.0
      %624 = vmatmul.mubr.f32.gmra.mrb[0].mxu0 %v480
      %v625 = vpop.f32.mrb[0].mxu0
      %v626 = vadd.f32 %v476, %v625
      %v627 = vpop.f32.mrb[0].mxu0
      %628 = vdwg.mxu0
      %s629 = scalar_lea.vmem %s1, 16
      %v630 = vld [vmem:[%s629] sm:$0xff]
      %631 = vrot.lane.b32.xlu0 %v310, 126
      %v632 = vpop.permute.xlu0 %631
      %633 = vrot.lane.b32.xlu0 %v317, 126
      %v634 = vpop.permute.xlu0 %633
      %635 = vrot.lane.b32.xlu0 %v311, 126
      %v636 = vpop.permute.xlu0 %635
      %vm637 = vcmask 1031168
      %v638 = vsel %vm637, %v632, %v634
      %v639 = vsel %vm637, %v634, %v636
      %v641 = vsel %vm327, %v630, 0
      %v643 = vsel %vm331, %v638, 0
      %v645 = vsel %vm331, %v639, 0
      %v647 = vsel %vm331, %v636, 0
      %649 = vmatprep.subr.mxu0 %v645
      %650 = vmatpush1.msra.mxu0 %v643
      %651 = vmatprep.subr.mxu0 0.0
      %652 = vmatpush1.msra.mxu0 0.0
      %653 = vmatprep.subr.mxu0 0.0
      %654 = vmatpush1.msra.mxu0 0.0
      %655 = vmatprep.subr.mxu0 0.0
      %656 = vmatpush1.msra.mxu0 0.0
      %657 = vmatprep.subr.mxu0 0.0
      %658 = vmatpush1.msra.mxu0 0.0
      %659 = vmatprep.subr.mxu0 0.0
      %660 = vmatpush1.msra.mxu0 0.0
      %661 = vmatprep.subr.mxu0 0.0
      %662 = vmatpush1.msra.mxu0 0.0
      %663 = vmatprep.subr.mxu0 0.0
      %664 = vmatpush1.msra.mxu0 0.0
      %665 = vmatprep.subr.mxu0 0.0
      %666 = vmatpush1.msra.mxu0 0.0
      %667 = vmatprep.subr.mxu0 0.0
      %668 = vmatpush1.msra.mxu0 0.0
      %669 = vmatprep.subr.mxu0 0.0
      %670 = vmatpush1.msra.mxu0 0.0
      %671 = vmatprep.subr.mxu0 0.0
      %672 = vmatpush1.msra.mxu0 0.0
      %673 = vmatprep.subr.mxu0 0.0
      %674 = vmatpush1.msra.mxu0 0.0
      %675 = vmatprep.subr.mxu0 0.0
      %676 = vmatpush1.msra.mxu0 0.0
      %677 = vmatprep.subr.mxu0 0.0
      %678 = vmatpush1.msra.mxu0 0.0
      %679 = vmatprep.subr.mxu0 0.0
      %680 = vmatpush1.msra.mxu0 0.0
      %681 = vmatprep.subr.mxu0 0.0
      %682 = vmatpush1.msra.mxu0 0.0
      %683 = vmatprep.subr.mxu0 0.0
      %684 = vmatpush1.msra.mxu0 0.0
      %685 = vmatprep.subr.mxu0 0.0
      %686 = vmatpush1.msra.mxu0 0.0
      %687 = vmatprep.subr.mxu0 0.0
      %688 = vmatpush1.msra.mxu0 0.0
      %689 = vmatprep.subr.mxu0 0.0
      %690 = vmatpush1.msra.mxu0 0.0
      %691 = vmatprep.subr.mxu0 0.0
      %692 = vmatpush1.msra.mxu0 0.0
      %693 = vmatprep.subr.mxu0 0.0
      %694 = vmatpush1.msra.mxu0 0.0
      %695 = vmatprep.subr.mxu0 0.0
      %696 = vmatpush1.msra.mxu0 0.0
      %697 = vmatprep.subr.mxu0 0.0
      %698 = vmatpush1.msra.mxu0 0.0
      %699 = vmatprep.subr.mxu0 0.0
      %700 = vmatpush1.msra.mxu0 0.0
      %701 = vmatprep.subr.mxu0 0.0
      %702 = vmatpush1.msra.mxu0 0.0
      %703 = vmatprep.subr.mxu0 0.0
      %704 = vmatpush1.msra.mxu0 0.0
      %705 = vmatprep.subr.mxu0 0.0
      %706 = vmatpush1.msra.mxu0 0.0
      %707 = vmatprep.subr.mxu0 0.0
      %708 = vmatpush1.msra.mxu0 0.0
      %709 = vmatprep.subr.mxu0 0.0
      %710 = vmatpush1.msra.mxu0 0.0
      %711 = vmatprep.subr.mxu0 0.0
      %712 = vmatpush1.msra.mxu0 0.0
      %713 = vmatprep.mubr.f32.mxu0 0.0
      %714 = vmatmul.mubr.f32.gmra.mrb[0].mxu0 %v641
      %v715 = vpop.f32.mrb[0].mxu0
      %v716 = vadd.f32 0.0, %v715
      %v717 = vpop.f32.mrb[0].mxu0
      %v718 = vadd.f32 0.0, %v717
      %719 = vdwg.mxu0
      %720 = vmatprep.subr.mxu0 0.0
      %721 = vmatpush1.msra.mxu0 %v647
      %722 = vmatprep.subr.mxu0 0.0
      %723 = vmatpush1.msra.mxu0 0.0
      %724 = vmatprep.subr.mxu0 0.0
      %725 = vmatpush1.msra.mxu0 0.0
      %726 = vmatprep.subr.mxu0 0.0
      %727 = vmatpush1.msra.mxu0 0.0
      %728 = vmatprep.subr.mxu0 0.0
      %729 = vmatpush1.msra.mxu0 0.0
      %730 = vmatprep.subr.mxu0 0.0
      %731 = vmatpush1.msra.mxu0 0.0
      %732 = vmatprep.subr.mxu0 0.0
      %733 = vmatpush1.msra.mxu0 0.0
      %734 = vmatprep.subr.mxu0 0.0
      %735 = vmatpush1.msra.mxu0 0.0
      %736 = vmatprep.subr.mxu0 0.0
      %737 = vmatpush1.msra.mxu0 0.0
      %738 = vmatprep.subr.mxu0 0.0
      %739 = vmatpush1.msra.mxu0 0.0
      %740 = vmatprep.subr.mxu0 0.0
      %741 = vmatpush1.msra.mxu0 0.0
      %742 = vmatprep.subr.mxu0 0.0
      %743 = vmatpush1.msra.mxu0 0.0
      %744 = vmatprep.subr.mxu0 0.0
      %745 = vmatpush1.msra.mxu0 0.0
      %746 = vmatprep.subr.mxu0 0.0
      %747 = vmatpush1.msra.mxu0 0.0
      %748 = vmatprep.subr.mxu0 0.0
      %749 = vmatpush1.msra.mxu0 0.0
      %750 = vmatprep.subr.mxu0 0.0
      %751 = vmatpush1.msra.mxu0 0.0
      %752 = vmatprep.subr.mxu0 0.0
      %753 = vmatpush1.msra.mxu0 0.0
      %754 = vmatprep.subr.mxu0 0.0
      %755 = vmatpush1.msra.mxu0 0.0
      %756 = vmatprep.subr.mxu0 0.0
      %757 = vmatpush1.msra.mxu0 0.0
      %758 = vmatprep.subr.mxu0 0.0
      %759 = vmatpush1.msra.mxu0 0.0
      %760 = vmatprep.subr.mxu0 0.0
      %761 = vmatpush1.msra.mxu0 0.0
      %762 = vmatprep.subr.mxu0 0.0
      %763 = vmatpush1.msra.mxu0 0.0
      %764 = vmatprep.subr.mxu0 0.0
      %765 = vmatpush1.msra.mxu0 0.0
      %766 = vmatprep.subr.mxu0 0.0
      %767 = vmatpush1.msra.mxu0 0.0
      %768 = vmatprep.subr.mxu0 0.0
      %769 = vmatpush1.msra.mxu0 0.0
      %770 = vmatprep.subr.mxu0 0.0
      %771 = vmatpush1.msra.mxu0 0.0
      %772 = vmatprep.subr.mxu0 0.0
      %773 = vmatpush1.msra.mxu0 0.0
      %774 = vmatprep.subr.mxu0 0.0
      %775 = vmatpush1.msra.mxu0 0.0
      %776 = vmatprep.subr.mxu0 0.0
      %777 = vmatpush1.msra.mxu0 0.0
      %778 = vmatprep.subr.mxu0 0.0
      %779 = vmatpush1.msra.mxu0 0.0
      %780 = vmatprep.subr.mxu0 0.0
      %781 = vmatpush1.msra.mxu0 0.0
      %782 = vmatprep.subr.mxu0 0.0
      %783 = vmatpush1.msra.mxu0 0.0
      %784 = vmatprep.mubr.f32.mxu0 0.0
      %785 = vmatmul.mubr.f32.gmra.mrb[0].mxu0 %v641
      %v786 = vpop.f32.mrb[0].mxu0
      %v787 = vadd.f32 0.0, %v786
      %v788 = vpop.f32.mrb[0].mxu0
      %789 = vdwg.mxu0
      %v790 = vadd.f32 %v555, %v716
      %v791 = vadd.f32 %v557, %v718
      %v792 = vadd.f32 %v626, %v787
      %s793 = scalar_lea.vmem %s1, 24
      %v794 = vld [vmem:[%s793] sm:$0xff]
      %795 = vrot.lane.b32.xlu0 %v310, 110
      %v796 = vpop.permute.xlu0 %795
      %797 = vrot.lane.b32.xlu0 %v317, 110
      %v798 = vpop.permute.xlu0 %797
      %799 = vrot.lane.b32.xlu0 %v311, 110
      %v800 = vpop.permute.xlu0 %799
      %vm801 = vcmask 900096
      %v802 = vsel %vm801, %v796, %v798
      %v803 = vsel %vm801, %v798, %v800
      %v805 = vsel %vm327, %v794, 0
      %v807 = vsel %vm331, %v802, 0
      %v809 = vsel %vm331, %v803, 0
      %v811 = vsel %vm331, %v800, 0
      %813 = vmatprep.subr.mxu0 %v809
      %814 = vmatpush1.msra.mxu0 %v807
      %815 = vmatprep.subr.mxu0 0.0
      %816 = vmatpush1.msra.mxu0 0.0
      %817 = vmatprep.subr.mxu0 0.0
      %818 = vmatpush1.msra.mxu0 0.0
      %819 = vmatprep.subr.mxu0 0.0
      %820 = vmatpush1.msra.mxu0 0.0
      %821 = vmatprep.subr.mxu0 0.0
      %822 = vmatpush1.msra.mxu0 0.0
      %823 = vmatprep.subr.mxu0 0.0
      %824 = vmatpush1.msra.mxu0 0.0
      %825 = vmatprep.subr.mxu0 0.0
      %826 = vmatpush1.msra.mxu0 0.0
      %827 = vmatprep.subr.mxu0 0.0
      %828 = vmatpush1.msra.mxu0 0.0
      %829 = vmatprep.subr.mxu0 0.0
      %830 = vmatpush1.msra.mxu0 0.0
      %831 = vmatprep.subr.mxu0 0.0
      %832 = vmatpush1.msra.mxu0 0.0
      %833 = vmatprep.subr.mxu0 0.0
      %834 = vmatpush1.msra.mxu0 0.0
      %835 = vmatprep.subr.mxu0 0.0
      %836 = vmatpush1.msra.mxu0 0.0
      %837 = vmatprep.subr.mxu0 0.0
      %838 = vmatpush1.msra.mxu0 0.0
      %839 = vmatprep.subr.mxu0 0.0
      %840 = vmatpush1.msra.mxu0 0.0
      %841 = vmatprep.subr.mxu0 0.0
      %842 = vmatpush1.msra.mxu0 0.0
      %843 = vmatprep.subr.mxu0 0.0
      %844 = vmatpush1.msra.mxu0 0.0
      %845 = vmatprep.subr.mxu0 0.0
      %846 = vmatpush1.msra.mxu0 0.0
      %847 = vmatprep.subr.mxu0 0.0
      %848 = vmatpush1.msra.mxu0 0.0
      %849 = vmatprep.subr.mxu0 0.0
      %850 = vmatpush1.msra.mxu0 0.0
      %851 = vmatprep.subr.mxu0 0.0
      %852 = vmatpush1.msra.mxu0 0.0
      %853 = vmatprep.subr.mxu0 0.0
      %854 = vmatpush1.msra.mxu0 0.0
      %855 = vmatprep.subr.mxu0 0.0
      %856 = vmatpush1.msra.mxu0 0.0
      %857 = vmatprep.subr.mxu0 0.0
      %858 = vmatpush1.msra.mxu0 0.0
      %859 = vmatprep.subr.mxu0 0.0
      %860 = vmatpush1.msra.mxu0 0.0
      %861 = vmatprep.subr.mxu0 0.0
      %862 = vmatpush1.msra.mxu0 0.0
      %863 = vmatprep.subr.mxu0 0.0
      %864 = vmatpush1.msra.mxu0 0.0
      %865 = vmatprep.subr.mxu0 0.0
      %866 = vmatpush1.msra.mxu0 0.0
      %867 = vmatprep.subr.mxu0 0.0
      %868 = vmatpush1.msra.mxu0 0.0
      %869 = vmatprep.subr.mxu0 0.0
      %870 = vmatpush1.msra.mxu0 0.0
      %871 = vmatprep.subr.mxu0 0.0
      %872 = vmatpush1.msra.mxu0 0.0
      %873 = vmatprep.subr.mxu0 0.0
      %874 = vmatpush1.msra.mxu0 0.0
      %875 = vmatprep.subr.mxu0 0.0
      %876 = vmatpush1.msra.mxu0 0.0
      %877 = vmatprep.mubr.f32.mxu0 0.0
      %878 = vmatmul.mubr.f32.gmra.mrb[0].mxu0 %v805
      %v879 = vpop.f32.mrb[0].mxu0
      %v880 = vadd.f32 0.0, %v879
      %v881 = vpop.f32.mrb[0].mxu0
      %v882 = vadd.f32 0.0, %v881
      %883 = vdwg.mxu0
      %884 = vmatprep.subr.mxu0 0.0
      %885 = vmatpush1.msra.mxu0 %v811
      %886 = vmatprep.subr.mxu0 0.0
      %887 = vmatpush1.msra.mxu0 0.0
      %888 = vmatprep.subr.mxu0 0.0
      %889 = vmatpush1.msra.mxu0 0.0
      %890 = vmatprep.subr.mxu0 0.0
      %891 = vmatpush1.msra.mxu0 0.0
      %892 = vmatprep.subr.mxu0 0.0
      %893 = vmatpush1.msra.mxu0 0.0
      %894 = vmatprep.subr.mxu0 0.0
      %895 = vmatpush1.msra.mxu0 0.0
      %896 = vmatprep.subr.mxu0 0.0
      %897 = vmatpush1.msra.mxu0 0.0
      %898 = vmatprep.subr.mxu0 0.0
      %899 = vmatpush1.msra.mxu0 0.0
      %900 = vmatprep.subr.mxu0 0.0
      %901 = vmatpush1.msra.mxu0 0.0
      %902 = vmatprep.subr.mxu0 0.0
      %903 = vmatpush1.msra.mxu0 0.0
      %904 = vmatprep.subr.mxu0 0.0
      %905 = vmatpush1.msra.mxu0 0.0
      %906 = vmatprep.subr.mxu0 0.0
      %907 = vmatpush1.msra.mxu0 0.0
      %908 = vmatprep.subr.mxu0 0.0
      %909 = vmatpush1.msra.mxu0 0.0
      %910 = vmatprep.subr.mxu0 0.0
      %911 = vmatpush1.msra.mxu0 0.0
      %912 = vmatprep.subr.mxu0 0.0
      %913 = vmatpush1.msra.mxu0 0.0
      %914 = vmatprep.subr.mxu0 0.0
      %915 = vmatpush1.msra.mxu0 0.0
      %916 = vmatprep.subr.mxu0 0.0
      %917 = vmatpush1.msra.mxu0 0.0
      %918 = vmatprep.subr.mxu0 0.0
      %919 = vmatpush1.msra.mxu0 0.0
      %920 = vmatprep.subr.mxu0 0.0
      %921 = vmatpush1.msra.mxu0 0.0
      %922 = vmatprep.subr.mxu0 0.0
      %923 = vmatpush1.msra.mxu0 0.0
      %924 = vmatprep.subr.mxu0 0.0
      %925 = vmatpush1.msra.mxu0 0.0
      %926 = vmatprep.subr.mxu0 0.0
      %927 = vmatpush1.msra.mxu0 0.0
      %928 = vmatprep.subr.mxu0 0.0
      %929 = vmatpush1.msra.mxu0 0.0
      %930 = vmatprep.subr.mxu0 0.0
      %931 = vmatpush1.msra.mxu0 0.0
      %932 = vmatprep.subr.mxu0 0.0
      %933 = vmatpush1.msra.mxu0 0.0
      %934 = vmatprep.subr.mxu0 0.0
      %935 = vmatpush1.msra.mxu0 0.0
      %936 = vmatprep.subr.mxu0 0.0
      %937 = vmatpush1.msra.mxu0 0.0
      %938 = vmatprep.subr.mxu0 0.0
      %939 = vmatpush1.msra.mxu0 0.0
      %940 = vmatprep.subr.mxu0 0.0
      %941 = vmatpush1.msra.mxu0 0.0
      %942 = vmatprep.subr.mxu0 0.0
      %943 = vmatpush1.msra.mxu0 0.0
      %944 = vmatprep.subr.mxu0 0.0
      %945 = vmatpush1.msra.mxu0 0.0
      %946 = vmatprep.subr.mxu0 0.0
      %947 = vmatpush1.msra.mxu0 0.0
      %948 = vmatprep.mubr.f32.mxu0 0.0
      %949 = vmatmul.mubr.f32.gmra.mrb[0].mxu0 %v805
      %v950 = vpop.f32.mrb[0].mxu0
      %v951 = vadd.f32 0.0, %v950
      %v952 = vpop.f32.mrb[0].mxu0
      %953 = vdwg.mxu0
      %v954 = vadd.f32 %v790, %v880
      %v955 = vadd.f32 %v791, %v882
      %v956 = vadd.f32 %v792, %v951
      %s957 = scalar_lea.vmem %s1, 32
      %v958 = vld [vmem:[%s957] sm:$0xff]
      %959 = vrot.lane.b32.xlu0 %v310, 109
      %v960 = vpop.permute.xlu0 %959
      %961 = vrot.lane.b32.xlu0 %v317, 109
      %v962 = vpop.permute.xlu0 %961
      %963 = vrot.lane.b32.xlu0 %v311, 109
      %v964 = vpop.permute.xlu0 %963
      %vm965 = vcmask 891904
      %v966 = vsel %vm965, %v960, %v962
      %v967 = vsel %vm965, %v962, %v964
      %v969 = vsel %vm327, %v958, 0
      %v971 = vsel %vm331, %v966, 0
      %v973 = vsel %vm331, %v967, 0
      %v975 = vsel %vm331, %v964, 0
      %977 = vmatprep.subr.mxu0 %v973
      %978 = vmatpush1.msra.mxu0 %v971
      %979 = vmatprep.subr.mxu0 0.0
      %980 = vmatpush1.msra.mxu0 0.0
      %981 = vmatprep.subr.mxu0 0.0
      %982 = vmatpush1.msra.mxu0 0.0
      %983 = vmatprep.subr.mxu0 0.0
      %984 = vmatpush1.msra.mxu0 0.0
      %985 = vmatprep.subr.mxu0 0.0
      %986 = vmatpush1.msra.mxu0 0.0
      %987 = vmatprep.subr.mxu0 0.0
      %988 = vmatpush1.msra.mxu0 0.0
      %989 = vmatprep.subr.mxu0 0.0
      %990 = vmatpush1.msra.mxu0 0.0
      %991 = vmatprep.subr.mxu0 0.0
      %992 = vmatpush1.msra.mxu0 0.0
      %993 = vmatprep.subr.mxu0 0.0
      %994 = vmatpush1.msra.mxu0 0.0
      %995 = vmatprep.subr.mxu0 0.0
      %996 = vmatpush1.msra.mxu0 0.0
      %997 = vmatprep.subr.mxu0 0.0
      %998 = vmatpush1.msra.mxu0 0.0
      %999 = vmatprep.subr.mxu0 0.0
      %1000 = vmatpush1.msra.mxu0 0.0
      %1001 = vmatprep.subr.mxu0 0.0
      %1002 = vmatpush1.msra.mxu0 0.0
      %1003 = vmatprep.subr.mxu0 0.0
      %1004 = vmatpush1.msra.mxu0 0.0
      %1005 = vmatprep.subr.mxu0 0.0
      %1006 = vmatpush1.msra.mxu0 0.0
      %1007 = vmatprep.subr.mxu0 0.0
      %1008 = vmatpush1.msra.mxu0 0.0
      %1009 = vmatprep.subr.mxu0 0.0
      %1010 = vmatpush1.msra.mxu0 0.0
      %1011 = vmatprep.subr.mxu0 0.0
      %1012 = vmatpush1.msra.mxu0 0.0
      %1013 = vmatprep.subr.mxu0 0.0
      %1014 = vmatpush1.msra.mxu0 0.0
      %1015 = vmatprep.subr.mxu0 0.0
      %1016 = vmatpush1.msra.mxu0 0.0
      %1017 = vmatprep.subr.mxu0 0.0
      %1018 = vmatpush1.msra.mxu0 0.0
      %1019 = vmatprep.subr.mxu0 0.0
      %1020 = vmatpush1.msra.mxu0 0.0
      %1021 = vmatprep.subr.mxu0 0.0
      %1022 = vmatpush1.msra.mxu0 0.0
      %1023 = vmatprep.subr.mxu0 0.0
      %1024 = vmatpush1.msra.mxu0 0.0
      %1025 = vmatprep.subr.mxu0 0.0
      %1026 = vmatpush1.msra.mxu0 0.0
      %1027 = vmatprep.subr.mxu0 0.0
      %1028 = vmatpush1.msra.mxu0 0.0
      %1029 = vmatprep.subr.mxu0 0.0
      %1030 = vmatpush1.msra.mxu0 0.0
      %1031 = vmatprep.subr.mxu0 0.0
      %1032 = vmatpush1.msra.mxu0 0.0
      %1033 = vmatprep.subr.mxu0 0.0
      %1034 = vmatpush1.msra.mxu0 0.0
      %1035 = vmatprep.subr.mxu0 0.0
      %1036 = vmatpush1.msra.mxu0 0.0
      %1037 = vmatprep.subr.mxu0 0.0
      %1038 = vmatpush1.msra.mxu0 0.0
      %1039 = vmatprep.subr.mxu0 0.0
      %1040 = vmatpush1.msra.mxu0 0.0
      %1041 = vmatprep.mubr.f32.mxu0 0.0
      %1042 = vmatmul.mubr.f32.gmra.mrb[0].mxu0 %v969
      %v1043 = vpop.f32.mrb[0].mxu0
      %v1044 = vadd.f32 0.0, %v1043
      %v1045 = vpop.f32.mrb[0].mxu0
      %v1046 = vadd.f32 0.0, %v1045
      %1047 = vdwg.mxu0
      %1048 = vmatprep.subr.mxu0 0.0
      %1049 = vmatpush1.msra.mxu0 %v975
      %1050 = vmatprep.subr.mxu0 0.0
      %1051 = vmatpush1.msra.mxu0 0.0
      %1052 = vmatprep.subr.mxu0 0.0
      %1053 = vmatpush1.msra.mxu0 0.0
      %1054 = vmatprep.subr.mxu0 0.0
      %1055 = vmatpush1.msra.mxu0 0.0
      %1056 = vmatprep.subr.mxu0 0.0
      %1057 = vmatpush1.msra.mxu0 0.0
      %1058 = vmatprep.subr.mxu0 0.0
      %1059 = vmatpush1.msra.mxu0 0.0
      %1060 = vmatprep.subr.mxu0 0.0
      %1061 = vmatpush1.msra.mxu0 0.0
      %1062 = vmatprep.subr.mxu0 0.0
      %1063 = vmatpush1.msra.mxu0 0.0
      %1064 = vmatprep.subr.mxu0 0.0
      %1065 = vmatpush1.msra.mxu0 0.0
      %1066 = vmatprep.subr.mxu0 0.0
      %1067 = vmatpush1.msra.mxu0 0.0
      %1068 = vmatprep.subr.mxu0 0.0
      %1069 = vmatpush1.msra.mxu0 0.0
      %1070 = vmatprep.subr.mxu0 0.0
      %1071 = vmatpush1.msra.mxu0 0.0
      %1072 = vmatprep.subr.mxu0 0.0
      %1073 = vmatpush1.msra.mxu0 0.0
      %1074 = vmatprep.subr.mxu0 0.0
      %1075 = vmatpush1.msra.mxu0 0.0
      %1076 = vmatprep.subr.mxu0 0.0
      %1077 = vmatpush1.msra.mxu0 0.0
      %1078 = vmatprep.subr.mxu0 0.0
      %1079 = vmatpush1.msra.mxu0 0.0
      %1080 = vmatprep.subr.mxu0 0.0
      %1081 = vmatpush1.msra.mxu0 0.0
      %1082 = vmatprep.subr.mxu0 0.0
      %1083 = vmatpush1.msra.mxu0 0.0
      %1084 = vmatprep.subr.mxu0 0.0
      %1085 = vmatpush1.msra.mxu0 0.0
      %1086 = vmatprep.subr.mxu0 0.0
      %1087 = vmatpush1.msra.mxu0 0.0
      %1088 = vmatprep.subr.mxu0 0.0
      %1089 = vmatpush1.msra.mxu0 0.0
      %1090 = vmatprep.subr.mxu0 0.0
      %1091 = vmatpush1.msra.mxu0 0.0
      %1092 = vmatprep.subr.mxu0 0.0
      %1093 = vmatpush1.msra.mxu0 0.0
      %1094 = vmatprep.subr.mxu0 0.0
      %1095 = vmatpush1.msra.mxu0 0.0
      %1096 = vmatprep.subr.mxu0 0.0
      %1097 = vmatpush1.msra.mxu0 0.0
      %1098 = vmatprep.subr.mxu0 0.0
      %1099 = vmatpush1.msra.mxu0 0.0
      %1100 = vmatprep.subr.mxu0 0.0
      %1101 = vmatpush1.msra.mxu0 0.0
      %1102 = vmatprep.subr.mxu0 0.0
      %1103 = vmatpush1.msra.mxu0 0.0
      %1104 = vmatprep.subr.mxu0 0.0
      %1105 = vmatpush1.msra.mxu0 0.0
      %1106 = vmatprep.subr.mxu0 0.0
      %1107 = vmatpush1.msra.mxu0 0.0
      %1108 = vmatprep.subr.mxu0 0.0
      %1109 = vmatpush1.msra.mxu0 0.0
      %1110 = vmatprep.subr.mxu0 0.0
      %1111 = vmatpush1.msra.mxu0 0.0
      %1112 = vmatprep.mubr.f32.mxu0 0.0
      %1113 = vmatmul.mubr.f32.gmra.mrb[0].mxu0 %v969
      %v1114 = vpop.f32.mrb[0].mxu0
      %v1115 = vadd.f32 0.0, %v1114
      %v1116 = vpop.f32.mrb[0].mxu0
      %1117 = vdwg.mxu0
      %v1118 = vadd.f32 %v954, %v1044
      %v1119 = vadd.f32 %v955, %v1046
      %v1120 = vadd.f32 %v956, %v1115
      %s1121 = scalar_lea.vmem %s1, 40
      %v1122 = vld [vmem:[%s1121] sm:$0xff]
      %1123 = vrot.lane.b32.xlu0 %v310, 108
      %v1124 = vpop.permute.xlu0 %1123
      %1125 = vrot.lane.b32.xlu0 %v317, 108
      %v1126 = vpop.permute.xlu0 %1125
      %1127 = vrot.lane.b32.xlu0 %v311, 108
      %v1128 = vpop.permute.xlu0 %1127
      %vm1129 = vcmask 883712
      %v1130 = vsel %vm1129, %v1124, %v1126
      %v1131 = vsel %vm1129, %v1126, %v1128
      %v1133 = vsel %vm327, %v1122, 0
      %v1135 = vsel %vm331, %v1130, 0
      %v1137 = vsel %vm331, %v1131, 0
      %v1139 = vsel %vm331, %v1128, 0
      %1141 = vmatprep.subr.mxu0 %v1137
      %1142 = vmatpush1.msra.mxu0 %v1135
      %1143 = vmatprep.subr.mxu0 0.0
      %1144 = vmatpush1.msra.mxu0 0.0
      %1145 = vmatprep.subr.mxu0 0.0
      %1146 = vmatpush1.msra.mxu0 0.0
      %1147 = vmatprep.subr.mxu0 0.0
      %1148 = vmatpush1.msra.mxu0 0.0
      %1149 = vmatprep.subr.mxu0 0.0
      %1150 = vmatpush1.msra.mxu0 0.0
      %1151 = vmatprep.subr.mxu0 0.0
      %1152 = vmatpush1.msra.mxu0 0.0
      %1153 = vmatprep.subr.mxu0 0.0
      %1154 = vmatpush1.msra.mxu0 0.0
      %1155 = vmatprep.subr.mxu0 0.0
      %1156 = vmatpush1.msra.mxu0 0.0
      %1157 = vmatprep.subr.mxu0 0.0
      %1158 = vmatpush1.msra.mxu0 0.0
      %1159 = vmatprep.subr.mxu0 0.0
      %1160 = vmatpush1.msra.mxu0 0.0
      %1161 = vmatprep.subr.mxu0 0.0
      %1162 = vmatpush1.msra.mxu0 0.0
      %1163 = vmatprep.subr.mxu0 0.0
      %1164 = vmatpush1.msra.mxu0 0.0
      %1165 = vmatprep.subr.mxu0 0.0
      %1166 = vmatpush1.msra.mxu0 0.0
      %1167 = vmatprep.subr.mxu0 0.0
      %1168 = vmatpush1.msra.mxu0 0.0
      %1169 = vmatprep.subr.mxu0 0.0
      %1170 = vmatpush1.msra.mxu0 0.0
      %1171 = vmatprep.subr.mxu0 0.0
      %1172 = vmatpush1.msra.mxu0 0.0
      %1173 = vmatprep.subr.mxu0 0.0
      %1174 = vmatpush1.msra.mxu0 0.0
      %1175 = vmatprep.subr.mxu0 0.0
      %1176 = vmatpush1.msra.mxu0 0.0
      %1177 = vmatprep.subr.mxu0 0.0
      %1178 = vmatpush1.msra.mxu0 0.0
      %1179 = vmatprep.subr.mxu0 0.0
      %1180 = vmatpush1.msra.mxu0 0.0
      %1181 = vmatprep.subr.mxu0 0.0
      %1182 = vmatpush1.msra.mxu0 0.0
      %1183 = vmatprep.subr.mxu0 0.0
      %1184 = vmatpush1.msra.mxu0 0.0
      %1185 = vmatprep.subr.mxu0 0.0
      %1186 = vmatpush1.msra.mxu0 0.0
      %1187 = vmatprep.subr.mxu0 0.0
      %1188 = vmatpush1.msra.mxu0 0.0
      %1189 = vmatprep.subr.mxu0 0.0
      %1190 = vmatpush1.msra.mxu0 0.0
      %1191 = vmatprep.subr.mxu0 0.0
      %1192 = vmatpush1.msra.mxu0 0.0
      %1193 = vmatprep.subr.mxu0 0.0
      %1194 = vmatpush1.msra.mxu0 0.0
      %1195 = vmatprep.subr.mxu0 0.0
      %1196 = vmatpush1.msra.mxu0 0.0
      %1197 = vmatprep.subr.mxu0 0.0
      %1198 = vmatpush1.msra.mxu0 0.0
      %1199 = vmatprep.subr.mxu0 0.0
      %1200 = vmatpush1.msra.mxu0 0.0
      %1201 = vmatprep.subr.mxu0 0.0
      %1202 = vmatpush1.msra.mxu0 0.0
      %1203 = vmatprep.subr.mxu0 0.0
      %1204 = vmatpush1.msra.mxu0 0.0
      %1205 = vmatprep.mubr.f32.mxu0 0.0
      %1206 = vmatmul.mubr.f32.gmra.mrb[0].mxu0 %v1133
      %v1207 = vpop.f32.mrb[0].mxu0
      %v1208 = vadd.f32 0.0, %v1207
      %v1209 = vpop.f32.mrb[0].mxu0
      %v1210 = vadd.f32 0.0, %v1209
      %1211 = vdwg.mxu0
      %1212 = vmatprep.subr.mxu0 0.0
      %1213 = vmatpush1.msra.mxu0 %v1139
      %1214 = vmatprep.subr.mxu0 0.0
      %1215 = vmatpush1.msra.mxu0 0.0
      %1216 = vmatprep.subr.mxu0 0.0
      %1217 = vmatpush1.msra.mxu0 0.0
      %1218 = vmatprep.subr.mxu0 0.0
      %1219 = vmatpush1.msra.mxu0 0.0
      %1220 = vmatprep.subr.mxu0 0.0
      %1221 = vmatpush1.msra.mxu0 0.0
      %1222 = vmatprep.subr.mxu0 0.0
      %1223 = vmatpush1.msra.mxu0 0.0
      %1224 = vmatprep.subr.mxu0 0.0
      %1225 = vmatpush1.msra.mxu0 0.0
      %1226 = vmatprep.subr.mxu0 0.0
      %1227 = vmatpush1.msra.mxu0 0.0
      %1228 = vmatprep.subr.mxu0 0.0
      %1229 = vmatpush1.msra.mxu0 0.0
      %1230 = vmatprep.subr.mxu0 0.0
      %1231 = vmatpush1.msra.mxu0 0.0
      %1232 = vmatprep.subr.mxu0 0.0
      %1233 = vmatpush1.msra.mxu0 0.0
      %1234 = vmatprep.subr.mxu0 0.0
      %1235 = vmatpush1.msra.mxu0 0.0
      %1236 = vmatprep.subr.mxu0 0.0
      %1237 = vmatpush1.msra.mxu0 0.0
      %1238 = vmatprep.subr.mxu0 0.0
      %1239 = vmatpush1.msra.mxu0 0.0
      %1240 = vmatprep.subr.mxu0 0.0
      %1241 = vmatpush1.msra.mxu0 0.0
      %1242 = vmatprep.subr.mxu0 0.0
      %1243 = vmatpush1.msra.mxu0 0.0
      %1244 = vmatprep.subr.mxu0 0.0
      %1245 = vmatpush1.msra.mxu0 0.0
      %1246 = vmatprep.subr.mxu0 0.0
      %1247 = vmatpush1.msra.mxu0 0.0
      %1248 = vmatprep.subr.mxu0 0.0
      %1249 = vmatpush1.msra.mxu0 0.0
      %1250 = vmatprep.subr.mxu0 0.0
      %1251 = vmatpush1.msra.mxu0 0.0
      %1252 = vmatprep.subr.mxu0 0.0
      %1253 = vmatpush1.msra.mxu0 0.0
      %1254 = vmatprep.subr.mxu0 0.0
      %1255 = vmatpush1.msra.mxu0 0.0
      %1256 = vmatprep.subr.mxu0 0.0
      %1257 = vmatpush1.msra.mxu0 0.0
      %1258 = vmatprep.subr.mxu0 0.0
      %1259 = vmatpush1.msra.mxu0 0.0
      %1260 = vmatprep.subr.mxu0 0.0
      %1261 = vmatpush1.msra.mxu0 0.0
      %1262 = vmatprep.subr.mxu0 0.0
      %1263 = vmatpush1.msra.mxu0 0.0
      %1264 = vmatprep.subr.mxu0 0.0
      %1265 = vmatpush1.msra.mxu0 0.0
      %1266 = vmatprep.subr.mxu0 0.0
      %1267 = vmatpush1.msra.mxu0 0.0
      %1268 = vmatprep.subr.mxu0 0.0
      %1269 = vmatpush1.msra.mxu0 0.0
      %1270 = vmatprep.subr.mxu0 0.0
      %1271 = vmatpush1.msra.mxu0 0.0
      %1272 = vmatprep.subr.mxu0 0.0
      %1273 = vmatpush1.msra.mxu0 0.0
      %1274 = vmatprep.subr.mxu0 0.0
      %1275 = vmatpush1.msra.mxu0 0.0
      %1276 = vmatprep.mubr.f32.mxu0 0.0
      %1277 = vmatmul.mubr.f32.gmra.mrb[0].mxu0 %v1133
      %v1278 = vpop.f32.mrb[0].mxu0
      %v1279 = vadd.f32 0.0, %v1278
      %v1280 = vpop.f32.mrb[0].mxu0
      %1281 = vdwg.mxu0
      %v1282 = vadd.f32 %v1118, %v1208
      %v1283 = vadd.f32 %v1119, %v1210
      %v1284 = vadd.f32 %v1120, %v1279
      %s1285 = scalar_lea.vmem %s1, 48
      %v1286 = vld [vmem:[%s1285] sm:$0xff]
      %1287 = vrot.lane.b32.xlu0 %v310, 92
      %v1288 = vpop.permute.xlu0 %1287
      %1289 = vrot.lane.b32.xlu0 %v317, 92
      %v1290 = vpop.permute.xlu0 %1289
      %1291 = vrot.lane.b32.xlu0 %v311, 92
      %v1292 = vpop.permute.xlu0 %1291
      %vm1293 = vcmask 752640
      %v1294 = vsel %vm1293, %v1288, %v1290
      %v1295 = vsel %vm1293, %v1290, %v1292
      %v1297 = vsel %vm327, %v1286, 0
      %v1299 = vsel %vm331, %v1294, 0
      %v1301 = vsel %vm331, %v1295, 0
      %v1303 = vsel %vm331, %v1292, 0
      %1305 = vmatprep.subr.mxu0 %v1301
      %1306 = vmatpush1.msra.mxu0 %v1299
      %1307 = vmatprep.subr.mxu0 0.0
      %1308 = vmatpush1.msra.mxu0 0.0
      %1309 = vmatprep.subr.mxu0 0.0
      %1310 = vmatpush1.msra.mxu0 0.0
      %1311 = vmatprep.subr.mxu0 0.0
      %1312 = vmatpush1.msra.mxu0 0.0
      %1313 = vmatprep.subr.mxu0 0.0
      %1314 = vmatpush1.msra.mxu0 0.0
      %1315 = vmatprep.subr.mxu0 0.0
      %1316 = vmatpush1.msra.mxu0 0.0
      %1317 = vmatprep.subr.mxu0 0.0
      %1318 = vmatpush1.msra.mxu0 0.0
      %1319 = vmatprep.subr.mxu0 0.0
      %1320 = vmatpush1.msra.mxu0 0.0
      %1321 = vmatprep.subr.mxu0 0.0
      %1322 = vmatpush1.msra.mxu0 0.0
      %1323 = vmatprep.subr.mxu0 0.0
      %1324 = vmatpush1.msra.mxu0 0.0
      %1325 = vmatprep.subr.mxu0 0.0
      %1326 = vmatpush1.msra.mxu0 0.0
      %1327 = vmatprep.subr.mxu0 0.0
      %1328 = vmatpush1.msra.mxu0 0.0
      %1329 = vmatprep.subr.mxu0 0.0
      %1330 = vmatpush1.msra.mxu0 0.0
      %1331 = vmatprep.subr.mxu0 0.0
      %1332 = vmatpush1.msra.mxu0 0.0
      %1333 = vmatprep.subr.mxu0 0.0
      %1334 = vmatpush1.msra.mxu0 0.0
      %1335 = vmatprep.subr.mxu0 0.0
      %1336 = vmatpush1.msra.mxu0 0.0
      %1337 = vmatprep.subr.mxu0 0.0
      %1338 = vmatpush1.msra.mxu0 0.0
      %1339 = vmatprep.subr.mxu0 0.0
      %1340 = vmatpush1.msra.mxu0 0.0
      %1341 = vmatprep.subr.mxu0 0.0
      %1342 = vmatpush1.msra.mxu0 0.0
      %1343 = vmatprep.subr.mxu0 0.0
      %1344 = vmatpush1.msra.mxu0 0.0
      %1345 = vmatprep.subr.mxu0 0.0
      %1346 = vmatpush1.msra.mxu0 0.0
      %1347 = vmatprep.subr.mxu0 0.0
      %1348 = vmatpush1.msra.mxu0 0.0
      %1349 = vmatprep.subr.mxu0 0.0
      %1350 = vmatpush1.msra.mxu0 0.0
      %1351 = vmatprep.subr.mxu0 0.0
      %1352 = vmatpush1.msra.mxu0 0.0
      %1353 = vmatprep.subr.mxu0 0.0
      %1354 = vmatpush1.msra.mxu0 0.0
      %1355 = vmatprep.subr.mxu0 0.0
      %1356 = vmatpush1.msra.mxu0 0.0
      %1357 = vmatprep.subr.mxu0 0.0
      %1358 = vmatpush1.msra.mxu0 0.0
      %1359 = vmatprep.subr.mxu0 0.0
      %1360 = vmatpush1.msra.mxu0 0.0
      %1361 = vmatprep.subr.mxu0 0.0
      %1362 = vmatpush1.msra.mxu0 0.0
      %1363 = vmatprep.subr.mxu0 0.0
      %1364 = vmatpush1.msra.mxu0 0.0
      %1365 = vmatprep.subr.mxu0 0.0
      %1366 = vmatpush1.msra.mxu0 0.0
      %1367 = vmatprep.subr.mxu0 0.0
      %1368 = vmatpush1.msra.mxu0 0.0
      %1369 = vmatprep.mubr.f32.mxu0 0.0
      %1370 = vmatmul.mubr.f32.gmra.mrb[0].mxu0 %v1297
      %v1371 = vpop.f32.mrb[0].mxu0
      %v1372 = vadd.f32 0.0, %v1371
      %v1373 = vpop.f32.mrb[0].mxu0
      %v1374 = vadd.f32 0.0, %v1373
      %1375 = vdwg.mxu0
      %1376 = vmatprep.subr.mxu0 0.0
      %1377 = vmatpush1.msra.mxu0 %v1303
      %1378 = vmatprep.subr.mxu0 0.0
      %1379 = vmatpush1.msra.mxu0 0.0
      %1380 = vmatprep.subr.mxu0 0.0
      %1381 = vmatpush1.msra.mxu0 0.0
      %1382 = vmatprep.subr.mxu0 0.0
      %1383 = vmatpush1.msra.mxu0 0.0
      %1384 = vmatprep.subr.mxu0 0.0
      %1385 = vmatpush1.msra.mxu0 0.0
      %1386 = vmatprep.subr.mxu0 0.0
      %1387 = vmatpush1.msra.mxu0 0.0
      %1388 = vmatprep.subr.mxu0 0.0
      %1389 = vmatpush1.msra.mxu0 0.0
      %1390 = vmatprep.subr.mxu0 0.0
      %1391 = vmatpush1.msra.mxu0 0.0
      %1392 = vmatprep.subr.mxu0 0.0
      %1393 = vmatpush1.msra.mxu0 0.0
      %1394 = vmatprep.subr.mxu0 0.0
      %1395 = vmatpush1.msra.mxu0 0.0
      %1396 = vmatprep.subr.mxu0 0.0
      %1397 = vmatpush1.msra.mxu0 0.0
      %1398 = vmatprep.subr.mxu0 0.0
      %1399 = vmatpush1.msra.mxu0 0.0
      %1400 = vmatprep.subr.mxu0 0.0
      %1401 = vmatpush1.msra.mxu0 0.0
      %1402 = vmatprep.subr.mxu0 0.0
      %1403 = vmatpush1.msra.mxu0 0.0
      %1404 = vmatprep.subr.mxu0 0.0
      %1405 = vmatpush1.msra.mxu0 0.0
      %1406 = vmatprep.subr.mxu0 0.0
      %1407 = vmatpush1.msra.mxu0 0.0
      %1408 = vmatprep.subr.mxu0 0.0
      %1409 = vmatpush1.msra.mxu0 0.0
      %1410 = vmatprep.subr.mxu0 0.0
      %1411 = vmatpush1.msra.mxu0 0.0
      %1412 = vmatprep.subr.mxu0 0.0
      %1413 = vmatpush1.msra.mxu0 0.0
      %1414 = vmatprep.subr.mxu0 0.0
      %1415 = vmatpush1.msra.mxu0 0.0
      %1416 = vmatprep.subr.mxu0 0.0
      %1417 = vmatpush1.msra.mxu0 0.0
      %1418 = vmatprep.subr.mxu0 0.0
      %1419 = vmatpush1.msra.mxu0 0.0
      %1420 = vmatprep.subr.mxu0 0.0
      %1421 = vmatpush1.msra.mxu0 0.0
      %1422 = vmatprep.subr.mxu0 0.0
      %1423 = vmatpush1.msra.mxu0 0.0
      %1424 = vmatprep.subr.mxu0 0.0
      %1425 = vmatpush1.msra.mxu0 0.0
      %1426 = vmatprep.subr.mxu0 0.0
      %1427 = vmatpush1.msra.mxu0 0.0
      %1428 = vmatprep.subr.mxu0 0.0
      %1429 = vmatpush1.msra.mxu0 0.0
      %1430 = vmatprep.subr.mxu0 0.0
      %1431 = vmatpush1.msra.mxu0 0.0
      %1432 = vmatprep.subr.mxu0 0.0
      %1433 = vmatpush1.msra.mxu0 0.0
      %1434 = vmatprep.subr.mxu0 0.0
      %1435 = vmatpush1.msra.mxu0 0.0
      %1436 = vmatprep.subr.mxu0 0.0
      %1437 = vmatpush1.msra.mxu0 0.0
      %1438 = vmatprep.subr.mxu0 0.0
      %1439 = vmatpush1.msra.mxu0 0.0
      %1440 = vmatprep.mubr.f32.mxu0 0.0
      %1441 = vmatmul.mubr.f32.gmra.mrb[0].mxu0 %v1297
      %v1442 = vpop.f32.mrb[0].mxu0
      %v1443 = vadd.f32 0.0, %v1442
      %v1444 = vpop.f32.mrb[0].mxu0
      %1445 = vdwg.mxu0
      %v1446 = vadd.f32 %v1282, %v1372
      %v1447 = vadd.f32 %v1283, %v1374
      %v1448 = vadd.f32 %v1284, %v1443
      %s1449 = scalar_lea.vmem %s1, 56
      %v1450 = vld [vmem:[%s1449] sm:$0xff]
      %1451 = vrot.lane.b32.xlu0 %v310, 91
      %v1452 = vpop.permute.xlu0 %1451
      %1453 = vrot.lane.b32.xlu0 %v317, 91
      %v1454 = vpop.permute.xlu0 %1453
      %1455 = vrot.lane.b32.xlu0 %v311, 91
      %v1456 = vpop.permute.xlu0 %1455
      %vm1457 = vcmask 744448
      %v1458 = vsel %vm1457, %v1452, %v1454
      %v1459 = vsel %vm1457, %v1454, %v1456
      %v1461 = vsel %vm327, %v1450, 0
      %v1463 = vsel %vm331, %v1458, 0
      %v1465 = vsel %vm331, %v1459, 0
      %v1467 = vsel %vm331, %v1456, 0
      %1469 = vmatprep.subr.mxu0 %v1465
      %1470 = vmatpush1.msra.mxu0 %v1463
      %1471 = vmatprep.subr.mxu0 0.0
      %1472 = vmatpush1.msra.mxu0 0.0
      %1473 = vmatprep.subr.mxu0 0.0
      %1474 = vmatpush1.msra.mxu0 0.0
      %1475 = vmatprep.subr.mxu0 0.0
      %1476 = vmatpush1.msra.mxu0 0.0
      %1477 = vmatprep.subr.mxu0 0.0
      %1478 = vmatpush1.msra.mxu0 0.0
      %1479 = vmatprep.subr.mxu0 0.0
      %1480 = vmatpush1.msra.mxu0 0.0
      %1481 = vmatprep.subr.mxu0 0.0
      %1482 = vmatpush1.msra.mxu0 0.0
      %1483 = vmatprep.subr.mxu0 0.0
      %1484 = vmatpush1.msra.mxu0 0.0
      %1485 = vmatprep.subr.mxu0 0.0
      %1486 = vmatpush1.msra.mxu0 0.0
      %1487 = vmatprep.subr.mxu0 0.0
      %1488 = vmatpush1.msra.mxu0 0.0
      %1489 = vmatprep.subr.mxu0 0.0
      %1490 = vmatpush1.msra.mxu0 0.0
      %1491 = vmatprep.subr.mxu0 0.0
      %1492 = vmatpush1.msra.mxu0 0.0
      %1493 = vmatprep.subr.mxu0 0.0
      %1494 = vmatpush1.msra.mxu0 0.0
      %1495 = vmatprep.subr.mxu0 0.0
      %1496 = vmatpush1.msra.mxu0 0.0
      %1497 = vmatprep.subr.mxu0 0.0
      %1498 = vmatpush1.msra.mxu0 0.0
      %1499 = vmatprep.subr.mxu0 0.0
      %1500 = vmatpush1.msra.mxu0 0.0
      %1501 = vmatprep.subr.mxu0 0.0
      %1502 = vmatpush1.msra.mxu0 0.0
      %1503 = vmatprep.subr.mxu0 0.0
      %1504 = vmatpush1.msra.mxu0 0.0
      %1505 = vmatprep.subr.mxu0 0.0
      %1506 = vmatpush1.msra.mxu0 0.0
      %1507 = vmatprep.subr.mxu0 0.0
      %1508 = vmatpush1.msra.mxu0 0.0
      %1509 = vmatprep.subr.mxu0 0.0
      %1510 = vmatpush1.msra.mxu0 0.0
      %1511 = vmatprep.subr.mxu0 0.0
      %1512 = vmatpush1.msra.mxu0 0.0
      %1513 = vmatprep.subr.mxu0 0.0
      %1514 = vmatpush1.msra.mxu0 0.0
      %1515 = vmatprep.subr.mxu0 0.0
      %1516 = vmatpush1.msra.mxu0 0.0
      %1517 = vmatprep.subr.mxu0 0.0
      %1518 = vmatpush1.msra.mxu0 0.0
      %1519 = vmatprep.subr.mxu0 0.0
      %1520 = vmatpush1.msra.mxu0 0.0
      %1521 = vmatprep.subr.mxu0 0.0
      %1522 = vmatpush1.msra.mxu0 0.0
      %1523 = vmatprep.subr.mxu0 0.0
      %1524 = vmatpush1.msra.mxu0 0.0
      %1525 = vmatprep.subr.mxu0 0.0
      %1526 = vmatpush1.msra.mxu0 0.0
      %1527 = vmatprep.subr.mxu0 0.0
      %1528 = vmatpush1.msra.mxu0 0.0
      %1529 = vmatprep.subr.mxu0 0.0
      %1530 = vmatpush1.msra.mxu0 0.0
      %1531 = vmatprep.subr.mxu0 0.0
      %1532 = vmatpush1.msra.mxu0 0.0
      %1533 = vmatprep.mubr.f32.mxu0 0.0
      %1534 = vmatmul.mubr.f32.gmra.mrb[0].mxu0 %v1461
      %v1535 = vpop.f32.mrb[0].mxu0
      %v1536 = vadd.f32 0.0, %v1535
      %v1537 = vpop.f32.mrb[0].mxu0
      %v1538 = vadd.f32 0.0, %v1537
      %1539 = vdwg.mxu0
      %1540 = vmatprep.subr.mxu0 0.0
      %1541 = vmatpush1.msra.mxu0 %v1467
      %1542 = vmatprep.subr.mxu0 0.0
      %1543 = vmatpush1.msra.mxu0 0.0
      %1544 = vmatprep.subr.mxu0 0.0
      %1545 = vmatpush1.msra.mxu0 0.0
      %1546 = vmatprep.subr.mxu0 0.0
      %1547 = vmatpush1.msra.mxu0 0.0
      %1548 = vmatprep.subr.mxu0 0.0
      %1549 = vmatpush1.msra.mxu0 0.0
      %1550 = vmatprep.subr.mxu0 0.0
      %1551 = vmatpush1.msra.mxu0 0.0
      %1552 = vmatprep.subr.mxu0 0.0
      %1553 = vmatpush1.msra.mxu0 0.0
      %1554 = vmatprep.subr.mxu0 0.0
      %1555 = vmatpush1.msra.mxu0 0.0
      %1556 = vmatprep.subr.mxu0 0.0
      %1557 = vmatpush1.msra.mxu0 0.0
      %1558 = vmatprep.subr.mxu0 0.0
      %1559 = vmatpush1.msra.mxu0 0.0
      %1560 = vmatprep.subr.mxu0 0.0
      %1561 = vmatpush1.msra.mxu0 0.0
      %1562 = vmatprep.subr.mxu0 0.0
      %1563 = vmatpush1.msra.mxu0 0.0
      %1564 = vmatprep.subr.mxu0 0.0
      %1565 = vmatpush1.msra.mxu0 0.0
      %1566 = vmatprep.subr.mxu0 0.0
      %1567 = vmatpush1.msra.mxu0 0.0
      %1568 = vmatprep.subr.mxu0 0.0
      %1569 = vmatpush1.msra.mxu0 0.0
      %1570 = vmatprep.subr.mxu0 0.0
      %1571 = vmatpush1.msra.mxu0 0.0
      %1572 = vmatprep.subr.mxu0 0.0
      %1573 = vmatpush1.msra.mxu0 0.0
      %1574 = vmatprep.subr.mxu0 0.0
      %1575 = vmatpush1.msra.mxu0 0.0
      %1576 = vmatprep.subr.mxu0 0.0
      %1577 = vmatpush1.msra.mxu0 0.0
      %1578 = vmatprep.subr.mxu0 0.0
      %1579 = vmatpush1.msra.mxu0 0.0
      %1580 = vmatprep.subr.mxu0 0.0
      %1581 = vmatpush1.msra.mxu0 0.0
      %1582 = vmatprep.subr.mxu0 0.0
      %1583 = vmatpush1.msra.mxu0 0.0
      %1584 = vmatprep.subr.mxu0 0.0
      %1585 = vmatpush1.msra.mxu0 0.0
      %1586 = vmatprep.subr.mxu0 0.0
      %1587 = vmatpush1.msra.mxu0 0.0
      %1588 = vmatprep.subr.mxu0 0.0
      %1589 = vmatpush1.msra.mxu0 0.0
      %1590 = vmatprep.subr.mxu0 0.0
      %1591 = vmatpush1.msra.mxu0 0.0
      %1592 = vmatprep.subr.mxu0 0.0
      %1593 = vmatpush1.msra.mxu0 0.0
      %1594 = vmatprep.subr.mxu0 0.0
      %1595 = vmatpush1.msra.mxu0 0.0
      %1596 = vmatprep.subr.mxu0 0.0
      %1597 = vmatpush1.msra.mxu0 0.0
      %1598 = vmatprep.subr.mxu0 0.0
      %1599 = vmatpush1.msra.mxu0 0.0
      %1600 = vmatprep.subr.mxu0 0.0
      %1601 = vmatpush1.msra.mxu0 0.0
      %1602 = vmatprep.subr.mxu0 0.0
      %1603 = vmatpush1.msra.mxu0 0.0
      %1604 = vmatprep.mubr.f32.mxu0 0.0
      %1605 = vmatmul.mubr.f32.gmra.mrb[0].mxu0 %v1461
      %v1606 = vpop.f32.mrb[0].mxu0
      %v1607 = vadd.f32 0.0, %v1606
      %v1608 = vpop.f32.mrb[0].mxu0
      %1609 = vdwg.mxu0
      %v1610 = vadd.f32 %v1446, %v1536
      %v1611 = vadd.f32 %v1447, %v1538
      %v1612 = vadd.f32 %v1448, %v1607
      %s1613 = scalar_lea.vmem %s1, 64
      %v1614 = vld [vmem:[%s1613] sm:$0xff]
      %1615 = vrot.lane.b32.xlu0 %v310, 90
      %v1616 = vpop.permute.xlu0 %1615
      %1617 = vrot.lane.b32.xlu0 %v317, 90
      %v1618 = vpop.permute.xlu0 %1617
      %1619 = vrot.lane.b32.xlu0 %v311, 90
      %v1620 = vpop.permute.xlu0 %1619
      %vm1621 = vcmask 736256
      %v1622 = vsel %vm1621, %v1616, %v1618
      %v1623 = vsel %vm1621, %v1618, %v1620
      %v1625 = vsel %vm327, %v1614, 0
      %v1627 = vsel %vm331, %v1622, 0
      %v1629 = vsel %vm331, %v1623, 0
      %v1631 = vsel %vm331, %v1620, 0
      %1633 = vmatprep.subr.mxu0 %v1629
      %1634 = vmatpush1.msra.mxu0 %v1627
      %1635 = vmatprep.subr.mxu0 0.0
      %1636 = vmatpush1.msra.mxu0 0.0
      %1637 = vmatprep.subr.mxu0 0.0
      %1638 = vmatpush1.msra.mxu0 0.0
      %1639 = vmatprep.subr.mxu0 0.0
      %1640 = vmatpush1.msra.mxu0 0.0
      %1641 = vmatprep.subr.mxu0 0.0
      %1642 = vmatpush1.msra.mxu0 0.0
      %1643 = vmatprep.subr.mxu0 0.0
      %1644 = vmatpush1.msra.mxu0 0.0
      %1645 = vmatprep.subr.mxu0 0.0
      %1646 = vmatpush1.msra.mxu0 0.0
      %1647 = vmatprep.subr.mxu0 0.0
      %1648 = vmatpush1.msra.mxu0 0.0
      %1649 = vmatprep.subr.mxu0 0.0
      %1650 = vmatpush1.msra.mxu0 0.0
      %1651 = vmatprep.subr.mxu0 0.0
      %1652 = vmatpush1.msra.mxu0 0.0
      %1653 = vmatprep.subr.mxu0 0.0
      %1654 = vmatpush1.msra.mxu0 0.0
      %1655 = vmatprep.subr.mxu0 0.0
      %1656 = vmatpush1.msra.mxu0 0.0
      %1657 = vmatprep.subr.mxu0 0.0
      %1658 = vmatpush1.msra.mxu0 0.0
      %1659 = vmatprep.subr.mxu0 0.0
      %1660 = vmatpush1.msra.mxu0 0.0
      %1661 = vmatprep.subr.mxu0 0.0
      %1662 = vmatpush1.msra.mxu0 0.0
      %1663 = vmatprep.subr.mxu0 0.0
      %1664 = vmatpush1.msra.mxu0 0.0
      %1665 = vmatprep.subr.mxu0 0.0
      %1666 = vmatpush1.msra.mxu0 0.0
      %1667 = vmatprep.subr.mxu0 0.0
      %1668 = vmatpush1.msra.mxu0 0.0
      %1669 = vmatprep.subr.mxu0 0.0
      %1670 = vmatpush1.msra.mxu0 0.0
      %1671 = vmatprep.subr.mxu0 0.0
      %1672 = vmatpush1.msra.mxu0 0.0
      %1673 = vmatprep.subr.mxu0 0.0
      %1674 = vmatpush1.msra.mxu0 0.0
      %1675 = vmatprep.subr.mxu0 0.0
      %1676 = vmatpush1.msra.mxu0 0.0
      %1677 = vmatprep.subr.mxu0 0.0
      %1678 = vmatpush1.msra.mxu0 0.0
      %1679 = vmatprep.subr.mxu0 0.0
      %1680 = vmatpush1.msra.mxu0 0.0
      %1681 = vmatprep.subr.mxu0 0.0
      %1682 = vmatpush1.msra.mxu0 0.0
      %1683 = vmatprep.subr.mxu0 0.0
      %1684 = vmatpush1.msra.mxu0 0.0
      %1685 = vmatprep.subr.mxu0 0.0
      %1686 = vmatpush1.msra.mxu0 0.0
      %1687 = vmatprep.subr.mxu0 0.0
      %1688 = vmatpush1.msra.mxu0 0.0
      %1689 = vmatprep.subr.mxu0 0.0
      %1690 = vmatpush1.msra.mxu0 0.0
      %1691 = vmatprep.subr.mxu0 0.0
      %1692 = vmatpush1.msra.mxu0 0.0
      %1693 = vmatprep.subr.mxu0 0.0
      %1694 = vmatpush1.msra.mxu0 0.0
      %1695 = vmatprep.subr.mxu0 0.0
      %1696 = vmatpush1.msra.mxu0 0.0
      %1697 = vmatprep.mubr.f32.mxu0 0.0
      %1698 = vmatmul.mubr.f32.gmra.mrb[0].mxu0 %v1625
      %v1699 = vpop.f32.mrb[0].mxu0
      %v1700 = vadd.f32 0.0, %v1699
      %v1701 = vpop.f32.mrb[0].mxu0
      %v1702 = vadd.f32 0.0, %v1701
      %1703 = vdwg.mxu0
      %1704 = vmatprep.subr.mxu0 0.0
      %1705 = vmatpush1.msra.mxu0 %v1631
      %1706 = vmatprep.subr.mxu0 0.0
      %1707 = vmatpush1.msra.mxu0 0.0
      %1708 = vmatprep.subr.mxu0 0.0
      %1709 = vmatpush1.msra.mxu0 0.0
      %1710 = vmatprep.subr.mxu0 0.0
      %1711 = vmatpush1.msra.mxu0 0.0
      %1712 = vmatprep.subr.mxu0 0.0
      %1713 = vmatpush1.msra.mxu0 0.0
      %1714 = vmatprep.subr.mxu0 0.0
      %1715 = vmatpush1.msra.mxu0 0.0
      %1716 = vmatprep.subr.mxu0 0.0
      %1717 = vmatpush1.msra.mxu0 0.0
      %1718 = vmatprep.subr.mxu0 0.0
      %1719 = vmatpush1.msra.mxu0 0.0
      %1720 = vmatprep.subr.mxu0 0.0
      %1721 = vmatpush1.msra.mxu0 0.0
      %1722 = vmatprep.subr.mxu0 0.0
      %1723 = vmatpush1.msra.mxu0 0.0
      %1724 = vmatprep.subr.mxu0 0.0
      %1725 = vmatpush1.msra.mxu0 0.0
      %1726 = vmatprep.subr.mxu0 0.0
      %1727 = vmatpush1.msra.mxu0 0.0
      %1728 = vmatprep.subr.mxu0 0.0
      %1729 = vmatpush1.msra.mxu0 0.0
      %1730 = vmatprep.subr.mxu0 0.0
      %1731 = vmatpush1.msra.mxu0 0.0
      %1732 = vmatprep.subr.mxu0 0.0
      %1733 = vmatpush1.msra.mxu0 0.0
      %1734 = vmatprep.subr.mxu0 0.0
      %1735 = vmatpush1.msra.mxu0 0.0
      %1736 = vmatprep.subr.mxu0 0.0
      %1737 = vmatpush1.msra.mxu0 0.0
      %1738 = vmatprep.subr.mxu0 0.0
      %1739 = vmatpush1.msra.mxu0 0.0
      %1740 = vmatprep.subr.mxu0 0.0
      %1741 = vmatpush1.msra.mxu0 0.0
      %1742 = vmatprep.subr.mxu0 0.0
      %1743 = vmatpush1.msra.mxu0 0.0
      %1744 = vmatprep.subr.mxu0 0.0
      %1745 = vmatpush1.msra.mxu0 0.0
      %1746 = vmatprep.subr.mxu0 0.0
      %1747 = vmatpush1.msra.mxu0 0.0
      %1748 = vmatprep.subr.mxu0 0.0
      %1749 = vmatpush1.msra.mxu0 0.0
      %1750 = vmatprep.subr.mxu0 0.0
      %1751 = vmatpush1.msra.mxu0 0.0
      %1752 = vmatprep.subr.mxu0 0.0
      %1753 = vmatpush1.msra.mxu0 0.0
      %1754 = vmatprep.subr.mxu0 0.0
      %1755 = vmatpush1.msra.mxu0 0.0
      %1756 = vmatprep.subr.mxu0 0.0
      %1757 = vmatpush1.msra.mxu0 0.0
      %1758 = vmatprep.subr.mxu0 0.0
      %1759 = vmatpush1.msra.mxu0 0.0
      %1760 = vmatprep.subr.mxu0 0.0
      %1761 = vmatpush1.msra.mxu0 0.0
      %1762 = vmatprep.subr.mxu0 0.0
      %1763 = vmatpush1.msra.mxu0 0.0
      %1764 = vmatprep.subr.mxu0 0.0
      %1765 = vmatpush1.msra.mxu0 0.0
      %1766 = vmatprep.subr.mxu0 0.0
      %1767 = vmatpush1.msra.mxu0 0.0
      %1768 = vmatprep.mubr.f32.mxu0 0.0
      %1769 = vmatmul.mubr.f32.gmra.mrb[0].mxu0 %v1625
      %v1770 = vpop.f32.mrb[0].mxu0
      %v1771 = vadd.f32 0.0, %v1770
      %v1772 = vpop.f32.mrb[0].mxu0
      %1773 = vdwg.mxu0
      %v1774 = vadd.f32 %v1610, %v1700
      %v1775 = vadd.f32 %v1611, %v1702
      %v1776 = vadd.f32 %v1612, %v1771
      %v1777 = vld [vmem:[%s2] sm:$0xff]
      %1779 = vset.pattern.permute.xlu0 0
      %1780 = vperm.xlu0 %1779, %v1777
      %v1781 = vpop.permute.xlu0 %1780
      %v1783 = vmul.f32 %v1774, %v1781
      %v1784 = vmul.f32 %v1775, %v1781
      %v1785 = vmul.f32 %v1776, %v1781
      %v1786 = vld [vmem:[%s3] sm:$0xff]
      %1788 = vset.pattern.permute.xlu0 0
      %1789 = vperm.xlu0 %1788, %v1786
      %v1790 = vpop.permute.xlu0 %1789
      %v1792 = vadd.f32 %v1783, %v1790
      %v1793 = vadd.f32 %v1784, %v1790
      %v1794 = vadd.f32 %v1785, %v1790
      %vm1795 = vcmask 130048
      %1796 = vst.msk [vmem:[%s197] sm:$0xff] %vm1795, %v1792
      %1798 = vrot.lane.b32.xlu0 %v1792, 126
      %v1799 = vpop.permute.xlu0 %1798
      %vm1801 = vcmask 261248
      %1802 = vst.msk [vmem:[%s197] sm:$0xff] %vm1801, %v1799
      %1803 = vrot.lane.b32.xlu0 %v1792, 124
      %v1804 = vpop.permute.xlu0 %1803
      %vm1806 = vcmask 392448
      %1807 = vst.msk [vmem:[%s197] sm:$0xff] %vm1806, %v1804
      %1808 = vrot.lane.b32.xlu0 %v1792, 122
      %v1809 = vpop.permute.xlu0 %1808
      %vm1811 = vcmask 523648
      %1812 = vst.msk [vmem:[%s197] sm:$0xff] %vm1811, %v1809
      %1813 = vrot.lane.b32.xlu0 %v1792, 120
      %v1814 = vpop.permute.xlu0 %1813
      %vm1816 = vcmask 654848
      %1817 = vst.msk [vmem:[%s197] sm:$0xff] %vm1816, %v1814
      %1818 = vrot.lane.b32.xlu0 %v1792, 118
      %v1819 = vpop.permute.xlu0 %1818
      %vm1821 = vcmask 786048
      %1822 = vst.msk [vmem:[%s197] sm:$0xff] %vm1821, %v1819
      %1823 = vrot.lane.b32.xlu0 %v1792, 116
      %v1824 = vpop.permute.xlu0 %1823
      %vm1826 = vcmask 917248
      %1827 = vst.msk [vmem:[%s197] sm:$0xff] %vm1826, %v1824
      %1829 = vrot.lane.b32.xlu0 %v1792, 114
      %v1830 = vpop.permute.xlu0 %1829
      %1831 = vrot.lane.b32.xlu0 %v1793, 114
      %v1832 = vpop.permute.xlu0 %1831
      %vm1833 = vcmask 932864
      %v1834 = vsel %vm1833, %v1830, %v1832
      %vm1836 = vcmask 1048448
      %1837 = vst.msk [vmem:[%s197] sm:$0xff] %vm1836, %v1834
      %1838 = vrot.lane.b32.xlu0 %v1793, 112
      %v1839 = vpop.permute.xlu0 %1838
      %1841 = vst.msk [vmem:[%s197 + $0x8] sm:$0xff] %vm1795, %v1839
      %1842 = vrot.lane.b32.xlu0 %v1793, 110
      %v1843 = vpop.permute.xlu0 %1842
      %1845 = vst.msk [vmem:[%s197 + $0x8] sm:$0xff] %vm1801, %v1843
      %1846 = vrot.lane.b32.xlu0 %v1793, 108
      %v1847 = vpop.permute.xlu0 %1846
      %1849 = vst.msk [vmem:[%s197 + $0x8] sm:$0xff] %vm1806, %v1847
      %1850 = vrot.lane.b32.xlu0 %v1793, 106
      %v1851 = vpop.permute.xlu0 %1850
      %1853 = vst.msk [vmem:[%s197 + $0x8] sm:$0xff] %vm1811, %v1851
      %1854 = vrot.lane.b32.xlu0 %v1793, 104
      %v1855 = vpop.permute.xlu0 %1854
      %1857 = vst.msk [vmem:[%s197 + $0x8] sm:$0xff] %vm1816, %v1855
      %1858 = vrot.lane.b32.xlu0 %v1793, 102
      %v1859 = vpop.permute.xlu0 %1858
      %1861 = vst.msk [vmem:[%s197 + $0x8] sm:$0xff] %vm1821, %v1859
      %1863 = vrot.lane.b32.xlu0 %v1793, 100
      %v1864 = vpop.permute.xlu0 %1863
      %1865 = vrot.lane.b32.xlu0 %v1794, 100
      %v1866 = vpop.permute.xlu0 %1865
      %vm1867 = vcmask 818176
      %v1868 = vsel %vm1867, %v1864, %v1866
      %1870 = vst.msk [vmem:[%s197 + $0x8] sm:$0xff] %vm1826, %v1868
      %1871 = vrot.lane.b32.xlu0 %v1794, 98
      %v1872 = vpop.permute.xlu0 %1871
      %1874 = vst.msk [vmem:[%s197 + $0x8] sm:$0xff] %vm1836, %v1872
      %p1875 = scmp.lt.s32.totalorder %s15, 1
      %s1876 = scalar_select %p1875, %s15, 1
      %s1877 = smul.addr %s1876, 2
      %s1878 = smul.addr %s1877, 8
      %s1879 = scalar_lea.vmem %s4, %s1878
      // Predicated region
      $region37: #{conv_bn2d.3} parent=35 // pred_check
        %p1880 = pneg %p122
      $region38: #{conv_bn2d.3} parent=35 // pred_check_branch
        %1882 = sbr.rel (%p1880) target = $region40
      $region39: #{conv_bn2d.3} parent=35 // pred_region
        _
      $region40: #{conv_bn2d.3} parent=35 // pred_fallthru
        _
    $region36: #{conv_bn2d.3} parent=5 // pred_fallthru
      _
    %p1883 = scmp.le.s32.totalorder 2, %s10
    // Predicated region
    $region41: #{conv_bn2d.3} parent=5 // pred_check
      %p1884 = pneg %p1883
    $region42: #{conv_bn2d.3} parent=5 // pred_check_branch
      %1886 = sbr.rel (%p1884) target = $region44
    $region43: #{conv_bn2d.3} parent=5 // pred_region
      %s1887 = ssub.s32 %s10, 2
      // Predicated region
      $region45: #{conv_bn2d.3} parent=43 // pred_check
        %p1888 = pneg %p128
      $region46: #{conv_bn2d.3} parent=43 // pred_check_branch
        %1890 = sbr.rel (%p1888) target = $region48
      $region47: #{conv_bn2d.3} parent=43 // pred_region
        %p1891 = scmp.lt.s32.totalorder %s16, 1
        %s1892 = scalar_select %p1891, %s16, 1
        %s1893 = smul.addr %s1892, 2
        %s1894 = smul.addr %s1893, 8
        %s1895 = scalar_lea.vmem %s4, %s1894
      $region48: #{conv_bn2d.3} parent=43 // pred_fallthru
        _
    $region44: #{conv_bn2d.3} parent=5 // pred_fallthru
      _
  $region6: #{conv_bn2d.3} parent=0 // loop_footer
    %s14 = sadd.s32 1, %s10
  $region7: #{conv_bn2d.3} parent=0 // loop_footer_branch
    %9 = sbr.rel target = $region3
  $region8: #{conv_bn2d.3} parent=0 // loop_exit
    _

</llo_original>
